<compile_context>
chip_gen: v7x
topology: tpu7x:2x2x1
jax: 0.10.0
libtpu: 0.0.40
codegen_flags: <defaults>
</compile_context>

<pallas_src>
import functools

import jax
import jax.numpy as jnp
import numpy as np
from jax.experimental import pallas as pl
from jax.experimental.pallas import tpu as pltpu

ATOM_FEATURE_DIMS = (119, 4, 12, 12, 10, 6, 6, 2, 2)   # OGB AtomEncoder vocab sizes
VOCAB_PAD = 256                                         # sum(dims)=173, lane-padded
EPS_STD = 1e-5    # PNA std-aggregator epsilon
EPS_BN = 1e-5     # torch.nn.BatchNorm1d default eps
NEG_BIG = np.float32(-3.0e38)

_ATOM_OFFSETS = np.concatenate(
    [[0], np.cumsum(ATOM_FEATURE_DIMS[:-1])]).astype(np.int32)


# ------------------------------- Pallas kernel --------------------------------

def _fused_pna_kernel(*refs, n_layers, residuals, avg_d_log):
    """Fused PNANet forward: AtomEncoder + n_layers PNASimpleLayer + MLPReadout."""
    adj_ref, atom_ref, emb_ref = refs[0], refs[1], refs[2]
    layer_refs = refs[3:3 + 2 * n_layers]
    (w1_ref, b1_ref, w2_ref, b2_ref, w3_ref, b3_ref) = refs[
        3 + 2 * n_layers:3 + 2 * n_layers + 6]
    out_ref = refs[-1]

    adj = adj_ref[...]                                   # [N, N] f32, (dst, src)
    n = adj.shape[0]

    # ---- AtomEncoder: sum of per-feature embeddings via one multi-hot matmul.
    #      Feature vocab ranges are disjoint (offsets), so OR of one-hots == sum.
    ids = atom_ref[...]                                  # [N, F] int32 (flat ids)
    vpad = emb_ref.shape[0]
    iota = jax.lax.broadcasted_iota(jnp.int32, (n, vpad), 1)
    hot = iota == ids[:, 0:1]
    for f in range(1, ids.shape[1]):
        hot = hot | (iota == ids[:, f:f + 1])
    mhot = hot.astype(jnp.float32)
    h = jnp.dot(mhot, emb_ref[...], preferred_element_type=jnp.float32)  # [N, D]
    # in_feat_dropout: identity in eval mode.

    # ---- degree-derived terms (adj is layer-invariant -> computed once).
    deg = jnp.sum(adj, axis=1, keepdims=True)            # [N, 1]
    has_nb = deg > 0.0
    deg_c = jnp.maximum(deg, 1.0)                        # guard isolated/padded nodes
    inv_deg = 1.0 / deg_c
    logd = jnp.log(deg_c + 1.0)
    amp = logd * (1.0 / avg_d_log)                       # 'amplification' scaler
    att = avg_d_log / logd                               # 'attenuation' scaler

    adj_bf = adj.astype(jnp.bfloat16)                    # exact: entries are 0/1

    for l in range(n_layers):
        w_ref, b_ref = layer_refs[2 * l], layer_refs[2 * l + 1]
        din = h.shape[1]
        dout = w_ref.shape[1]

        # -- mean / std aggregators via ONE MXU matmul: adj @ [h | h*h].
        hh = jnp.concatenate([h, h * h], axis=1).astype(jnp.bfloat16)   # [N, 2*Din]
        s = jnp.dot(adj_bf, hh, preferred_element_type=jnp.float32)     # [N, 2*Din]
        agg_mean = s[:, :din] * inv_deg
        var = jnp.maximum(s[:, din:] * inv_deg - agg_mean * agg_mean, 0.0)
        agg_std = jnp.sqrt(var + EPS_STD)

        # -- max & min aggregators fused: running max over [h | -h] source rows
        #    (min = -max(-x)); only O(N*2*Din) live state, shared mask broadcast.
        hpm = jnp.concatenate([h, -h], axis=1)                          # [N, 2*Din]
        run = jnp.full((n, 2 * din), NEG_BIG, jnp.float32)
        for j in range(n):                               # N is small -> fully unrolled
            nb = adj[:, j:j + 1] != 0.0                  # [N, 1]
            run = jnp.where(nb, jnp.maximum(run, hpm[j:j + 1, :]), run)
        run = jnp.where(has_nb, run, 0.0)
        agg_max = run[:, :din]
        agg_min = -run[:, din:]

        # -- scalers applied to the concatenated aggregators (DGL reference
        #    order: scalers outer [identity, amplification, attenuation],
        #    aggregators inner [mean, max, min, std]); single K=12*Din matmul.
        a_cat = jnp.concatenate([agg_mean, agg_max, agg_min, agg_std], axis=1)
        cat = jnp.concatenate([a_cat, a_cat * amp, a_cat * att],
                              axis=1).astype(jnp.bfloat16)              # [N, 12*Din]

        # -- posttrans Linear with eval-mode BatchNorm folded in, then ReLU,
        #    residual; dropout = identity in eval mode.
        y = jnp.dot(cat, w_ref[...], preferred_element_type=jnp.float32) + b_ref[...]
        y = jnp.maximum(y, 0.0)
        if residuals[l] and din == dout:
            y = h + y
        h = y

    # ---- readout: dgl.mean_nodes (single graph) + MLPReadout (L=2).
    hg = jnp.mean(h, axis=0, keepdims=True)              # [1, Dout]
    z = jnp.dot(hg, w1_ref[...], preferred_element_type=jnp.float32) + b1_ref[...]
    z = jnp.maximum(z, 0.0)
    z = jnp.dot(z, w2_ref[...], preferred_element_type=jnp.float32) + b2_ref[...]
    z = jnp.maximum(z, 0.0)
    z = jnp.dot(z, w3_ref[...], preferred_element_type=jnp.float32) + b3_ref[...]
    out_ref[...] = z                                     # [1, 1]


# --------------------------------- wrappers ------------------------------------

_VMEM = pl.BlockSpec(memory_space=pltpu.MemorySpace.VMEM)


def flatten_atom_ids(atom_x):
    """Map per-feature categorical ids into the concatenated embedding vocab."""
    return atom_x.astype(jnp.int32) + jnp.asarray(_ATOM_OFFSETS)[None, :]


def prepare_kernel_params(params):
    """One-time prep: fold eval-mode BN into the posttrans Linear, cast W to bf16."""
    kp = {"emb_cat": params["emb_cat"], "mlp": params["mlp"], "layers": []}
    for lp in params["layers"]:
        scale = lp["gamma"] * jax.lax.rsqrt(lp["rvar"] + EPS_BN)        # [1, Dout]
        w_fold = lp["w"] * scale                                        # per-column
        b_fold = (lp["b"] - lp["rmean"]) * scale + lp["beta"]
        kp["layers"].append(dict(
            w_bf16=w_fold.astype(jnp.bfloat16),
            b=b_fold.astype(jnp.float32),
            residual=bool(lp["residual"]),
        ))
    return kp


def pna_net_forward(adj, atom_x, kparams, avg_d_log):
    n = adj.shape[0]
    # TODO(synk): pad + mask nodes for arbitrary N and batched multi-graph
    # readout (dgl batching); a leading 'parallel' grid axis over graphs would
    # also let v7x use both TensorCores.
    assert n % 8 == 0, "node count must be a multiple of the sublane tile (8)"

    atom_flat = flatten_atom_ids(atom_x)

    args = [adj.astype(jnp.float32), atom_flat, kparams["emb_cat"]]
    residuals = []
    for lp in kparams["layers"]:
        args += [lp["w_bf16"], lp["b"]]
        residuals.append(bool(lp["residual"]))
    mp = kparams["mlp"]
    args += [mp["w1"], mp["b1"], mp["w2"], mp["b2"], mp["w3"], mp["b3"]]

    kern = functools.partial(
        _fused_pna_kernel,
        n_layers=len(kparams["layers"]),
        residuals=tuple(residuals),
        avg_d_log=float(avg_d_log),
    )
    return pl.pallas_call(
        kern,
        out_shape=jax.ShapeDtypeStruct((1, 1), jnp.float32),
        in_specs=[_VMEM] * len(args),
        out_specs=_VMEM,
    )(*args)


def pna_net_reference(adj, atom_x, params, avg_d_log):
    """Pure-JAX f32 reference of the same eval-mode forward pass (unfolded BN)."""
    atom_flat = flatten_atom_ids(atom_x)
    h = params["emb_cat"][atom_flat].sum(axis=1)          # [N, D]
    deg = adj.sum(axis=1, keepdims=True)
    has_nb = deg > 0.0
    deg_c = jnp.maximum(deg, 1.0)
    logd = jnp.log(deg_c + 1.0)
    amp = logd / avg_d_log
    att = avg_d_log / logd
    mask3 = (adj != 0.0)[:, :, None]
    for lp in params["layers"]:
        mean = (adj @ h) / deg_c
        var = jnp.maximum((adj @ (h * h)) / deg_c - mean * mean, 0.0)
        std = jnp.sqrt(var + EPS_STD)
        amax = jnp.where(has_nb,
                         jnp.where(mask3, h[None], -jnp.inf).max(axis=1), 0.0)
        amin = jnp.where(has_nb,
                         jnp.where(mask3, h[None], jnp.inf).min(axis=1), 0.0)
        aggs = [mean, amax, amin, std]
        cat = jnp.concatenate(
            aggs + [a * amp for a in aggs] + [a * att for a in aggs], axis=1)
        y = cat @ lp["w"] + lp["b"]
        y = (y - lp["rmean"]) * jax.lax.rsqrt(lp["rvar"] + EPS_BN)
        y = y * lp["gamma"] + lp["beta"]
        y = jnp.maximum(y, 0.0)
        if lp["residual"] and h.shape[1] == y.shape[1]:
            y = h + y
        h = y
    hg = h.mean(axis=0, keepdims=True)
    mp = params["mlp"]
    z = jnp.maximum(hg @ mp["w1"] + mp["b1"], 0.0)
    z = jnp.maximum(z @ mp["w2"] + mp["b2"], 0.0)
    return z @ mp["w3"] + mp["b3"]


# ------------------------------ parameter init ----------------------------------

def _linear(key, din, dout):
    kw, kb = jax.random.split(key)
    lim = 1.0 / np.sqrt(din)
    w = jax.random.uniform(kw, (din, dout), jnp.float32, -lim, lim)
    b = jax.random.uniform(kb, (1, dout), jnp.float32, -lim, lim)
    return w, b


def init_params(key, hidden_dim, out_dim, n_layers, residual=True):
    n_chunks = 12   # len(aggregators) * len(scalers)
    n_keys = len(ATOM_FEATURE_DIMS) + 5 * n_layers + 3
    keys = jax.random.split(key, n_keys)

    params = {}
    tabs = [0.1 * jax.random.normal(keys[i], (d, hidden_dim), jnp.float32)
            for i, d in enumerate(ATOM_FEATURE_DIMS)]
    emb = jnp.concatenate(tabs, axis=0)                       # [173, H]
    emb_cat = jnp.zeros((VOCAB_PAD, hidden_dim), jnp.float32)
    params["emb_cat"] = emb_cat.at[:emb.shape[0]].set(emb)

    layers = []
    for l in range(n_layers):
        base = len(ATOM_FEATURE_DIMS) + 5 * l
        din = hidden_dim
        dout = hidden_dim if l < n_layers - 1 else out_dim
        w, b = _linear(keys[base], n_chunks * din, dout)
        # Non-trivial eval-mode BN stats so the BN fold is actually exercised.
        gamma = 1.0 + 0.1 * jax.random.normal(keys[base + 1], (1, dout), jnp.float32)
        beta = 0.1 * jax.random.normal(keys[base + 2], (1, dout), jnp.float32)
        rmean = 0.1 * jax.random.normal(keys[base + 3], (1, dout), jnp.float32)
        rvar = jax.random.uniform(keys[base + 4], (1, dout), jnp.float32, 0.5, 1.5)
        layers.append(dict(w=w, b=b, gamma=gamma, beta=beta,
                           rmean=rmean, rvar=rvar, residual=residual))
    params["layers"] = layers

    k1, k2, k3 = keys[-3], keys[-2], keys[-1]
    w1, b1 = _linear(k1, out_dim, out_dim // 2)
    w2, b2 = _linear(k2, out_dim // 2, out_dim // 4)
    w3, b3 = _linear(k3, out_dim // 4, 1)
    params["mlp"] = dict(w1=w1, b1=b1, w2=w2, b2=b2, w3=w3, b3=b3)
    return params


if __name__ == "__main__":
    N = 32            # nodes in the (single) synthetic molecular graph
    HIDDEN = 128      # net_params['hidden_dim']  (multiple of 128 -> lane-dense)
    OUT = 128         # net_params['out_dim']
    N_LAYERS = 2      # net_params['L']

    root = jax.random.PRNGKey(0)
    k_graph, k_feat, k_param = jax.random.split(root, 3)

    # Deterministic graph: undirected ring + random symmetric edges (degree >= 2).
    rnd = np.array(jax.random.bernoulli(k_graph, 0.15, (N, N)), dtype=np.float32)
    adj_np = np.maximum(rnd, rnd.T)
    np.fill_diagonal(adj_np, 0.0)
    for i in range(N):
        adj_np[i, (i + 1) % N] = 1.0
        adj_np[(i + 1) % N, i] = 1.0
    deg_np = adj_np.sum(axis=1)
    avg_d_log = float(np.mean(np.log(deg_np + 1.0)))   # net_params['avg_d']['log']
    adj = jnp.asarray(adj_np, jnp.float32)

    # Categorical atom features, one column per OGB atom feature.
    feat_keys = jax.random.split(k_feat, len(ATOM_FEATURE_DIMS))
    cols = [jax.random.randint(feat_keys[i], (N,), 0, d)
            for i, d in enumerate(ATOM_FEATURE_DIMS)]
    atom_x = jnp.stack(cols, axis=1).astype(jnp.int32)   # [N, 9]

    params = init_params(k_param, HIDDEN, OUT, N_LAYERS, residual=True)
    kparams = prepare_kernel_params(params)              # BN fold + bf16 W (one-time)

    out = pna_net_forward(adj, atom_x, kparams, avg_d_log)
    out = jax.block_until_ready(out)
    ref = pna_net_reference(adj, atom_x, params, avg_d_log)

    assert out.shape == (1, 1) and bool(jnp.isfinite(out).all())
    err = float(jnp.abs(out - ref).max())
    tol = 0.1 + 0.05 * float(jnp.abs(ref).max())        # bf16-MXU tolerance
    assert err < tol, f"kernel/reference mismatch: {err} (tol {tol})"
    print("KERNEL_OK")
</pallas_src>

<mosaic_0001>
module attributes {stable_mosaic.version = 11 : i64} {
  func.func @_fused_pna_kernel(%arg0: memref<32x32xf32, #tpu.memory_space<vmem>>, %arg1: memref<32x9xi32, #tpu.memory_space<vmem>>, %arg2: memref<256x128xf32, #tpu.memory_space<vmem>>, %arg3: memref<1536x128xbf16, #tpu.memory_space<vmem>>, %arg4: memref<1x128xf32, #tpu.memory_space<vmem>>, %arg5: memref<1536x128xbf16, #tpu.memory_space<vmem>>, %arg6: memref<1x128xf32, #tpu.memory_space<vmem>>, %arg7: memref<128x64xf32, #tpu.memory_space<vmem>>, %arg8: memref<1x64xf32, #tpu.memory_space<vmem>>, %arg9: memref<64x32xf32, #tpu.memory_space<vmem>>, %arg10: memref<1x32xf32, #tpu.memory_space<vmem>>, %arg11: memref<32x1xf32, #tpu.memory_space<vmem>>, %arg12: memref<1x1xf32, #tpu.memory_space<vmem>>, %arg13: memref<1x1xf32, #tpu.memory_space<vmem>>) attributes {dimension_semantics = [], scalar_prefetch = 0 : i64, scratch_operands = 0 : i64, tpu.core_type = #tpu.core_type<tc>} {
    %c0 = arith.constant 0 : index
    %c0_0 = arith.constant 0 : index
    %0 = vector.load %arg0[%c0, %c0_0] : memref<32x32xf32, #tpu.memory_space<vmem>>, vector<32x32xf32>
    %c0_1 = arith.constant 0 : index
    %c0_2 = arith.constant 0 : index
    %1 = vector.load %arg1[%c0_1, %c0_2] : memref<32x9xi32, #tpu.memory_space<vmem>>, vector<32x9xi32>
    %2 = tpu.iota {dimensions = array<i32: 1>} : vector<32x256xi32>
    %3 = vector.extract_strided_slice %1 {offsets = [0, 0], sizes = [32, 1], strides = [1, 1]} : vector<32x9xi32> to vector<32x1xi32>
    %4 = vector.broadcast %3 : vector<32x1xi32> to vector<32x256xi32>
    %5 = arith.cmpi eq, %2, %4 : vector<32x256xi32>
    %6 = vector.extract_strided_slice %1 {offsets = [0, 1], sizes = [32, 1], strides = [1, 1]} : vector<32x9xi32> to vector<32x1xi32>
    %7 = vector.broadcast %6 : vector<32x1xi32> to vector<32x256xi32>
    %8 = arith.cmpi eq, %2, %7 : vector<32x256xi32>
    %9 = arith.ori %5, %8 : vector<32x256xi1>
    %10 = vector.extract_strided_slice %1 {offsets = [0, 2], sizes = [32, 1], strides = [1, 1]} : vector<32x9xi32> to vector<32x1xi32>
    %11 = vector.broadcast %10 : vector<32x1xi32> to vector<32x256xi32>
    %12 = arith.cmpi eq, %2, %11 : vector<32x256xi32>
    %13 = arith.ori %9, %12 : vector<32x256xi1>
    %14 = vector.extract_strided_slice %1 {offsets = [0, 3], sizes = [32, 1], strides = [1, 1]} : vector<32x9xi32> to vector<32x1xi32>
    %15 = vector.broadcast %14 : vector<32x1xi32> to vector<32x256xi32>
    %16 = arith.cmpi eq, %2, %15 : vector<32x256xi32>
    %17 = arith.ori %13, %16 : vector<32x256xi1>
    %18 = vector.extract_strided_slice %1 {offsets = [0, 4], sizes = [32, 1], strides = [1, 1]} : vector<32x9xi32> to vector<32x1xi32>
    %19 = vector.broadcast %18 : vector<32x1xi32> to vector<32x256xi32>
    %20 = arith.cmpi eq, %2, %19 : vector<32x256xi32>
    %21 = arith.ori %17, %20 : vector<32x256xi1>
    %22 = vector.extract_strided_slice %1 {offsets = [0, 5], sizes = [32, 1], strides = [1, 1]} : vector<32x9xi32> to vector<32x1xi32>
    %23 = vector.broadcast %22 : vector<32x1xi32> to vector<32x256xi32>
    %24 = arith.cmpi eq, %2, %23 : vector<32x256xi32>
    %25 = arith.ori %21, %24 : vector<32x256xi1>
    %26 = vector.extract_strided_slice %1 {offsets = [0, 6], sizes = [32, 1], strides = [1, 1]} : vector<32x9xi32> to vector<32x1xi32>
    %27 = vector.broadcast %26 : vector<32x1xi32> to vector<32x256xi32>
    %28 = arith.cmpi eq, %2, %27 : vector<32x256xi32>
    %29 = arith.ori %25, %28 : vector<32x256xi1>
    %30 = vector.extract_strided_slice %1 {offsets = [0, 7], sizes = [32, 1], strides = [1, 1]} : vector<32x9xi32> to vector<32x1xi32>
    %31 = vector.broadcast %30 : vector<32x1xi32> to vector<32x256xi32>
    %32 = arith.cmpi eq, %2, %31 : vector<32x256xi32>
    %33 = arith.ori %29, %32 : vector<32x256xi1>
    %34 = vector.extract_strided_slice %1 {offsets = [0, 8], sizes = [32, 1], strides = [1, 1]} : vector<32x9xi32> to vector<32x1xi32>
    %35 = vector.broadcast %34 : vector<32x1xi32> to vector<32x256xi32>
    %36 = arith.cmpi eq, %2, %35 : vector<32x256xi32>
    %37 = arith.ori %33, %36 : vector<32x256xi1>
    %38 = arith.extui %37 : vector<32x256xi1> to vector<32x256xi32>
    %39 = arith.sitofp %38 : vector<32x256xi32> to vector<32x256xf32>
    %c0_3 = arith.constant 0 : index
    %c0_4 = arith.constant 0 : index
    %40 = vector.load %arg2[%c0_3, %c0_4] : memref<256x128xf32, #tpu.memory_space<vmem>>, vector<256x128xf32>
    %cst = arith.constant dense<0.000000e+00> : vector<32x128xf32>
    %41 = tpu.matmul %39, %40, %cst {dimension_numbers = #tpu.dot_dimension_numbers<[1], [0], [0], [1], [0, 0, 1, 1], [], []>} : vector<32x256xf32>, vector<256x128xf32>, vector<32x128xf32> -> vector<32x128xf32>
    %cst_5 = arith.constant dense<0.000000e+00> : vector<32xf32>
    %42 = vector.multi_reduction <add>, %0, %cst_5 [1] : vector<32x32xf32> to vector<32xf32>
    %43 = vector.shape_cast %42 : vector<32xf32> to vector<32x1xf32>
    %cst_6 = arith.constant 0.000000e+00 : f32
    %44 = vector.broadcast %cst_6 : f32 to vector<32x1xf32>
    %45 = arith.cmpf ogt, %43, %44 : vector<32x1xf32>
    %cst_7 = arith.constant 1.000000e+00 : f32
    %46 = vector.broadcast %cst_7 : f32 to vector<32x1xf32>
    %47 = arith.maximumf %43, %46 : vector<32x1xf32>
    %cst_8 = arith.constant 1.000000e+00 : f32
    %48 = vector.broadcast %cst_8 : f32 to vector<32x1xf32>
    %49 = arith.divf %48, %47 : vector<32x1xf32>
    %cst_9 = arith.constant 1.000000e+00 : f32
    %50 = vector.broadcast %cst_9 : f32 to vector<32x1xf32>
    %51 = arith.addf %47, %50 : vector<32x1xf32>
    %52 = math.log %51 : vector<32x1xf32>
    %cst_10 = arith.constant 0.402802706 : f32
    %53 = vector.broadcast %cst_10 : f32 to vector<32x1xf32>
    %54 = arith.mulf %52, %53 : vector<32x1xf32>
    %cst_11 = arith.constant 2.48260498 : f32
    %55 = vector.broadcast %cst_11 : f32 to vector<32x1xf32>
    %56 = arith.divf %55, %52 : vector<32x1xf32>
    %57 = arith.truncf %0 : vector<32x32xf32> to vector<32x32xbf16>
    %58 = arith.mulf %41, %41 : vector<32x128xf32>
    %59 = tpu.concatenate %41, %58 in 1 : vector<32x128xf32>, vector<32x128xf32> -> vector<32x256xf32>
    %60 = arith.truncf %59 : vector<32x256xf32> to vector<32x256xbf16>
    %cst_12 = arith.constant dense<0.000000e+00> : vector<32x256xf32>
    %61 = tpu.matmul %57, %60, %cst_12 {dimension_numbers = #tpu.dot_dimension_numbers<[1], [0], [0], [1], [0, 0, 1, 1], [], []>} : vector<32x32xbf16>, vector<32x256xbf16>, vector<32x256xf32> -> vector<32x256xf32>
    %62 = vector.extract_strided_slice %61 {offsets = [0, 0], sizes = [32, 128], strides = [1, 1]} : vector<32x256xf32> to vector<32x128xf32>
    %63 = vector.broadcast %49 : vector<32x1xf32> to vector<32x128xf32>
    %64 = arith.mulf %62, %63 : vector<32x128xf32>
    %65 = vector.extract_strided_slice %61 {offsets = [0, 128], sizes = [32, 128], strides = [1, 1]} : vector<32x256xf32> to vector<32x128xf32>
    %66 = vector.broadcast %49 : vector<32x1xf32> to vector<32x128xf32>
    %67 = arith.mulf %65, %66 : vector<32x128xf32>
    %68 = arith.mulf %64, %64 : vector<32x128xf32>
    %69 = arith.subf %67, %68 : vector<32x128xf32>
    %cst_13 = arith.constant 0.000000e+00 : f32
    %70 = vector.broadcast %cst_13 : f32 to vector<32x128xf32>
    %71 = arith.maximumf %69, %70 : vector<32x128xf32>
    %cst_14 = arith.constant 9.99999974E-6 : f32
    %72 = vector.broadcast %cst_14 : f32 to vector<32x128xf32>
    %73 = arith.addf %71, %72 : vector<32x128xf32>
    %74 = math.sqrt %73 : vector<32x128xf32>
    %cst_15 = arith.constant 0.000000e+00 : f32
    %75 = vector.broadcast %cst_15 : f32 to vector<32x128xf32>
    %76 = arith.subf %75, %41 : vector<32x128xf32>
    %77 = tpu.concatenate %41, %76 in 1 : vector<32x128xf32>, vector<32x128xf32> -> vector<32x256xf32>
    %cst_16 = arith.constant -3.000000e+38 : f32
    %78 = vector.broadcast %cst_16 : f32 to vector<32x256xf32>
    %79 = vector.extract_strided_slice %0 {offsets = [0, 0], sizes = [32, 1], strides = [1, 1]} : vector<32x32xf32> to vector<32x1xf32>
    %cst_17 = arith.constant 0.000000e+00 : f32
    %80 = vector.broadcast %cst_17 : f32 to vector<32x1xf32>
    %81 = arith.cmpf one, %79, %80 : vector<32x1xf32>
    %82 = vector.extract_strided_slice %77 {offsets = [0, 0], sizes = [1, 256], strides = [1, 1]} : vector<32x256xf32> to vector<1x256xf32>
    %83 = vector.broadcast %82 : vector<1x256xf32> to vector<32x256xf32>
    %84 = arith.maximumf %78, %83 : vector<32x256xf32>
    %85 = vector.shape_cast %81 : vector<32x1xi1> to vector<32x1xi1>
    %86 = vector.broadcast %85 : vector<32x1xi1> to vector<32x256xi1>
    %87 = arith.select %86, %84, %78 : vector<32x256xi1>, vector<32x256xf32>
    %88 = vector.extract_strided_slice %0 {offsets = [0, 1], sizes = [32, 1], strides = [1, 1]} : vector<32x32xf32> to vector<32x1xf32>
    %cst_18 = arith.constant 0.000000e+00 : f32
    %89 = vector.broadcast %cst_18 : f32 to vector<32x1xf32>
    %90 = arith.cmpf one, %88, %89 : vector<32x1xf32>
    %91 = vector.extract_strided_slice %77 {offsets = [1, 0], sizes = [1, 256], strides = [1, 1]} : vector<32x256xf32> to vector<1x256xf32>
    %92 = vector.broadcast %91 : vector<1x256xf32> to vector<32x256xf32>
    %93 = arith.maximumf %87, %92 : vector<32x256xf32>
    %94 = vector.shape_cast %90 : vector<32x1xi1> to vector<32x1xi1>
    %95 = vector.broadcast %94 : vector<32x1xi1> to vector<32x256xi1>
    %96 = arith.select %95, %93, %87 : vector<32x256xi1>, vector<32x256xf32>
    %97 = vector.extract_strided_slice %0 {offsets = [0, 2], sizes = [32, 1], strides = [1, 1]} : vector<32x32xf32> to vector<32x1xf32>
    %cst_19 = arith.constant 0.000000e+00 : f32
    %98 = vector.broadcast %cst_19 : f32 to vector<32x1xf32>
    %99 = arith.cmpf one, %97, %98 : vector<32x1xf32>
    %100 = vector.extract_strided_slice %77 {offsets = [2, 0], sizes = [1, 256], strides = [1, 1]} : vector<32x256xf32> to vector<1x256xf32>
    %101 = vector.broadcast %100 : vector<1x256xf32> to vector<32x256xf32>
    %102 = arith.maximumf %96, %101 : vector<32x256xf32>
    %103 = vector.shape_cast %99 : vector<32x1xi1> to vector<32x1xi1>
    %104 = vector.broadcast %103 : vector<32x1xi1> to vector<32x256xi1>
    %105 = arith.select %104, %102, %96 : vector<32x256xi1>, vector<32x256xf32>
    %106 = vector.extract_strided_slice %0 {offsets = [0, 3], sizes = [32, 1], strides = [1, 1]} : vector<32x32xf32> to vector<32x1xf32>
    %cst_20 = arith.constant 0.000000e+00 : f32
    %107 = vector.broadcast %cst_20 : f32 to vector<32x1xf32>
    %108 = arith.cmpf one, %106, %107 : vector<32x1xf32>
    %109 = vector.extract_strided_slice %77 {offsets = [3, 0], sizes = [1, 256], strides = [1, 1]} : vector<32x256xf32> to vector<1x256xf32>
    %110 = vector.broadcast %109 : vector<1x256xf32> to vector<32x256xf32>
    %111 = arith.maximumf %105, %110 : vector<32x256xf32>
    %112 = vector.shape_cast %108 : vector<32x1xi1> to vector<32x1xi1>
    %113 = vector.broadcast %112 : vector<32x1xi1> to vector<32x256xi1>
    %114 = arith.select %113, %111, %105 : vector<32x256xi1>, vector<32x256xf32>
    %115 = vector.extract_strided_slice %0 {offsets = [0, 4], sizes = [32, 1], strides = [1, 1]} : vector<32x32xf32> to vector<32x1xf32>
    %cst_21 = arith.constant 0.000000e+00 : f32
    %116 = vector.broadcast %cst_21 : f32 to vector<32x1xf32>
    %117 = arith.cmpf one, %115, %116 : vector<32x1xf32>
    %118 = vector.extract_strided_slice %77 {offsets = [4, 0], sizes = [1, 256], strides = [1, 1]} : vector<32x256xf32> to vector<1x256xf32>
    %119 = vector.broadcast %118 : vector<1x256xf32> to vector<32x256xf32>
    %120 = arith.maximumf %114, %119 : vector<32x256xf32>
    %121 = vector.shape_cast %117 : vector<32x1xi1> to vector<32x1xi1>
    %122 = vector.broadcast %121 : vector<32x1xi1> to vector<32x256xi1>
    %123 = arith.select %122, %120, %114 : vector<32x256xi1>, vector<32x256xf32>
    %124 = vector.extract_strided_slice %0 {offsets = [0, 5], sizes = [32, 1], strides = [1, 1]} : vector<32x32xf32> to vector<32x1xf32>
    %cst_22 = arith.constant 0.000000e+00 : f32
    %125 = vector.broadcast %cst_22 : f32 to vector<32x1xf32>
    %126 = arith.cmpf one, %124, %125 : vector<32x1xf32>
    %127 = vector.extract_strided_slice %77 {offsets = [5, 0], sizes = [1, 256], strides = [1, 1]} : vector<32x256xf32> to vector<1x256xf32>
    %128 = vector.broadcast %127 : vector<1x256xf32> to vector<32x256xf32>
    %129 = arith.maximumf %123, %128 : vector<32x256xf32>
    %130 = vector.shape_cast %126 : vector<32x1xi1> to vector<32x1xi1>
    %131 = vector.broadcast %130 : vector<32x1xi1> to vector<32x256xi1>
    %132 = arith.select %131, %129, %123 : vector<32x256xi1>, vector<32x256xf32>
    %133 = vector.extract_strided_slice %0 {offsets = [0, 6], sizes = [32, 1], strides = [1, 1]} : vector<32x32xf32> to vector<32x1xf32>
    %cst_23 = arith.constant 0.000000e+00 : f32
    %134 = vector.broadcast %cst_23 : f32 to vector<32x1xf32>
    %135 = arith.cmpf one, %133, %134 : vector<32x1xf32>
    %136 = vector.extract_strided_slice %77 {offsets = [6, 0], sizes = [1, 256], strides = [1, 1]} : vector<32x256xf32> to vector<1x256xf32>
    %137 = vector.broadcast %136 : vector<1x256xf32> to vector<32x256xf32>
    %138 = arith.maximumf %132, %137 : vector<32x256xf32>
    %139 = vector.shape_cast %135 : vector<32x1xi1> to vector<32x1xi1>
    %140 = vector.broadcast %139 : vector<32x1xi1> to vector<32x256xi1>
    %141 = arith.select %140, %138, %132 : vector<32x256xi1>, vector<32x256xf32>
    %142 = vector.extract_strided_slice %0 {offsets = [0, 7], sizes = [32, 1], strides = [1, 1]} : vector<32x32xf32> to vector<32x1xf32>
    %cst_24 = arith.constant 0.000000e+00 : f32
    %143 = vector.broadcast %cst_24 : f32 to vector<32x1xf32>
    %144 = arith.cmpf one, %142, %143 : vector<32x1xf32>
    %145 = vector.extract_strided_slice %77 {offsets = [7, 0], sizes = [1, 256], strides = [1, 1]} : vector<32x256xf32> to vector<1x256xf32>
    %146 = vector.broadcast %145 : vector<1x256xf32> to vector<32x256xf32>
    %147 = arith.maximumf %141, %146 : vector<32x256xf32>
    %148 = vector.shape_cast %144 : vector<32x1xi1> to vector<32x1xi1>
    %149 = vector.broadcast %148 : vector<32x1xi1> to vector<32x256xi1>
    %150 = arith.select %149, %147, %141 : vector<32x256xi1>, vector<32x256xf32>
    %151 = vector.extract_strided_slice %0 {offsets = [0, 8], sizes = [32, 1], strides = [1, 1]} : vector<32x32xf32> to vector<32x1xf32>
    %cst_25 = arith.constant 0.000000e+00 : f32
    %152 = vector.broadcast %cst_25 : f32 to vector<32x1xf32>
    %153 = arith.cmpf one, %151, %152 : vector<32x1xf32>
    %154 = vector.extract_strided_slice %77 {offsets = [8, 0], sizes = [1, 256], strides = [1, 1]} : vector<32x256xf32> to vector<1x256xf32>
    %155 = vector.broadcast %154 : vector<1x256xf32> to vector<32x256xf32>
    %156 = arith.maximumf %150, %155 : vector<32x256xf32>
    %157 = vector.shape_cast %153 : vector<32x1xi1> to vector<32x1xi1>
    %158 = vector.broadcast %157 : vector<32x1xi1> to vector<32x256xi1>
    %159 = arith.select %158, %156, %150 : vector<32x256xi1>, vector<32x256xf32>
    %160 = vector.extract_strided_slice %0 {offsets = [0, 9], sizes = [32, 1], strides = [1, 1]} : vector<32x32xf32> to vector<32x1xf32>
    %cst_26 = arith.constant 0.000000e+00 : f32
    %161 = vector.broadcast %cst_26 : f32 to vector<32x1xf32>
    %162 = arith.cmpf one, %160, %161 : vector<32x1xf32>
    %163 = vector.extract_strided_slice %77 {offsets = [9, 0], sizes = [1, 256], strides = [1, 1]} : vector<32x256xf32> to vector<1x256xf32>
    %164 = vector.broadcast %163 : vector<1x256xf32> to vector<32x256xf32>
    %165 = arith.maximumf %159, %164 : vector<32x256xf32>
    %166 = vector.shape_cast %162 : vector<32x1xi1> to vector<32x1xi1>
    %167 = vector.broadcast %166 : vector<32x1xi1> to vector<32x256xi1>
    %168 = arith.select %167, %165, %159 : vector<32x256xi1>, vector<32x256xf32>
    %169 = vector.extract_strided_slice %0 {offsets = [0, 10], sizes = [32, 1], strides = [1, 1]} : vector<32x32xf32> to vector<32x1xf32>
    %cst_27 = arith.constant 0.000000e+00 : f32
    %170 = vector.broadcast %cst_27 : f32 to vector<32x1xf32>
    %171 = arith.cmpf one, %169, %170 : vector<32x1xf32>
    %172 = vector.extract_strided_slice %77 {offsets = [10, 0], sizes = [1, 256], strides = [1, 1]} : vector<32x256xf32> to vector<1x256xf32>
    %173 = vector.broadcast %172 : vector<1x256xf32> to vector<32x256xf32>
    %174 = arith.maximumf %168, %173 : vector<32x256xf32>
    %175 = vector.shape_cast %171 : vector<32x1xi1> to vector<32x1xi1>
    %176 = vector.broadcast %175 : vector<32x1xi1> to vector<32x256xi1>
    %177 = arith.select %176, %174, %168 : vector<32x256xi1>, vector<32x256xf32>
    %178 = vector.extract_strided_slice %0 {offsets = [0, 11], sizes = [32, 1], strides = [1, 1]} : vector<32x32xf32> to vector<32x1xf32>
    %cst_28 = arith.constant 0.000000e+00 : f32
    %179 = vector.broadcast %cst_28 : f32 to vector<32x1xf32>
    %180 = arith.cmpf one, %178, %179 : vector<32x1xf32>
    %181 = vector.extract_strided_slice %77 {offsets = [11, 0], sizes = [1, 256], strides = [1, 1]} : vector<32x256xf32> to vector<1x256xf32>
    %182 = vector.broadcast %181 : vector<1x256xf32> to vector<32x256xf32>
    %183 = arith.maximumf %177, %182 : vector<32x256xf32>
    %184 = vector.shape_cast %180 : vector<32x1xi1> to vector<32x1xi1>
    %185 = vector.broadcast %184 : vector<32x1xi1> to vector<32x256xi1>
    %186 = arith.select %185, %183, %177 : vector<32x256xi1>, vector<32x256xf32>
    %187 = vector.extract_strided_slice %0 {offsets = [0, 12], sizes = [32, 1], strides = [1, 1]} : vector<32x32xf32> to vector<32x1xf32>
    %cst_29 = arith.constant 0.000000e+00 : f32
    %188 = vector.broadcast %cst_29 : f32 to vector<32x1xf32>
    %189 = arith.cmpf one, %187, %188 : vector<32x1xf32>
    %190 = vector.extract_strided_slice %77 {offsets = [12, 0], sizes = [1, 256], strides = [1, 1]} : vector<32x256xf32> to vector<1x256xf32>
    %191 = vector.broadcast %190 : vector<1x256xf32> to vector<32x256xf32>
    %192 = arith.maximumf %186, %191 : vector<32x256xf32>
    %193 = vector.shape_cast %189 : vector<32x1xi1> to vector<32x1xi1>
    %194 = vector.broadcast %193 : vector<32x1xi1> to vector<32x256xi1>
    %195 = arith.select %194, %192, %186 : vector<32x256xi1>, vector<32x256xf32>
    %196 = vector.extract_strided_slice %0 {offsets = [0, 13], sizes = [32, 1], strides = [1, 1]} : vector<32x32xf32> to vector<32x1xf32>
    %cst_30 = arith.constant 0.000000e+00 : f32
    %197 = vector.broadcast %cst_30 : f32 to vector<32x1xf32>
    %198 = arith.cmpf one, %196, %197 : vector<32x1xf32>
    %199 = vector.extract_strided_slice %77 {offsets = [13, 0], sizes = [1, 256], strides = [1, 1]} : vector<32x256xf32> to vector<1x256xf32>
    %200 = vector.broadcast %199 : vector<1x256xf32> to vector<32x256xf32>
    %201 = arith.maximumf %195, %200 : vector<32x256xf32>
    %202 = vector.shape_cast %198 : vector<32x1xi1> to vector<32x1xi1>
    %203 = vector.broadcast %202 : vector<32x1xi1> to vector<32x256xi1>
    %204 = arith.select %203, %201, %195 : vector<32x256xi1>, vector<32x256xf32>
    %205 = vector.extract_strided_slice %0 {offsets = [0, 14], sizes = [32, 1], strides = [1, 1]} : vector<32x32xf32> to vector<32x1xf32>
    %cst_31 = arith.constant 0.000000e+00 : f32
    %206 = vector.broadcast %cst_31 : f32 to vector<32x1xf32>
    %207 = arith.cmpf one, %205, %206 : vector<32x1xf32>
    %208 = vector.extract_strided_slice %77 {offsets = [14, 0], sizes = [1, 256], strides = [1, 1]} : vector<32x256xf32> to vector<1x256xf32>
    %209 = vector.broadcast %208 : vector<1x256xf32> to vector<32x256xf32>
    %210 = arith.maximumf %204, %209 : vector<32x256xf32>
    %211 = vector.shape_cast %207 : vector<32x1xi1> to vector<32x1xi1>
    %212 = vector.broadcast %211 : vector<32x1xi1> to vector<32x256xi1>
    %213 = arith.select %212, %210, %204 : vector<32x256xi1>, vector<32x256xf32>
    %214 = vector.extract_strided_slice %0 {offsets = [0, 15], sizes = [32, 1], strides = [1, 1]} : vector<32x32xf32> to vector<32x1xf32>
    %cst_32 = arith.constant 0.000000e+00 : f32
    %215 = vector.broadcast %cst_32 : f32 to vector<32x1xf32>
    %216 = arith.cmpf one, %214, %215 : vector<32x1xf32>
    %217 = vector.extract_strided_slice %77 {offsets = [15, 0], sizes = [1, 256], strides = [1, 1]} : vector<32x256xf32> to vector<1x256xf32>
    %218 = vector.broadcast %217 : vector<1x256xf32> to vector<32x256xf32>
    %219 = arith.maximumf %213, %218 : vector<32x256xf32>
    %220 = vector.shape_cast %216 : vector<32x1xi1> to vector<32x1xi1>
    %221 = vector.broadcast %220 : vector<32x1xi1> to vector<32x256xi1>
    %222 = arith.select %221, %219, %213 : vector<32x256xi1>, vector<32x256xf32>
    %223 = vector.extract_strided_slice %0 {offsets = [0, 16], sizes = [32, 1], strides = [1, 1]} : vector<32x32xf32> to vector<32x1xf32>
    %cst_33 = arith.constant 0.000000e+00 : f32
    %224 = vector.broadcast %cst_33 : f32 to vector<32x1xf32>
    %225 = arith.cmpf one, %223, %224 : vector<32x1xf32>
    %226 = vector.extract_strided_slice %77 {offsets = [16, 0], sizes = [1, 256], strides = [1, 1]} : vector<32x256xf32> to vector<1x256xf32>
    %227 = vector.broadcast %226 : vector<1x256xf32> to vector<32x256xf32>
    %228 = arith.maximumf %222, %227 : vector<32x256xf32>
    %229 = vector.shape_cast %225 : vector<32x1xi1> to vector<32x1xi1>
    %230 = vector.broadcast %229 : vector<32x1xi1> to vector<32x256xi1>
    %231 = arith.select %230, %228, %222 : vector<32x256xi1>, vector<32x256xf32>
    %232 = vector.extract_strided_slice %0 {offsets = [0, 17], sizes = [32, 1], strides = [1, 1]} : vector<32x32xf32> to vector<32x1xf32>
    %cst_34 = arith.constant 0.000000e+00 : f32
    %233 = vector.broadcast %cst_34 : f32 to vector<32x1xf32>
    %234 = arith.cmpf one, %232, %233 : vector<32x1xf32>
    %235 = vector.extract_strided_slice %77 {offsets = [17, 0], sizes = [1, 256], strides = [1, 1]} : vector<32x256xf32> to vector<1x256xf32>
    %236 = vector.broadcast %235 : vector<1x256xf32> to vector<32x256xf32>
    %237 = arith.maximumf %231, %236 : vector<32x256xf32>
    %238 = vector.shape_cast %234 : vector<32x1xi1> to vector<32x1xi1>
    %239 = vector.broadcast %238 : vector<32x1xi1> to vector<32x256xi1>
    %240 = arith.select %239, %237, %231 : vector<32x256xi1>, vector<32x256xf32>
    %241 = vector.extract_strided_slice %0 {offsets = [0, 18], sizes = [32, 1], strides = [1, 1]} : vector<32x32xf32> to vector<32x1xf32>
    %cst_35 = arith.constant 0.000000e+00 : f32
    %242 = vector.broadcast %cst_35 : f32 to vector<32x1xf32>
    %243 = arith.cmpf one, %241, %242 : vector<32x1xf32>
    %244 = vector.extract_strided_slice %77 {offsets = [18, 0], sizes = [1, 256], strides = [1, 1]} : vector<32x256xf32> to vector<1x256xf32>
    %245 = vector.broadcast %244 : vector<1x256xf32> to vector<32x256xf32>
    %246 = arith.maximumf %240, %245 : vector<32x256xf32>
    %247 = vector.shape_cast %243 : vector<32x1xi1> to vector<32x1xi1>
    %248 = vector.broadcast %247 : vector<32x1xi1> to vector<32x256xi1>
    %249 = arith.select %248, %246, %240 : vector<32x256xi1>, vector<32x256xf32>
    %250 = vector.extract_strided_slice %0 {offsets = [0, 19], sizes = [32, 1], strides = [1, 1]} : vector<32x32xf32> to vector<32x1xf32>
    %cst_36 = arith.constant 0.000000e+00 : f32
    %251 = vector.broadcast %cst_36 : f32 to vector<32x1xf32>
    %252 = arith.cmpf one, %250, %251 : vector<32x1xf32>
    %253 = vector.extract_strided_slice %77 {offsets = [19, 0], sizes = [1, 256], strides = [1, 1]} : vector<32x256xf32> to vector<1x256xf32>
    %254 = vector.broadcast %253 : vector<1x256xf32> to vector<32x256xf32>
    %255 = arith.maximumf %249, %254 : vector<32x256xf32>
    %256 = vector.shape_cast %252 : vector<32x1xi1> to vector<32x1xi1>
    %257 = vector.broadcast %256 : vector<32x1xi1> to vector<32x256xi1>
    %258 = arith.select %257, %255, %249 : vector<32x256xi1>, vector<32x256xf32>
    %259 = vector.extract_strided_slice %0 {offsets = [0, 20], sizes = [32, 1], strides = [1, 1]} : vector<32x32xf32> to vector<32x1xf32>
    %cst_37 = arith.constant 0.000000e+00 : f32
    %260 = vector.broadcast %cst_37 : f32 to vector<32x1xf32>
    %261 = arith.cmpf one, %259, %260 : vector<32x1xf32>
    %262 = vector.extract_strided_slice %77 {offsets = [20, 0], sizes = [1, 256], strides = [1, 1]} : vector<32x256xf32> to vector<1x256xf32>
    %263 = vector.broadcast %262 : vector<1x256xf32> to vector<32x256xf32>
    %264 = arith.maximumf %258, %263 : vector<32x256xf32>
    %265 = vector.shape_cast %261 : vector<32x1xi1> to vector<32x1xi1>
    %266 = vector.broadcast %265 : vector<32x1xi1> to vector<32x256xi1>
    %267 = arith.select %266, %264, %258 : vector<32x256xi1>, vector<32x256xf32>
    %268 = vector.extract_strided_slice %0 {offsets = [0, 21], sizes = [32, 1], strides = [1, 1]} : vector<32x32xf32> to vector<32x1xf32>
    %cst_38 = arith.constant 0.000000e+00 : f32
    %269 = vector.broadcast %cst_38 : f32 to vector<32x1xf32>
    %270 = arith.cmpf one, %268, %269 : vector<32x1xf32>
    %271 = vector.extract_strided_slice %77 {offsets = [21, 0], sizes = [1, 256], strides = [1, 1]} : vector<32x256xf32> to vector<1x256xf32>
    %272 = vector.broadcast %271 : vector<1x256xf32> to vector<32x256xf32>
    %273 = arith.maximumf %267, %272 : vector<32x256xf32>
    %274 = vector.shape_cast %270 : vector<32x1xi1> to vector<32x1xi1>
    %275 = vector.broadcast %274 : vector<32x1xi1> to vector<32x256xi1>
    %276 = arith.select %275, %273, %267 : vector<32x256xi1>, vector<32x256xf32>
    %277 = vector.extract_strided_slice %0 {offsets = [0, 22], sizes = [32, 1], strides = [1, 1]} : vector<32x32xf32> to vector<32x1xf32>
    %cst_39 = arith.constant 0.000000e+00 : f32
    %278 = vector.broadcast %cst_39 : f32 to vector<32x1xf32>
    %279 = arith.cmpf one, %277, %278 : vector<32x1xf32>
    %280 = vector.extract_strided_slice %77 {offsets = [22, 0], sizes = [1, 256], strides = [1, 1]} : vector<32x256xf32> to vector<1x256xf32>
    %281 = vector.broadcast %280 : vector<1x256xf32> to vector<32x256xf32>
    %282 = arith.maximumf %276, %281 : vector<32x256xf32>
    %283 = vector.shape_cast %279 : vector<32x1xi1> to vector<32x1xi1>
    %284 = vector.broadcast %283 : vector<32x1xi1> to vector<32x256xi1>
    %285 = arith.select %284, %282, %276 : vector<32x256xi1>, vector<32x256xf32>
    %286 = vector.extract_strided_slice %0 {offsets = [0, 23], sizes = [32, 1], strides = [1, 1]} : vector<32x32xf32> to vector<32x1xf32>
    %cst_40 = arith.constant 0.000000e+00 : f32
    %287 = vector.broadcast %cst_40 : f32 to vector<32x1xf32>
    %288 = arith.cmpf one, %286, %287 : vector<32x1xf32>
    %289 = vector.extract_strided_slice %77 {offsets = [23, 0], sizes = [1, 256], strides = [1, 1]} : vector<32x256xf32> to vector<1x256xf32>
    %290 = vector.broadcast %289 : vector<1x256xf32> to vector<32x256xf32>
    %291 = arith.maximumf %285, %290 : vector<32x256xf32>
    %292 = vector.shape_cast %288 : vector<32x1xi1> to vector<32x1xi1>
    %293 = vector.broadcast %292 : vector<32x1xi1> to vector<32x256xi1>
    %294 = arith.select %293, %291, %285 : vector<32x256xi1>, vector<32x256xf32>
    %295 = vector.extract_strided_slice %0 {offsets = [0, 24], sizes = [32, 1], strides = [1, 1]} : vector<32x32xf32> to vector<32x1xf32>
    %cst_41 = arith.constant 0.000000e+00 : f32
    %296 = vector.broadcast %cst_41 : f32 to vector<32x1xf32>
    %297 = arith.cmpf one, %295, %296 : vector<32x1xf32>
    %298 = vector.extract_strided_slice %77 {offsets = [24, 0], sizes = [1, 256], strides = [1, 1]} : vector<32x256xf32> to vector<1x256xf32>
    %299 = vector.broadcast %298 : vector<1x256xf32> to vector<32x256xf32>
    %300 = arith.maximumf %294, %299 : vector<32x256xf32>
    %301 = vector.shape_cast %297 : vector<32x1xi1> to vector<32x1xi1>
    %302 = vector.broadcast %301 : vector<32x1xi1> to vector<32x256xi1>
    %303 = arith.select %302, %300, %294 : vector<32x256xi1>, vector<32x256xf32>
    %304 = vector.extract_strided_slice %0 {offsets = [0, 25], sizes = [32, 1], strides = [1, 1]} : vector<32x32xf32> to vector<32x1xf32>
    %cst_42 = arith.constant 0.000000e+00 : f32
    %305 = vector.broadcast %cst_42 : f32 to vector<32x1xf32>
    %306 = arith.cmpf one, %304, %305 : vector<32x1xf32>
    %307 = vector.extract_strided_slice %77 {offsets = [25, 0], sizes = [1, 256], strides = [1, 1]} : vector<32x256xf32> to vector<1x256xf32>
    %308 = vector.broadcast %307 : vector<1x256xf32> to vector<32x256xf32>
    %309 = arith.maximumf %303, %308 : vector<32x256xf32>
    %310 = vector.shape_cast %306 : vector<32x1xi1> to vector<32x1xi1>
    %311 = vector.broadcast %310 : vector<32x1xi1> to vector<32x256xi1>
    %312 = arith.select %311, %309, %303 : vector<32x256xi1>, vector<32x256xf32>
    %313 = vector.extract_strided_slice %0 {offsets = [0, 26], sizes = [32, 1], strides = [1, 1]} : vector<32x32xf32> to vector<32x1xf32>
    %cst_43 = arith.constant 0.000000e+00 : f32
    %314 = vector.broadcast %cst_43 : f32 to vector<32x1xf32>
    %315 = arith.cmpf one, %313, %314 : vector<32x1xf32>
    %316 = vector.extract_strided_slice %77 {offsets = [26, 0], sizes = [1, 256], strides = [1, 1]} : vector<32x256xf32> to vector<1x256xf32>
    %317 = vector.broadcast %316 : vector<1x256xf32> to vector<32x256xf32>
    %318 = arith.maximumf %312, %317 : vector<32x256xf32>
    %319 = vector.shape_cast %315 : vector<32x1xi1> to vector<32x1xi1>
    %320 = vector.broadcast %319 : vector<32x1xi1> to vector<32x256xi1>
    %321 = arith.select %320, %318, %312 : vector<32x256xi1>, vector<32x256xf32>
    %322 = vector.extract_strided_slice %0 {offsets = [0, 27], sizes = [32, 1], strides = [1, 1]} : vector<32x32xf32> to vector<32x1xf32>
    %cst_44 = arith.constant 0.000000e+00 : f32
    %323 = vector.broadcast %cst_44 : f32 to vector<32x1xf32>
    %324 = arith.cmpf one, %322, %323 : vector<32x1xf32>
    %325 = vector.extract_strided_slice %77 {offsets = [27, 0], sizes = [1, 256], strides = [1, 1]} : vector<32x256xf32> to vector<1x256xf32>
    %326 = vector.broadcast %325 : vector<1x256xf32> to vector<32x256xf32>
    %327 = arith.maximumf %321, %326 : vector<32x256xf32>
    %328 = vector.shape_cast %324 : vector<32x1xi1> to vector<32x1xi1>
    %329 = vector.broadcast %328 : vector<32x1xi1> to vector<32x256xi1>
    %330 = arith.select %329, %327, %321 : vector<32x256xi1>, vector<32x256xf32>
    %331 = vector.extract_strided_slice %0 {offsets = [0, 28], sizes = [32, 1], strides = [1, 1]} : vector<32x32xf32> to vector<32x1xf32>
    %cst_45 = arith.constant 0.000000e+00 : f32
    %332 = vector.broadcast %cst_45 : f32 to vector<32x1xf32>
    %333 = arith.cmpf one, %331, %332 : vector<32x1xf32>
    %334 = vector.extract_strided_slice %77 {offsets = [28, 0], sizes = [1, 256], strides = [1, 1]} : vector<32x256xf32> to vector<1x256xf32>
    %335 = vector.broadcast %334 : vector<1x256xf32> to vector<32x256xf32>
    %336 = arith.maximumf %330, %335 : vector<32x256xf32>
    %337 = vector.shape_cast %333 : vector<32x1xi1> to vector<32x1xi1>
    %338 = vector.broadcast %337 : vector<32x1xi1> to vector<32x256xi1>
    %339 = arith.select %338, %336, %330 : vector<32x256xi1>, vector<32x256xf32>
    %340 = vector.extract_strided_slice %0 {offsets = [0, 29], sizes = [32, 1], strides = [1, 1]} : vector<32x32xf32> to vector<32x1xf32>
    %cst_46 = arith.constant 0.000000e+00 : f32
    %341 = vector.broadcast %cst_46 : f32 to vector<32x1xf32>
    %342 = arith.cmpf one, %340, %341 : vector<32x1xf32>
    %343 = vector.extract_strided_slice %77 {offsets = [29, 0], sizes = [1, 256], strides = [1, 1]} : vector<32x256xf32> to vector<1x256xf32>
    %344 = vector.broadcast %343 : vector<1x256xf32> to vector<32x256xf32>
    %345 = arith.maximumf %339, %344 : vector<32x256xf32>
    %346 = vector.shape_cast %342 : vector<32x1xi1> to vector<32x1xi1>
    %347 = vector.broadcast %346 : vector<32x1xi1> to vector<32x256xi1>
    %348 = arith.select %347, %345, %339 : vector<32x256xi1>, vector<32x256xf32>
    %349 = vector.extract_strided_slice %0 {offsets = [0, 30], sizes = [32, 1], strides = [1, 1]} : vector<32x32xf32> to vector<32x1xf32>
    %cst_47 = arith.constant 0.000000e+00 : f32
    %350 = vector.broadcast %cst_47 : f32 to vector<32x1xf32>
    %351 = arith.cmpf one, %349, %350 : vector<32x1xf32>
    %352 = vector.extract_strided_slice %77 {offsets = [30, 0], sizes = [1, 256], strides = [1, 1]} : vector<32x256xf32> to vector<1x256xf32>
    %353 = vector.broadcast %352 : vector<1x256xf32> to vector<32x256xf32>
    %354 = arith.maximumf %348, %353 : vector<32x256xf32>
    %355 = vector.shape_cast %351 : vector<32x1xi1> to vector<32x1xi1>
    %356 = vector.broadcast %355 : vector<32x1xi1> to vector<32x256xi1>
    %357 = arith.select %356, %354, %348 : vector<32x256xi1>, vector<32x256xf32>
    %358 = vector.extract_strided_slice %0 {offsets = [0, 31], sizes = [32, 1], strides = [1, 1]} : vector<32x32xf32> to vector<32x1xf32>
    %cst_48 = arith.constant 0.000000e+00 : f32
    %359 = vector.broadcast %cst_48 : f32 to vector<32x1xf32>
    %360 = arith.cmpf one, %358, %359 : vector<32x1xf32>
    %361 = vector.extract_strided_slice %77 {offsets = [31, 0], sizes = [1, 256], strides = [1, 1]} : vector<32x256xf32> to vector<1x256xf32>
    %362 = vector.broadcast %361 : vector<1x256xf32> to vector<32x256xf32>
    %363 = arith.maximumf %357, %362 : vector<32x256xf32>
    %364 = vector.shape_cast %360 : vector<32x1xi1> to vector<32x1xi1>
    %365 = vector.broadcast %364 : vector<32x1xi1> to vector<32x256xi1>
    %366 = arith.select %365, %363, %357 : vector<32x256xi1>, vector<32x256xf32>
    %cst_49 = arith.constant 0.000000e+00 : f32
    %367 = vector.shape_cast %45 : vector<32x1xi1> to vector<32x1xi1>
    %368 = vector.broadcast %367 : vector<32x1xi1> to vector<32x256xi1>
    %369 = vector.broadcast %cst_49 : f32 to vector<32x256xf32>
    %370 = arith.select %368, %366, %369 : vector<32x256xi1>, vector<32x256xf32>
    %371 = vector.extract_strided_slice %370 {offsets = [0, 0], sizes = [32, 128], strides = [1, 1]} : vector<32x256xf32> to vector<32x128xf32>
    %372 = vector.extract_strided_slice %370 {offsets = [0, 128], sizes = [32, 128], strides = [1, 1]} : vector<32x256xf32> to vector<32x128xf32>
    %cst_50 = arith.constant 0.000000e+00 : f32
    %373 = vector.broadcast %cst_50 : f32 to vector<32x128xf32>
    %374 = arith.subf %373, %372 : vector<32x128xf32>
    %375 = tpu.concatenate %64, %371, %374, %74 in 1 : vector<32x128xf32>, vector<32x128xf32>, vector<32x128xf32>, vector<32x128xf32> -> vector<32x512xf32>
    %376 = vector.broadcast %54 : vector<32x1xf32> to vector<32x512xf32>
    %377 = arith.mulf %375, %376 : vector<32x512xf32>
    %378 = vector.broadcast %56 : vector<32x1xf32> to vector<32x512xf32>
    %379 = arith.mulf %375, %378 : vector<32x512xf32>
    %380 = tpu.concatenate %375, %377, %379 in 1 : vector<32x512xf32>, vector<32x512xf32>, vector<32x512xf32> -> vector<32x1536xf32>
    %381 = arith.truncf %380 : vector<32x1536xf32> to vector<32x1536xbf16>
    %c0_51 = arith.constant 0 : index
    %c0_52 = arith.constant 0 : index
    %382 = vector.load %arg3[%c0_51, %c0_52] : memref<1536x128xbf16, #tpu.memory_space<vmem>>, vector<1536x128xbf16>
    %cst_53 = arith.constant dense<0.000000e+00> : vector<32x128xf32>
    %383 = tpu.matmul %381, %382, %cst_53 {dimension_numbers = #tpu.dot_dimension_numbers<[1], [0], [0], [1], [0, 0, 1, 1], [], []>} : vector<32x1536xbf16>, vector<1536x128xbf16>, vector<32x128xf32> -> vector<32x128xf32>
    %c0_54 = arith.constant 0 : index
    %c0_55 = arith.constant 0 : index
    %384 = vector.load %arg4[%c0_54, %c0_55] : memref<1x128xf32, #tpu.memory_space<vmem>>, vector<1x128xf32>
    %385 = vector.broadcast %384 : vector<1x128xf32> to vector<32x128xf32>
    %386 = arith.addf %383, %385 : vector<32x128xf32>
    %cst_56 = arith.constant 0.000000e+00 : f32
    %387 = vector.broadcast %cst_56 : f32 to vector<32x128xf32>
    %388 = arith.maximumf %386, %387 : vector<32x128xf32>
    %389 = arith.addf %41, %388 : vector<32x128xf32>
    %390 = arith.mulf %389, %389 : vector<32x128xf32>
    %391 = tpu.concatenate %389, %390 in 1 : vector<32x128xf32>, vector<32x128xf32> -> vector<32x256xf32>
    %392 = arith.truncf %391 : vector<32x256xf32> to vector<32x256xbf16>
    %cst_57 = arith.constant dense<0.000000e+00> : vector<32x256xf32>
    %393 = tpu.matmul %57, %392, %cst_57 {dimension_numbers = #tpu.dot_dimension_numbers<[1], [0], [0], [1], [0, 0, 1, 1], [], []>} : vector<32x32xbf16>, vector<32x256xbf16>, vector<32x256xf32> -> vector<32x256xf32>
    %394 = vector.extract_strided_slice %393 {offsets = [0, 0], sizes = [32, 128], strides = [1, 1]} : vector<32x256xf32> to vector<32x128xf32>
    %395 = vector.broadcast %49 : vector<32x1xf32> to vector<32x128xf32>
    %396 = arith.mulf %394, %395 : vector<32x128xf32>
    %397 = vector.extract_strided_slice %393 {offsets = [0, 128], sizes = [32, 128], strides = [1, 1]} : vector<32x256xf32> to vector<32x128xf32>
    %398 = vector.broadcast %49 : vector<32x1xf32> to vector<32x128xf32>
    %399 = arith.mulf %397, %398 : vector<32x128xf32>
    %400 = arith.mulf %396, %396 : vector<32x128xf32>
    %401 = arith.subf %399, %400 : vector<32x128xf32>
    %cst_58 = arith.constant 0.000000e+00 : f32
    %402 = vector.broadcast %cst_58 : f32 to vector<32x128xf32>
    %403 = arith.maximumf %401, %402 : vector<32x128xf32>
    %cst_59 = arith.constant 9.99999974E-6 : f32
    %404 = vector.broadcast %cst_59 : f32 to vector<32x128xf32>
    %405 = arith.addf %403, %404 : vector<32x128xf32>
    %406 = math.sqrt %405 : vector<32x128xf32>
    %cst_60 = arith.constant 0.000000e+00 : f32
    %407 = vector.broadcast %cst_60 : f32 to vector<32x128xf32>
    %408 = arith.subf %407, %389 : vector<32x128xf32>
    %409 = tpu.concatenate %389, %408 in 1 : vector<32x128xf32>, vector<32x128xf32> -> vector<32x256xf32>
    %cst_61 = arith.constant -3.000000e+38 : f32
    %410 = vector.broadcast %cst_61 : f32 to vector<32x256xf32>
    %411 = vector.extract_strided_slice %0 {offsets = [0, 0], sizes = [32, 1], strides = [1, 1]} : vector<32x32xf32> to vector<32x1xf32>
    %cst_62 = arith.constant 0.000000e+00 : f32
    %412 = vector.broadcast %cst_62 : f32 to vector<32x1xf32>
    %413 = arith.cmpf one, %411, %412 : vector<32x1xf32>
    %414 = vector.extract_strided_slice %409 {offsets = [0, 0], sizes = [1, 256], strides = [1, 1]} : vector<32x256xf32> to vector<1x256xf32>
    %415 = vector.broadcast %414 : vector<1x256xf32> to vector<32x256xf32>
    %416 = arith.maximumf %410, %415 : vector<32x256xf32>
    %417 = vector.shape_cast %413 : vector<32x1xi1> to vector<32x1xi1>
    %418 = vector.broadcast %417 : vector<32x1xi1> to vector<32x256xi1>
    %419 = arith.select %418, %416, %410 : vector<32x256xi1>, vector<32x256xf32>
    %420 = vector.extract_strided_slice %0 {offsets = [0, 1], sizes = [32, 1], strides = [1, 1]} : vector<32x32xf32> to vector<32x1xf32>
    %cst_63 = arith.constant 0.000000e+00 : f32
    %421 = vector.broadcast %cst_63 : f32 to vector<32x1xf32>
    %422 = arith.cmpf one, %420, %421 : vector<32x1xf32>
    %423 = vector.extract_strided_slice %409 {offsets = [1, 0], sizes = [1, 256], strides = [1, 1]} : vector<32x256xf32> to vector<1x256xf32>
    %424 = vector.broadcast %423 : vector<1x256xf32> to vector<32x256xf32>
    %425 = arith.maximumf %419, %424 : vector<32x256xf32>
    %426 = vector.shape_cast %422 : vector<32x1xi1> to vector<32x1xi1>
    %427 = vector.broadcast %426 : vector<32x1xi1> to vector<32x256xi1>
    %428 = arith.select %427, %425, %419 : vector<32x256xi1>, vector<32x256xf32>
    %429 = vector.extract_strided_slice %0 {offsets = [0, 2], sizes = [32, 1], strides = [1, 1]} : vector<32x32xf32> to vector<32x1xf32>
    %cst_64 = arith.constant 0.000000e+00 : f32
    %430 = vector.broadcast %cst_64 : f32 to vector<32x1xf32>
    %431 = arith.cmpf one, %429, %430 : vector<32x1xf32>
    %432 = vector.extract_strided_slice %409 {offsets = [2, 0], sizes = [1, 256], strides = [1, 1]} : vector<32x256xf32> to vector<1x256xf32>
    %433 = vector.broadcast %432 : vector<1x256xf32> to vector<32x256xf32>
    %434 = arith.maximumf %428, %433 : vector<32x256xf32>
    %435 = vector.shape_cast %431 : vector<32x1xi1> to vector<32x1xi1>
    %436 = vector.broadcast %435 : vector<32x1xi1> to vector<32x256xi1>
    %437 = arith.select %436, %434, %428 : vector<32x256xi1>, vector<32x256xf32>
    %438 = vector.extract_strided_slice %0 {offsets = [0, 3], sizes = [32, 1], strides = [1, 1]} : vector<32x32xf32> to vector<32x1xf32>
    %cst_65 = arith.constant 0.000000e+00 : f32
    %439 = vector.broadcast %cst_65 : f32 to vector<32x1xf32>
    %440 = arith.cmpf one, %438, %439 : vector<32x1xf32>
    %441 = vector.extract_strided_slice %409 {offsets = [3, 0], sizes = [1, 256], strides = [1, 1]} : vector<32x256xf32> to vector<1x256xf32>
    %442 = vector.broadcast %441 : vector<1x256xf32> to vector<32x256xf32>
    %443 = arith.maximumf %437, %442 : vector<32x256xf32>
    %444 = vector.shape_cast %440 : vector<32x1xi1> to vector<32x1xi1>
    %445 = vector.broadcast %444 : vector<32x1xi1> to vector<32x256xi1>
    %446 = arith.select %445, %443, %437 : vector<32x256xi1>, vector<32x256xf32>
    %447 = vector.extract_strided_slice %0 {offsets = [0, 4], sizes = [32, 1], strides = [1, 1]} : vector<32x32xf32> to vector<32x1xf32>
    %cst_66 = arith.constant 0.000000e+00 : f32
    %448 = vector.broadcast %cst_66 : f32 to vector<32x1xf32>
    %449 = arith.cmpf one, %447, %448 : vector<32x1xf32>
    %450 = vector.extract_strided_slice %409 {offsets = [4, 0], sizes = [1, 256], strides = [1, 1]} : vector<32x256xf32> to vector<1x256xf32>
    %451 = vector.broadcast %450 : vector<1x256xf32> to vector<32x256xf32>
    %452 = arith.maximumf %446, %451 : vector<32x256xf32>
    %453 = vector.shape_cast %449 : vector<32x1xi1> to vector<32x1xi1>
    %454 = vector.broadcast %453 : vector<32x1xi1> to vector<32x256xi1>
    %455 = arith.select %454, %452, %446 : vector<32x256xi1>, vector<32x256xf32>
    %456 = vector.extract_strided_slice %0 {offsets = [0, 5], sizes = [32, 1], strides = [1, 1]} : vector<32x32xf32> to vector<32x1xf32>
    %cst_67 = arith.constant 0.000000e+00 : f32
    %457 = vector.broadcast %cst_67 : f32 to vector<32x1xf32>
    %458 = arith.cmpf one, %456, %457 : vector<32x1xf32>
    %459 = vector.extract_strided_slice %409 {offsets = [5, 0], sizes = [1, 256], strides = [1, 1]} : vector<32x256xf32> to vector<1x256xf32>
    %460 = vector.broadcast %459 : vector<1x256xf32> to vector<32x256xf32>
    %461 = arith.maximumf %455, %460 : vector<32x256xf32>
    %462 = vector.shape_cast %458 : vector<32x1xi1> to vector<32x1xi1>
    %463 = vector.broadcast %462 : vector<32x1xi1> to vector<32x256xi1>
    %464 = arith.select %463, %461, %455 : vector<32x256xi1>, vector<32x256xf32>
    %465 = vector.extract_strided_slice %0 {offsets = [0, 6], sizes = [32, 1], strides = [1, 1]} : vector<32x32xf32> to vector<32x1xf32>
    %cst_68 = arith.constant 0.000000e+00 : f32
    %466 = vector.broadcast %cst_68 : f32 to vector<32x1xf32>
    %467 = arith.cmpf one, %465, %466 : vector<32x1xf32>
    %468 = vector.extract_strided_slice %409 {offsets = [6, 0], sizes = [1, 256], strides = [1, 1]} : vector<32x256xf32> to vector<1x256xf32>
    %469 = vector.broadcast %468 : vector<1x256xf32> to vector<32x256xf32>
    %470 = arith.maximumf %464, %469 : vector<32x256xf32>
    %471 = vector.shape_cast %467 : vector<32x1xi1> to vector<32x1xi1>
    %472 = vector.broadcast %471 : vector<32x1xi1> to vector<32x256xi1>
    %473 = arith.select %472, %470, %464 : vector<32x256xi1>, vector<32x256xf32>
    %474 = vector.extract_strided_slice %0 {offsets = [0, 7], sizes = [32, 1], strides = [1, 1]} : vector<32x32xf32> to vector<32x1xf32>
    %cst_69 = arith.constant 0.000000e+00 : f32
    %475 = vector.broadcast %cst_69 : f32 to vector<32x1xf32>
    %476 = arith.cmpf one, %474, %475 : vector<32x1xf32>
    %477 = vector.extract_strided_slice %409 {offsets = [7, 0], sizes = [1, 256], strides = [1, 1]} : vector<32x256xf32> to vector<1x256xf32>
    %478 = vector.broadcast %477 : vector<1x256xf32> to vector<32x256xf32>
    %479 = arith.maximumf %473, %478 : vector<32x256xf32>
    %480 = vector.shape_cast %476 : vector<32x1xi1> to vector<32x1xi1>
    %481 = vector.broadcast %480 : vector<32x1xi1> to vector<32x256xi1>
    %482 = arith.select %481, %479, %473 : vector<32x256xi1>, vector<32x256xf32>
    %483 = vector.extract_strided_slice %0 {offsets = [0, 8], sizes = [32, 1], strides = [1, 1]} : vector<32x32xf32> to vector<32x1xf32>
    %cst_70 = arith.constant 0.000000e+00 : f32
    %484 = vector.broadcast %cst_70 : f32 to vector<32x1xf32>
    %485 = arith.cmpf one, %483, %484 : vector<32x1xf32>
    %486 = vector.extract_strided_slice %409 {offsets = [8, 0], sizes = [1, 256], strides = [1, 1]} : vector<32x256xf32> to vector<1x256xf32>
    %487 = vector.broadcast %486 : vector<1x256xf32> to vector<32x256xf32>
    %488 = arith.maximumf %482, %487 : vector<32x256xf32>
    %489 = vector.shape_cast %485 : vector<32x1xi1> to vector<32x1xi1>
    %490 = vector.broadcast %489 : vector<32x1xi1> to vector<32x256xi1>
    %491 = arith.select %490, %488, %482 : vector<32x256xi1>, vector<32x256xf32>
    %492 = vector.extract_strided_slice %0 {offsets = [0, 9], sizes = [32, 1], strides = [1, 1]} : vector<32x32xf32> to vector<32x1xf32>
    %cst_71 = arith.constant 0.000000e+00 : f32
    %493 = vector.broadcast %cst_71 : f32 to vector<32x1xf32>
    %494 = arith.cmpf one, %492, %493 : vector<32x1xf32>
    %495 = vector.extract_strided_slice %409 {offsets = [9, 0], sizes = [1, 256], strides = [1, 1]} : vector<32x256xf32> to vector<1x256xf32>
    %496 = vector.broadcast %495 : vector<1x256xf32> to vector<32x256xf32>
    %497 = arith.maximumf %491, %496 : vector<32x256xf32>
    %498 = vector.shape_cast %494 : vector<32x1xi1> to vector<32x1xi1>
    %499 = vector.broadcast %498 : vector<32x1xi1> to vector<32x256xi1>
    %500 = arith.select %499, %497, %491 : vector<32x256xi1>, vector<32x256xf32>
    %501 = vector.extract_strided_slice %0 {offsets = [0, 10], sizes = [32, 1], strides = [1, 1]} : vector<32x32xf32> to vector<32x1xf32>
    %cst_72 = arith.constant 0.000000e+00 : f32
    %502 = vector.broadcast %cst_72 : f32 to vector<32x1xf32>
    %503 = arith.cmpf one, %501, %502 : vector<32x1xf32>
    %504 = vector.extract_strided_slice %409 {offsets = [10, 0], sizes = [1, 256], strides = [1, 1]} : vector<32x256xf32> to vector<1x256xf32>
    %505 = vector.broadcast %504 : vector<1x256xf32> to vector<32x256xf32>
    %506 = arith.maximumf %500, %505 : vector<32x256xf32>
    %507 = vector.shape_cast %503 : vector<32x1xi1> to vector<32x1xi1>
    %508 = vector.broadcast %507 : vector<32x1xi1> to vector<32x256xi1>
    %509 = arith.select %508, %506, %500 : vector<32x256xi1>, vector<32x256xf32>
    %510 = vector.extract_strided_slice %0 {offsets = [0, 11], sizes = [32, 1], strides = [1, 1]} : vector<32x32xf32> to vector<32x1xf32>
    %cst_73 = arith.constant 0.000000e+00 : f32
    %511 = vector.broadcast %cst_73 : f32 to vector<32x1xf32>
    %512 = arith.cmpf one, %510, %511 : vector<32x1xf32>
    %513 = vector.extract_strided_slice %409 {offsets = [11, 0], sizes = [1, 256], strides = [1, 1]} : vector<32x256xf32> to vector<1x256xf32>
    %514 = vector.broadcast %513 : vector<1x256xf32> to vector<32x256xf32>
    %515 = arith.maximumf %509, %514 : vector<32x256xf32>
    %516 = vector.shape_cast %512 : vector<32x1xi1> to vector<32x1xi1>
    %517 = vector.broadcast %516 : vector<32x1xi1> to vector<32x256xi1>
    %518 = arith.select %517, %515, %509 : vector<32x256xi1>, vector<32x256xf32>
    %519 = vector.extract_strided_slice %0 {offsets = [0, 12], sizes = [32, 1], strides = [1, 1]} : vector<32x32xf32> to vector<32x1xf32>
    %cst_74 = arith.constant 0.000000e+00 : f32
    %520 = vector.broadcast %cst_74 : f32 to vector<32x1xf32>
    %521 = arith.cmpf one, %519, %520 : vector<32x1xf32>
    %522 = vector.extract_strided_slice %409 {offsets = [12, 0], sizes = [1, 256], strides = [1, 1]} : vector<32x256xf32> to vector<1x256xf32>
    %523 = vector.broadcast %522 : vector<1x256xf32> to vector<32x256xf32>
    %524 = arith.maximumf %518, %523 : vector<32x256xf32>
    %525 = vector.shape_cast %521 : vector<32x1xi1> to vector<32x1xi1>
    %526 = vector.broadcast %525 : vector<32x1xi1> to vector<32x256xi1>
    %527 = arith.select %526, %524, %518 : vector<32x256xi1>, vector<32x256xf32>
    %528 = vector.extract_strided_slice %0 {offsets = [0, 13], sizes = [32, 1], strides = [1, 1]} : vector<32x32xf32> to vector<32x1xf32>
    %cst_75 = arith.constant 0.000000e+00 : f32
    %529 = vector.broadcast %cst_75 : f32 to vector<32x1xf32>
    %530 = arith.cmpf one, %528, %529 : vector<32x1xf32>
    %531 = vector.extract_strided_slice %409 {offsets = [13, 0], sizes = [1, 256], strides = [1, 1]} : vector<32x256xf32> to vector<1x256xf32>
    %532 = vector.broadcast %531 : vector<1x256xf32> to vector<32x256xf32>
    %533 = arith.maximumf %527, %532 : vector<32x256xf32>
    %534 = vector.shape_cast %530 : vector<32x1xi1> to vector<32x1xi1>
    %535 = vector.broadcast %534 : vector<32x1xi1> to vector<32x256xi1>
    %536 = arith.select %535, %533, %527 : vector<32x256xi1>, vector<32x256xf32>
    %537 = vector.extract_strided_slice %0 {offsets = [0, 14], sizes = [32, 1], strides = [1, 1]} : vector<32x32xf32> to vector<32x1xf32>
    %cst_76 = arith.constant 0.000000e+00 : f32
    %538 = vector.broadcast %cst_76 : f32 to vector<32x1xf32>
    %539 = arith.cmpf one, %537, %538 : vector<32x1xf32>
    %540 = vector.extract_strided_slice %409 {offsets = [14, 0], sizes = [1, 256], strides = [1, 1]} : vector<32x256xf32> to vector<1x256xf32>
    %541 = vector.broadcast %540 : vector<1x256xf32> to vector<32x256xf32>
    %542 = arith.maximumf %536, %541 : vector<32x256xf32>
    %543 = vector.shape_cast %539 : vector<32x1xi1> to vector<32x1xi1>
    %544 = vector.broadcast %543 : vector<32x1xi1> to vector<32x256xi1>
    %545 = arith.select %544, %542, %536 : vector<32x256xi1>, vector<32x256xf32>
    %546 = vector.extract_strided_slice %0 {offsets = [0, 15], sizes = [32, 1], strides = [1, 1]} : vector<32x32xf32> to vector<32x1xf32>
    %cst_77 = arith.constant 0.000000e+00 : f32
    %547 = vector.broadcast %cst_77 : f32 to vector<32x1xf32>
    %548 = arith.cmpf one, %546, %547 : vector<32x1xf32>
    %549 = vector.extract_strided_slice %409 {offsets = [15, 0], sizes = [1, 256], strides = [1, 1]} : vector<32x256xf32> to vector<1x256xf32>
    %550 = vector.broadcast %549 : vector<1x256xf32> to vector<32x256xf32>
    %551 = arith.maximumf %545, %550 : vector<32x256xf32>
    %552 = vector.shape_cast %548 : vector<32x1xi1> to vector<32x1xi1>
    %553 = vector.broadcast %552 : vector<32x1xi1> to vector<32x256xi1>
    %554 = arith.select %553, %551, %545 : vector<32x256xi1>, vector<32x256xf32>
    %555 = vector.extract_strided_slice %0 {offsets = [0, 16], sizes = [32, 1], strides = [1, 1]} : vector<32x32xf32> to vector<32x1xf32>
    %cst_78 = arith.constant 0.000000e+00 : f32
    %556 = vector.broadcast %cst_78 : f32 to vector<32x1xf32>
    %557 = arith.cmpf one, %555, %556 : vector<32x1xf32>
    %558 = vector.extract_strided_slice %409 {offsets = [16, 0], sizes = [1, 256], strides = [1, 1]} : vector<32x256xf32> to vector<1x256xf32>
    %559 = vector.broadcast %558 : vector<1x256xf32> to vector<32x256xf32>
    %560 = arith.maximumf %554, %559 : vector<32x256xf32>
    %561 = vector.shape_cast %557 : vector<32x1xi1> to vector<32x1xi1>
    %562 = vector.broadcast %561 : vector<32x1xi1> to vector<32x256xi1>
    %563 = arith.select %562, %560, %554 : vector<32x256xi1>, vector<32x256xf32>
    %564 = vector.extract_strided_slice %0 {offsets = [0, 17], sizes = [32, 1], strides = [1, 1]} : vector<32x32xf32> to vector<32x1xf32>
    %cst_79 = arith.constant 0.000000e+00 : f32
    %565 = vector.broadcast %cst_79 : f32 to vector<32x1xf32>
    %566 = arith.cmpf one, %564, %565 : vector<32x1xf32>
    %567 = vector.extract_strided_slice %409 {offsets = [17, 0], sizes = [1, 256], strides = [1, 1]} : vector<32x256xf32> to vector<1x256xf32>
    %568 = vector.broadcast %567 : vector<1x256xf32> to vector<32x256xf32>
    %569 = arith.maximumf %563, %568 : vector<32x256xf32>
    %570 = vector.shape_cast %566 : vector<32x1xi1> to vector<32x1xi1>
    %571 = vector.broadcast %570 : vector<32x1xi1> to vector<32x256xi1>
    %572 = arith.select %571, %569, %563 : vector<32x256xi1>, vector<32x256xf32>
    %573 = vector.extract_strided_slice %0 {offsets = [0, 18], sizes = [32, 1], strides = [1, 1]} : vector<32x32xf32> to vector<32x1xf32>
    %cst_80 = arith.constant 0.000000e+00 : f32
    %574 = vector.broadcast %cst_80 : f32 to vector<32x1xf32>
    %575 = arith.cmpf one, %573, %574 : vector<32x1xf32>
    %576 = vector.extract_strided_slice %409 {offsets = [18, 0], sizes = [1, 256], strides = [1, 1]} : vector<32x256xf32> to vector<1x256xf32>
    %577 = vector.broadcast %576 : vector<1x256xf32> to vector<32x256xf32>
    %578 = arith.maximumf %572, %577 : vector<32x256xf32>
    %579 = vector.shape_cast %575 : vector<32x1xi1> to vector<32x1xi1>
    %580 = vector.broadcast %579 : vector<32x1xi1> to vector<32x256xi1>
    %581 = arith.select %580, %578, %572 : vector<32x256xi1>, vector<32x256xf32>
    %582 = vector.extract_strided_slice %0 {offsets = [0, 19], sizes = [32, 1], strides = [1, 1]} : vector<32x32xf32> to vector<32x1xf32>
    %cst_81 = arith.constant 0.000000e+00 : f32
    %583 = vector.broadcast %cst_81 : f32 to vector<32x1xf32>
    %584 = arith.cmpf one, %582, %583 : vector<32x1xf32>
    %585 = vector.extract_strided_slice %409 {offsets = [19, 0], sizes = [1, 256], strides = [1, 1]} : vector<32x256xf32> to vector<1x256xf32>
    %586 = vector.broadcast %585 : vector<1x256xf32> to vector<32x256xf32>
    %587 = arith.maximumf %581, %586 : vector<32x256xf32>
    %588 = vector.shape_cast %584 : vector<32x1xi1> to vector<32x1xi1>
    %589 = vector.broadcast %588 : vector<32x1xi1> to vector<32x256xi1>
    %590 = arith.select %589, %587, %581 : vector<32x256xi1>, vector<32x256xf32>
    %591 = vector.extract_strided_slice %0 {offsets = [0, 20], sizes = [32, 1], strides = [1, 1]} : vector<32x32xf32> to vector<32x1xf32>
    %cst_82 = arith.constant 0.000000e+00 : f32
    %592 = vector.broadcast %cst_82 : f32 to vector<32x1xf32>
    %593 = arith.cmpf one, %591, %592 : vector<32x1xf32>
    %594 = vector.extract_strided_slice %409 {offsets = [20, 0], sizes = [1, 256], strides = [1, 1]} : vector<32x256xf32> to vector<1x256xf32>
    %595 = vector.broadcast %594 : vector<1x256xf32> to vector<32x256xf32>
    %596 = arith.maximumf %590, %595 : vector<32x256xf32>
    %597 = vector.shape_cast %593 : vector<32x1xi1> to vector<32x1xi1>
    %598 = vector.broadcast %597 : vector<32x1xi1> to vector<32x256xi1>
    %599 = arith.select %598, %596, %590 : vector<32x256xi1>, vector<32x256xf32>
    %600 = vector.extract_strided_slice %0 {offsets = [0, 21], sizes = [32, 1], strides = [1, 1]} : vector<32x32xf32> to vector<32x1xf32>
    %cst_83 = arith.constant 0.000000e+00 : f32
    %601 = vector.broadcast %cst_83 : f32 to vector<32x1xf32>
    %602 = arith.cmpf one, %600, %601 : vector<32x1xf32>
    %603 = vector.extract_strided_slice %409 {offsets = [21, 0], sizes = [1, 256], strides = [1, 1]} : vector<32x256xf32> to vector<1x256xf32>
    %604 = vector.broadcast %603 : vector<1x256xf32> to vector<32x256xf32>
    %605 = arith.maximumf %599, %604 : vector<32x256xf32>
    %606 = vector.shape_cast %602 : vector<32x1xi1> to vector<32x1xi1>
    %607 = vector.broadcast %606 : vector<32x1xi1> to vector<32x256xi1>
    %608 = arith.select %607, %605, %599 : vector<32x256xi1>, vector<32x256xf32>
    %609 = vector.extract_strided_slice %0 {offsets = [0, 22], sizes = [32, 1], strides = [1, 1]} : vector<32x32xf32> to vector<32x1xf32>
    %cst_84 = arith.constant 0.000000e+00 : f32
    %610 = vector.broadcast %cst_84 : f32 to vector<32x1xf32>
    %611 = arith.cmpf one, %609, %610 : vector<32x1xf32>
    %612 = vector.extract_strided_slice %409 {offsets = [22, 0], sizes = [1, 256], strides = [1, 1]} : vector<32x256xf32> to vector<1x256xf32>
    %613 = vector.broadcast %612 : vector<1x256xf32> to vector<32x256xf32>
    %614 = arith.maximumf %608, %613 : vector<32x256xf32>
    %615 = vector.shape_cast %611 : vector<32x1xi1> to vector<32x1xi1>
    %616 = vector.broadcast %615 : vector<32x1xi1> to vector<32x256xi1>
    %617 = arith.select %616, %614, %608 : vector<32x256xi1>, vector<32x256xf32>
    %618 = vector.extract_strided_slice %0 {offsets = [0, 23], sizes = [32, 1], strides = [1, 1]} : vector<32x32xf32> to vector<32x1xf32>
    %cst_85 = arith.constant 0.000000e+00 : f32
    %619 = vector.broadcast %cst_85 : f32 to vector<32x1xf32>
    %620 = arith.cmpf one, %618, %619 : vector<32x1xf32>
    %621 = vector.extract_strided_slice %409 {offsets = [23, 0], sizes = [1, 256], strides = [1, 1]} : vector<32x256xf32> to vector<1x256xf32>
    %622 = vector.broadcast %621 : vector<1x256xf32> to vector<32x256xf32>
    %623 = arith.maximumf %617, %622 : vector<32x256xf32>
    %624 = vector.shape_cast %620 : vector<32x1xi1> to vector<32x1xi1>
    %625 = vector.broadcast %624 : vector<32x1xi1> to vector<32x256xi1>
    %626 = arith.select %625, %623, %617 : vector<32x256xi1>, vector<32x256xf32>
    %627 = vector.extract_strided_slice %0 {offsets = [0, 24], sizes = [32, 1], strides = [1, 1]} : vector<32x32xf32> to vector<32x1xf32>
    %cst_86 = arith.constant 0.000000e+00 : f32
    %628 = vector.broadcast %cst_86 : f32 to vector<32x1xf32>
    %629 = arith.cmpf one, %627, %628 : vector<32x1xf32>
    %630 = vector.extract_strided_slice %409 {offsets = [24, 0], sizes = [1, 256], strides = [1, 1]} : vector<32x256xf32> to vector<1x256xf32>
    %631 = vector.broadcast %630 : vector<1x256xf32> to vector<32x256xf32>
    %632 = arith.maximumf %626, %631 : vector<32x256xf32>
    %633 = vector.shape_cast %629 : vector<32x1xi1> to vector<32x1xi1>
    %634 = vector.broadcast %633 : vector<32x1xi1> to vector<32x256xi1>
    %635 = arith.select %634, %632, %626 : vector<32x256xi1>, vector<32x256xf32>
    %636 = vector.extract_strided_slice %0 {offsets = [0, 25], sizes = [32, 1], strides = [1, 1]} : vector<32x32xf32> to vector<32x1xf32>
    %cst_87 = arith.constant 0.000000e+00 : f32
    %637 = vector.broadcast %cst_87 : f32 to vector<32x1xf32>
    %638 = arith.cmpf one, %636, %637 : vector<32x1xf32>
    %639 = vector.extract_strided_slice %409 {offsets = [25, 0], sizes = [1, 256], strides = [1, 1]} : vector<32x256xf32> to vector<1x256xf32>
    %640 = vector.broadcast %639 : vector<1x256xf32> to vector<32x256xf32>
    %641 = arith.maximumf %635, %640 : vector<32x256xf32>
    %642 = vector.shape_cast %638 : vector<32x1xi1> to vector<32x1xi1>
    %643 = vector.broadcast %642 : vector<32x1xi1> to vector<32x256xi1>
    %644 = arith.select %643, %641, %635 : vector<32x256xi1>, vector<32x256xf32>
    %645 = vector.extract_strided_slice %0 {offsets = [0, 26], sizes = [32, 1], strides = [1, 1]} : vector<32x32xf32> to vector<32x1xf32>
    %cst_88 = arith.constant 0.000000e+00 : f32
    %646 = vector.broadcast %cst_88 : f32 to vector<32x1xf32>
    %647 = arith.cmpf one, %645, %646 : vector<32x1xf32>
    %648 = vector.extract_strided_slice %409 {offsets = [26, 0], sizes = [1, 256], strides = [1, 1]} : vector<32x256xf32> to vector<1x256xf32>
    %649 = vector.broadcast %648 : vector<1x256xf32> to vector<32x256xf32>
    %650 = arith.maximumf %644, %649 : vector<32x256xf32>
    %651 = vector.shape_cast %647 : vector<32x1xi1> to vector<32x1xi1>
    %652 = vector.broadcast %651 : vector<32x1xi1> to vector<32x256xi1>
    %653 = arith.select %652, %650, %644 : vector<32x256xi1>, vector<32x256xf32>
    %654 = vector.extract_strided_slice %0 {offsets = [0, 27], sizes = [32, 1], strides = [1, 1]} : vector<32x32xf32> to vector<32x1xf32>
    %cst_89 = arith.constant 0.000000e+00 : f32
    %655 = vector.broadcast %cst_89 : f32 to vector<32x1xf32>
    %656 = arith.cmpf one, %654, %655 : vector<32x1xf32>
    %657 = vector.extract_strided_slice %409 {offsets = [27, 0], sizes = [1, 256], strides = [1, 1]} : vector<32x256xf32> to vector<1x256xf32>
    %658 = vector.broadcast %657 : vector<1x256xf32> to vector<32x256xf32>
    %659 = arith.maximumf %653, %658 : vector<32x256xf32>
    %660 = vector.shape_cast %656 : vector<32x1xi1> to vector<32x1xi1>
    %661 = vector.broadcast %660 : vector<32x1xi1> to vector<32x256xi1>
    %662 = arith.select %661, %659, %653 : vector<32x256xi1>, vector<32x256xf32>
    %663 = vector.extract_strided_slice %0 {offsets = [0, 28], sizes = [32, 1], strides = [1, 1]} : vector<32x32xf32> to vector<32x1xf32>
    %cst_90 = arith.constant 0.000000e+00 : f32
    %664 = vector.broadcast %cst_90 : f32 to vector<32x1xf32>
    %665 = arith.cmpf one, %663, %664 : vector<32x1xf32>
    %666 = vector.extract_strided_slice %409 {offsets = [28, 0], sizes = [1, 256], strides = [1, 1]} : vector<32x256xf32> to vector<1x256xf32>
    %667 = vector.broadcast %666 : vector<1x256xf32> to vector<32x256xf32>
    %668 = arith.maximumf %662, %667 : vector<32x256xf32>
    %669 = vector.shape_cast %665 : vector<32x1xi1> to vector<32x1xi1>
    %670 = vector.broadcast %669 : vector<32x1xi1> to vector<32x256xi1>
    %671 = arith.select %670, %668, %662 : vector<32x256xi1>, vector<32x256xf32>
    %672 = vector.extract_strided_slice %0 {offsets = [0, 29], sizes = [32, 1], strides = [1, 1]} : vector<32x32xf32> to vector<32x1xf32>
    %cst_91 = arith.constant 0.000000e+00 : f32
    %673 = vector.broadcast %cst_91 : f32 to vector<32x1xf32>
    %674 = arith.cmpf one, %672, %673 : vector<32x1xf32>
    %675 = vector.extract_strided_slice %409 {offsets = [29, 0], sizes = [1, 256], strides = [1, 1]} : vector<32x256xf32> to vector<1x256xf32>
    %676 = vector.broadcast %675 : vector<1x256xf32> to vector<32x256xf32>
    %677 = arith.maximumf %671, %676 : vector<32x256xf32>
    %678 = vector.shape_cast %674 : vector<32x1xi1> to vector<32x1xi1>
    %679 = vector.broadcast %678 : vector<32x1xi1> to vector<32x256xi1>
    %680 = arith.select %679, %677, %671 : vector<32x256xi1>, vector<32x256xf32>
    %681 = vector.extract_strided_slice %0 {offsets = [0, 30], sizes = [32, 1], strides = [1, 1]} : vector<32x32xf32> to vector<32x1xf32>
    %cst_92 = arith.constant 0.000000e+00 : f32
    %682 = vector.broadcast %cst_92 : f32 to vector<32x1xf32>
    %683 = arith.cmpf one, %681, %682 : vector<32x1xf32>
    %684 = vector.extract_strided_slice %409 {offsets = [30, 0], sizes = [1, 256], strides = [1, 1]} : vector<32x256xf32> to vector<1x256xf32>
    %685 = vector.broadcast %684 : vector<1x256xf32> to vector<32x256xf32>
    %686 = arith.maximumf %680, %685 : vector<32x256xf32>
    %687 = vector.shape_cast %683 : vector<32x1xi1> to vector<32x1xi1>
    %688 = vector.broadcast %687 : vector<32x1xi1> to vector<32x256xi1>
    %689 = arith.select %688, %686, %680 : vector<32x256xi1>, vector<32x256xf32>
    %690 = vector.extract_strided_slice %0 {offsets = [0, 31], sizes = [32, 1], strides = [1, 1]} : vector<32x32xf32> to vector<32x1xf32>
    %cst_93 = arith.constant 0.000000e+00 : f32
    %691 = vector.broadcast %cst_93 : f32 to vector<32x1xf32>
    %692 = arith.cmpf one, %690, %691 : vector<32x1xf32>
    %693 = vector.extract_strided_slice %409 {offsets = [31, 0], sizes = [1, 256], strides = [1, 1]} : vector<32x256xf32> to vector<1x256xf32>
    %694 = vector.broadcast %693 : vector<1x256xf32> to vector<32x256xf32>
    %695 = arith.maximumf %689, %694 : vector<32x256xf32>
    %696 = vector.shape_cast %692 : vector<32x1xi1> to vector<32x1xi1>
    %697 = vector.broadcast %696 : vector<32x1xi1> to vector<32x256xi1>
    %698 = arith.select %697, %695, %689 : vector<32x256xi1>, vector<32x256xf32>
    %cst_94 = arith.constant 0.000000e+00 : f32
    %699 = vector.shape_cast %45 : vector<32x1xi1> to vector<32x1xi1>
    %700 = vector.broadcast %699 : vector<32x1xi1> to vector<32x256xi1>
    %701 = vector.broadcast %cst_94 : f32 to vector<32x256xf32>
    %702 = arith.select %700, %698, %701 : vector<32x256xi1>, vector<32x256xf32>
    %703 = vector.extract_strided_slice %702 {offsets = [0, 0], sizes = [32, 128], strides = [1, 1]} : vector<32x256xf32> to vector<32x128xf32>
    %704 = vector.extract_strided_slice %702 {offsets = [0, 128], sizes = [32, 128], strides = [1, 1]} : vector<32x256xf32> to vector<32x128xf32>
    %cst_95 = arith.constant 0.000000e+00 : f32
    %705 = vector.broadcast %cst_95 : f32 to vector<32x128xf32>
    %706 = arith.subf %705, %704 : vector<32x128xf32>
    %707 = tpu.concatenate %396, %703, %706, %406 in 1 : vector<32x128xf32>, vector<32x128xf32>, vector<32x128xf32>, vector<32x128xf32> -> vector<32x512xf32>
    %708 = vector.broadcast %54 : vector<32x1xf32> to vector<32x512xf32>
    %709 = arith.mulf %707, %708 : vector<32x512xf32>
    %710 = vector.broadcast %56 : vector<32x1xf32> to vector<32x512xf32>
    %711 = arith.mulf %707, %710 : vector<32x512xf32>
    %712 = tpu.concatenate %707, %709, %711 in 1 : vector<32x512xf32>, vector<32x512xf32>, vector<32x512xf32> -> vector<32x1536xf32>
    %713 = arith.truncf %712 : vector<32x1536xf32> to vector<32x1536xbf16>
    %c0_96 = arith.constant 0 : index
    %c0_97 = arith.constant 0 : index
    %714 = vector.load %arg5[%c0_96, %c0_97] : memref<1536x128xbf16, #tpu.memory_space<vmem>>, vector<1536x128xbf16>
    %cst_98 = arith.constant dense<0.000000e+00> : vector<32x128xf32>
    %715 = tpu.matmul %713, %714, %cst_98 {dimension_numbers = #tpu.dot_dimension_numbers<[1], [0], [0], [1], [0, 0, 1, 1], [], []>} : vector<32x1536xbf16>, vector<1536x128xbf16>, vector<32x128xf32> -> vector<32x128xf32>
    %c0_99 = arith.constant 0 : index
    %c0_100 = arith.constant 0 : index
    %716 = vector.load %arg6[%c0_99, %c0_100] : memref<1x128xf32, #tpu.memory_space<vmem>>, vector<1x128xf32>
    %717 = vector.broadcast %716 : vector<1x128xf32> to vector<32x128xf32>
    %718 = arith.addf %715, %717 : vector<32x128xf32>
    %cst_101 = arith.constant 0.000000e+00 : f32
    %719 = vector.broadcast %cst_101 : f32 to vector<32x128xf32>
    %720 = arith.maximumf %718, %719 : vector<32x128xf32>
    %721 = arith.addf %389, %720 : vector<32x128xf32>
    %cst_102 = arith.constant dense<0.000000e+00> : vector<128xf32>
    %722 = vector.multi_reduction <add>, %721, %cst_102 [0] : vector<32x128xf32> to vector<128xf32>
    %723 = vector.shape_cast %722 : vector<128xf32> to vector<1x128xf32>
    %cst_103 = arith.constant 3.200000e+01 : f32
    %724 = vector.broadcast %cst_103 : f32 to vector<1x128xf32>
    %725 = arith.divf %723, %724 : vector<1x128xf32>
    %c0_104 = arith.constant 0 : index
    %c0_105 = arith.constant 0 : index
    %726 = vector.load %arg7[%c0_104, %c0_105] : memref<128x64xf32, #tpu.memory_space<vmem>>, vector<128x64xf32>
    %cst_106 = arith.constant dense<0.000000e+00> : vector<1x64xf32>
    %727 = tpu.matmul %725, %726, %cst_106 {dimension_numbers = #tpu.dot_dimension_numbers<[1], [0], [0], [1], [0, 0, 1, 1], [], []>} : vector<1x128xf32>, vector<128x64xf32>, vector<1x64xf32> -> vector<1x64xf32>
    %c0_107 = arith.constant 0 : index
    %c0_108 = arith.constant 0 : index
    %728 = vector.load %arg8[%c0_107, %c0_108] : memref<1x64xf32, #tpu.memory_space<vmem>>, vector<1x64xf32>
    %729 = arith.addf %727, %728 : vector<1x64xf32>
    %cst_109 = arith.constant 0.000000e+00 : f32
    %730 = vector.broadcast %cst_109 : f32 to vector<1x64xf32>
    %731 = arith.maximumf %729, %730 : vector<1x64xf32>
    %c0_110 = arith.constant 0 : index
    %c0_111 = arith.constant 0 : index
    %732 = vector.load %arg9[%c0_110, %c0_111] : memref<64x32xf32, #tpu.memory_space<vmem>>, vector<64x32xf32>
    %cst_112 = arith.constant dense<0.000000e+00> : vector<1x32xf32>
    %733 = tpu.matmul %731, %732, %cst_112 {dimension_numbers = #tpu.dot_dimension_numbers<[1], [0], [0], [1], [0, 0, 1, 1], [], []>} : vector<1x64xf32>, vector<64x32xf32>, vector<1x32xf32> -> vector<1x32xf32>
    %c0_113 = arith.constant 0 : index
    %c0_114 = arith.constant 0 : index
    %734 = vector.load %arg10[%c0_113, %c0_114] : memref<1x32xf32, #tpu.memory_space<vmem>>, vector<1x32xf32>
    %735 = arith.addf %733, %734 : vector<1x32xf32>
    %cst_115 = arith.constant 0.000000e+00 : f32
    %736 = vector.broadcast %cst_115 : f32 to vector<1x32xf32>
    %737 = arith.maximumf %735, %736 : vector<1x32xf32>
    %c0_116 = arith.constant 0 : index
    %c0_117 = arith.constant 0 : index
    %738 = vector.load %arg11[%c0_116, %c0_117] : memref<32x1xf32, #tpu.memory_space<vmem>>, vector<32x1xf32>
    %cst_118 = arith.constant dense<0.000000e+00> : vector<1x1xf32>
    %739 = tpu.matmul %737, %738, %cst_118 {dimension_numbers = #tpu.dot_dimension_numbers<[1], [0], [0], [1], [0, 0, 1, 1], [], []>} : vector<1x32xf32>, vector<32x1xf32>, vector<1x1xf32> -> vector<1x1xf32>
    %c0_119 = arith.constant 0 : index
    %c0_120 = arith.constant 0 : index
    %740 = vector.load %arg12[%c0_119, %c0_120] : memref<1x1xf32, #tpu.memory_space<vmem>>, vector<1x1xf32>
    %741 = arith.addf %739, %740 : vector<1x1xf32>
    %c0_121 = arith.constant 0 : index
    %c0_122 = arith.constant 0 : index
    %742 = vector.load %arg13[%c0_121, %c0_122] : memref<1x1xf32, #tpu.memory_space<vmem>>, vector<1x1xf32>
    tpu.vector_store %arg13[%c0_121, %c0_122], %741 {strides = array<i32>} : memref<1x1xf32, #tpu.memory_space<vmem>>, vector<1x1xf32>,
    return
  }
}

</mosaic_0001>

<llo_original>
// kernel: tpu_custom_call.1
$region0: #{tpu_custom_call.1}
  #allocation0 [shape = 'u32[]', space=smem, size = 0x4, offset = 0x4, fixed_abs, tag = 'smem constant byte address 0x4 - core index']
  #allocation1 [shape = 'u32[144,128]{1,0:T(1,128)}', space=vmem, size = 0x12000, scoped, tag = 'internal scratch']
  #allocation2 [shape = 'f32[1,1]{1,0:T(1,128)S(1)}', space=vmem, size = 0x200, scoped, tag = 'scoped memory for tpu_custom_call.1']
  %s0 = inlined_call_operand.vmem [shape: f32[32,32], index: 0, kind: input, shape index: {}]
  %s1 = inlined_call_operand.vmem [shape: s32[32,9], index: 1, kind: input, shape index: {}]
  %s2 = inlined_call_operand.vmem [shape: f32[256,128], index: 2, kind: input, shape index: {}]
  %s3 = inlined_call_operand.hbm [shape: bf16[1536,128], index: 3, kind: input, shape index: {}]
  %s4 = inlined_call_operand.hbm [shape: f32[1,128], index: 4, kind: input, shape index: {}]
  %s5 = inlined_call_operand.hbm [shape: bf16[1536,128], index: 5, kind: input, shape index: {}]
  %s6 = inlined_call_operand.vmem [shape: f32[1,128], index: 6, kind: input, shape index: {}]
  %s7 = inlined_call_operand.vmem [shape: f32[128,64], index: 7, kind: input, shape index: {}]
  %s8 = inlined_call_operand.vmem [shape: f32[1,64], index: 8, kind: input, shape index: {}]
  %s9 = inlined_call_operand.vmem [shape: f32[64,32], index: 9, kind: input, shape index: {}]
  %s10 = inlined_call_operand.vmem [shape: f32[1,32], index: 10, kind: input, shape index: {}]
  %s11 = inlined_call_operand.vmem [shape: f32[32,1], index: 11, kind: input, shape index: {}]
  %s12 = inlined_call_operand.<no memory space> [shape: f32[1,1], index: 12, kind: input, shape index: {}]
  %s13 = inlined_call_operand.hbm [shape: f32[1,1], index: 13, kind: output, shape index: {}]
  %s14 = sld [smem:[#allocation0]]
  $region74: #{tpu_custom_call.1} parent=0
    _
  %s16 = ssub.s32 1, %s14
  %s17 = scalar_select 0, %s16, %s14
  %v18 = vstv %s12
  %19 = vst [vmem:[#allocation2] sm:$0x1] %v18
  $region1: #{tpu_custom_call.1} parent=0
    #allocation3 [shape = 'u8[393216]{0}', space=vmem, size = 0x60000, scoped, tag = 'input window, operand 3, single buffered']
    #allocation4 [shape = 's32[1]{0}', space=sflag, size = 0x4, scoped, tag = 'scoped memory for tpu_custom_call.1']
    #allocation5 [shape = 's32[1]{0}', space=sflag, size = 0x4, scoped, tag = 'scoped memory for tpu_custom_call.1']
    #allocation6 [shape = 'u8[512]{0}', space=vmem, size = 0x400, scoped, tag = 'input window, operand 4, single buffered']
    #allocation7 [shape = 's32[1]{0}', space=sflag, size = 0x4, scoped, tag = 'scoped memory for tpu_custom_call.1']
    #allocation8 [shape = 'u8[393216]{0}', space=vmem, size = 0x60000, scoped, tag = 'input window, operand 5, single buffered']
    #allocation9 [shape = 'u8[512]{0}', space=vmem, size = 0x400, scoped, tag = 'output window, operand 0, single buffered']
    %20 = vsyncpa [#allocation4], 0
    %21 = vsyncpa [#allocation7], 0
    %22 = vsyncpa [#allocation5], 0
    // Predicated region
    $region2: #{tpu_custom_call.1} parent=1 // pred_check
      _
    $region3: #{tpu_custom_call.1} parent=1 // pred_check_branch
      %24 = sbr.rel (0) target = $region5
    $region4: #{tpu_custom_call.1} parent=1 // pred_region
      _
    $region5: #{tpu_custom_call.1} parent=1 // pred_fallthru
      _
    // Predicated region
    $region6: #{tpu_custom_call.1} parent=1 // pred_check
      _
    $region7: #{tpu_custom_call.1} parent=1 // pred_check_branch
      %26 = sbr.rel (0) target = $region9
    $region8: #{tpu_custom_call.1} parent=1 // pred_region
      _
    $region9: #{tpu_custom_call.1} parent=1 // pred_fallthru
      _
    // Predicated region
    $region10: #{tpu_custom_call.1} parent=1 // pred_check
      _
    $region11: #{tpu_custom_call.1} parent=1 // pred_check_branch
      %28 = sbr.rel (0) target = $region13
    $region12: #{tpu_custom_call.1} parent=1 // pred_region
      _
    $region13: #{tpu_custom_call.1} parent=1 // pred_fallthru
      _
    // Predicated region
    $region14: #{tpu_custom_call.1} parent=1 // pred_check
      _
    $region15: #{tpu_custom_call.1} parent=1 // pred_check_branch
      %30 = sbr.rel (0) target = $region17
    $region16: #{tpu_custom_call.1} parent=1 // pred_region
      %s32 = ssub.s32 12288, 12288
      %33 = vsyncadd [#allocation4], %s32
      %s34 = sshll.u32 [#allocation3], 4
      %s35 = int_to_ptr.vmem [resolvable:$true] %s34
      %40 = dma.hbm_to_vmem [thread:$0]  %s3, 12288, %s35, [#allocation4], 64, 64, 4
    $region17: #{tpu_custom_call.1} parent=1 // pred_fallthru
      _
    // Predicated region
    $region18: #{tpu_custom_call.1} parent=1 // pred_check
      _
    $region19: #{tpu_custom_call.1} parent=1 // pred_check_branch
      %42 = sbr.rel (0) target = $region21
    $region20: #{tpu_custom_call.1} parent=1 // pred_region
      %s44 = ssub.s32 16, 16
      %45 = vsyncadd [#allocation7], %s44
      %s47 = sshll.u32 [#allocation6], 4
      %s48 = int_to_ptr.vmem [resolvable:$true] %s47
      %50 = dma.hbm_to_vmem [thread:$0]  %s4, 16, %s48, [#allocation7]
    $region21: #{tpu_custom_call.1} parent=1 // pred_fallthru
      _
    // Predicated region
    $region22: #{tpu_custom_call.1} parent=1 // pred_check
      _
    $region23: #{tpu_custom_call.1} parent=1 // pred_check_branch
      %52 = sbr.rel (0) target = $region25
    $region24: #{tpu_custom_call.1} parent=1 // pred_region
      %s54 = ssub.s32 12288, 12288
      %55 = vsyncadd [#allocation7], %s54
      %s56 = sshll.u32 [#allocation8], 4
      %s57 = int_to_ptr.vmem [resolvable:$true] %s56
      %62 = dma.hbm_to_vmem [thread:$0]  %s5, 12288, %s57, [#allocation7], 64, 64, 4
    $region25: #{tpu_custom_call.1} parent=1 // pred_fallthru
      _
    // Predicated region
    $region26: #{tpu_custom_call.1} parent=1 // pred_check
      _
    $region27: #{tpu_custom_call.1} parent=1 // pred_check_branch
      %64 = sbr.rel (0) target = $region29
    $region28: #{tpu_custom_call.1} parent=1 // pred_region
      _
    $region29: #{tpu_custom_call.1} parent=1 // pred_fallthru
      _
    // Predicated region
    $region30: #{tpu_custom_call.1} parent=1 // pred_check
      _
    $region31: #{tpu_custom_call.1} parent=1 // pred_check_branch
      %66 = sbr.rel (0) target = $region33
    $region32: #{tpu_custom_call.1} parent=1 // pred_region
      _
    $region33: #{tpu_custom_call.1} parent=1 // pred_fallthru
      _
    // Predicated region
    $region34: #{tpu_custom_call.1} parent=1 // pred_check
      _
    $region35: #{tpu_custom_call.1} parent=1 // pred_check_branch
      %68 = sbr.rel (0) target = $region37
    $region36: #{tpu_custom_call.1} parent=1 // pred_region
      _
    $region37: #{tpu_custom_call.1} parent=1 // pred_fallthru
      _
    // Predicated region
    $region38: #{tpu_custom_call.1} parent=1 // pred_check
      _
    $region39: #{tpu_custom_call.1} parent=1 // pred_check_branch
      %70 = sbr.rel (0) target = $region41
    $region40: #{tpu_custom_call.1} parent=1 // pred_region
      _
    $region41: #{tpu_custom_call.1} parent=1 // pred_fallthru
      _
    // Predicated region
    $region42: #{tpu_custom_call.1} parent=1 // pred_check
      _
    $region43: #{tpu_custom_call.1} parent=1 // pred_check_branch
      %72 = sbr.rel (0) target = $region45
    $region44: #{tpu_custom_call.1} parent=1 // pred_region
      _
    $region45: #{tpu_custom_call.1} parent=1 // pred_fallthru
      _
    // Predicated region
    $region46: #{tpu_custom_call.1} parent=1 // pred_check
      _
    $region47: #{tpu_custom_call.1} parent=1 // pred_check_branch
      %74 = sbr.rel (0) target = $region49
    $region48: #{tpu_custom_call.1} parent=1 // pred_region
      _
    $region49: #{tpu_custom_call.1} parent=1 // pred_fallthru
      _
    // Predicated region
    $region50: #{tpu_custom_call.1} parent=1 // pred_check
      _
    $region51: #{tpu_custom_call.1} parent=1 // pred_check_branch
      %76 = sbr.rel (0) target = $region53
    $region52: #{tpu_custom_call.1} parent=1 // pred_region
      _
    $region53: #{tpu_custom_call.1} parent=1 // pred_fallthru
      _
    // Predicated region
    $region54: #{tpu_custom_call.1} parent=1 // pred_check
      _
    $region55: #{tpu_custom_call.1} parent=1 // pred_check_branch
      %78 = sbr.rel (0) target = $region57
    $region56: #{tpu_custom_call.1} parent=1 // pred_region
      %79 = dma.done [#allocation4], 12288
    $region57: #{tpu_custom_call.1} parent=1 // pred_fallthru
      _
    // Predicated region
    $region58: #{tpu_custom_call.1} parent=1 // pred_check
      _
    $region59: #{tpu_custom_call.1} parent=1 // pred_check_branch
      %81 = sbr.rel (0) target = $region61
    $region60: #{tpu_custom_call.1} parent=1 // pred_region
      %82 = dma.done [#allocation7], 16
    $region61: #{tpu_custom_call.1} parent=1 // pred_fallthru
      _
    // Predicated region
    $region62: #{tpu_custom_call.1} parent=1 // pred_check
      _
    $region63: #{tpu_custom_call.1} parent=1 // pred_check_branch
      %84 = sbr.rel (0) target = $region65
    $region64: #{tpu_custom_call.1} parent=1 // pred_region
      %85 = dma.done [#allocation7], 12288
    $region65: #{tpu_custom_call.1} parent=1 // pred_fallthru
      _
    %v87 = vld [vmem:[%s0] sm:$0xff]
    %v88 = vld [vmem:[%s0 + $0x8] sm:$0xff]
    %v89 = vld [vmem:[%s0 + $0x10] sm:$0xff]
    %v90 = vld [vmem:[%s0 + $0x18] sm:$0xff]
    %v91 = vld [vmem:[%s1] sm:$0xff]
    %v92 = vld [vmem:[%s1 + $0x8] sm:$0xff]
    %v93 = vld [vmem:[%s1 + $0x10] sm:$0xff]
    %v94 = vld [vmem:[%s1 + $0x18] sm:$0xff]
    %v95 = vlaneseq
    %v96 = vand.u32 %v95, 127
    %v97 = vadd.s32 %v96, 128
    %98 = vset.pattern.permute.xlu0 0
    %99 = vperm.xlu0 %98, %v91
    %v100 = vpop.permute.xlu0 %99
    %101 = vset.pattern.permute.xlu0 0
    %102 = vperm.xlu0 %101, %v92
    %v103 = vpop.permute.xlu0 %102
    %104 = vset.pattern.permute.xlu0 0
    %105 = vperm.xlu0 %104, %v93
    %v106 = vpop.permute.xlu0 %105
    %107 = vset.pattern.permute.xlu0 0
    %108 = vperm.xlu0 %107, %v94
    %v109 = vpop.permute.xlu0 %108
    %vm110 = vcmp.eq.s32.totalorder %v96, %v100
    %vm111 = vcmp.eq.s32.totalorder %v97, %v100
    %vm112 = vcmp.eq.s32.totalorder %v96, %v103
    %vm113 = vcmp.eq.s32.totalorder %v97, %v103
    %vm114 = vcmp.eq.s32.totalorder %v96, %v106
    %vm115 = vcmp.eq.s32.totalorder %v97, %v106
    %vm116 = vcmp.eq.s32.totalorder %v96, %v109
    %vm117 = vcmp.eq.s32.totalorder %v97, %v109
    %118 = vset.pattern.permute.xlu0 1
    %119 = vperm.xlu0 %118, %v91
    %v120 = vpop.permute.xlu0 %119
    %121 = vset.pattern.permute.xlu0 1
    %122 = vperm.xlu0 %121, %v92
    %v123 = vpop.permute.xlu0 %122
    %124 = vset.pattern.permute.xlu0 1
    %125 = vperm.xlu0 %124, %v93
    %v126 = vpop.permute.xlu0 %125
    %127 = vset.pattern.permute.xlu0 1
    %128 = vperm.xlu0 %127, %v94
    %v129 = vpop.permute.xlu0 %128
    %vm130 = vcmp.eq.s32.totalorder %v96, %v120
    %vm131 = vcmp.eq.s32.totalorder %v97, %v120
    %vm132 = vcmp.eq.s32.totalorder %v96, %v123
    %vm133 = vcmp.eq.s32.totalorder %v97, %v123
    %vm134 = vcmp.eq.s32.totalorder %v96, %v126
    %vm135 = vcmp.eq.s32.totalorder %v97, %v126
    %vm136 = vcmp.eq.s32.totalorder %v96, %v129
    %vm137 = vcmp.eq.s32.totalorder %v97, %v129
    %vm138 = vmor %vm110, %vm130
    %vm139 = vmor %vm111, %vm131
    %vm140 = vmor %vm112, %vm132
    %vm141 = vmor %vm113, %vm133
    %vm142 = vmor %vm114, %vm134
    %vm143 = vmor %vm115, %vm135
    %vm144 = vmor %vm116, %vm136
    %vm145 = vmor %vm117, %vm137
    %146 = vset.pattern.permute.xlu0 2
    %147 = vperm.xlu0 %146, %v91
    %v148 = vpop.permute.xlu0 %147
    %149 = vset.pattern.permute.xlu0 2
    %150 = vperm.xlu0 %149, %v92
    %v151 = vpop.permute.xlu0 %150
    %152 = vset.pattern.permute.xlu0 2
    %153 = vperm.xlu0 %152, %v93
    %v154 = vpop.permute.xlu0 %153
    %155 = vset.pattern.permute.xlu0 2
    %156 = vperm.xlu0 %155, %v94
    %v157 = vpop.permute.xlu0 %156
    %vm158 = vcmp.eq.s32.totalorder %v96, %v148
    %vm159 = vcmp.eq.s32.totalorder %v97, %v148
    %vm160 = vcmp.eq.s32.totalorder %v96, %v151
    %vm161 = vcmp.eq.s32.totalorder %v97, %v151
    %vm162 = vcmp.eq.s32.totalorder %v96, %v154
    %vm163 = vcmp.eq.s32.totalorder %v97, %v154
    %vm164 = vcmp.eq.s32.totalorder %v96, %v157
    %vm165 = vcmp.eq.s32.totalorder %v97, %v157
    %vm166 = vmor %vm138, %vm158
    %vm167 = vmor %vm139, %vm159
    %vm168 = vmor %vm140, %vm160
    %vm169 = vmor %vm141, %vm161
    %vm170 = vmor %vm142, %vm162
    %vm171 = vmor %vm143, %vm163
    %vm172 = vmor %vm144, %vm164
    %vm173 = vmor %vm145, %vm165
    %174 = vset.pattern.permute.xlu0 3
    %175 = vperm.xlu0 %174, %v91
    %v176 = vpop.permute.xlu0 %175
    %177 = vset.pattern.permute.xlu0 3
    %178 = vperm.xlu0 %177, %v92
    %v179 = vpop.permute.xlu0 %178
    %180 = vset.pattern.permute.xlu0 3
    %181 = vperm.xlu0 %180, %v93
    %v182 = vpop.permute.xlu0 %181
    %183 = vset.pattern.permute.xlu0 3
    %184 = vperm.xlu0 %183, %v94
    %v185 = vpop.permute.xlu0 %184
    %vm186 = vcmp.eq.s32.totalorder %v96, %v176
    %vm187 = vcmp.eq.s32.totalorder %v97, %v176
    %vm188 = vcmp.eq.s32.totalorder %v96, %v179
    %vm189 = vcmp.eq.s32.totalorder %v97, %v179
    %vm190 = vcmp.eq.s32.totalorder %v96, %v182
    %vm191 = vcmp.eq.s32.totalorder %v97, %v182
    %vm192 = vcmp.eq.s32.totalorder %v96, %v185
    %vm193 = vcmp.eq.s32.totalorder %v97, %v185
    %vm194 = vmor %vm166, %vm186
    %vm195 = vmor %vm167, %vm187
    %vm196 = vmor %vm168, %vm188
    %vm197 = vmor %vm169, %vm189
    %vm198 = vmor %vm170, %vm190
    %vm199 = vmor %vm171, %vm191
    %vm200 = vmor %vm172, %vm192
    %vm201 = vmor %vm173, %vm193
    %202 = vset.pattern.permute.xlu0 4
    %203 = vperm.xlu0 %202, %v91
    %v204 = vpop.permute.xlu0 %203
    %205 = vset.pattern.permute.xlu0 4
    %206 = vperm.xlu0 %205, %v92
    %v207 = vpop.permute.xlu0 %206
    %208 = vset.pattern.permute.xlu0 4
    %209 = vperm.xlu0 %208, %v93
    %v210 = vpop.permute.xlu0 %209
    %211 = vset.pattern.permute.xlu0 4
    %212 = vperm.xlu0 %211, %v94
    %v213 = vpop.permute.xlu0 %212
    %vm214 = vcmp.eq.s32.totalorder %v96, %v204
    %vm215 = vcmp.eq.s32.totalorder %v97, %v204
    %vm216 = vcmp.eq.s32.totalorder %v96, %v207
    %vm217 = vcmp.eq.s32.totalorder %v97, %v207
    %vm218 = vcmp.eq.s32.totalorder %v96, %v210
    %vm219 = vcmp.eq.s32.totalorder %v97, %v210
    %vm220 = vcmp.eq.s32.totalorder %v96, %v213
    %vm221 = vcmp.eq.s32.totalorder %v97, %v213
    %vm222 = vmor %vm194, %vm214
    %vm223 = vmor %vm195, %vm215
    %vm224 = vmor %vm196, %vm216
    %vm225 = vmor %vm197, %vm217
    %vm226 = vmor %vm198, %vm218
    %vm227 = vmor %vm199, %vm219
    %vm228 = vmor %vm200, %vm220
    %vm229 = vmor %vm201, %vm221
    %230 = vset.pattern.permute.xlu0 5
    %231 = vperm.xlu0 %230, %v91
    %v232 = vpop.permute.xlu0 %231
    %233 = vset.pattern.permute.xlu0 5
    %234 = vperm.xlu0 %233, %v92
    %v235 = vpop.permute.xlu0 %234
    %236 = vset.pattern.permute.xlu0 5
    %237 = vperm.xlu0 %236, %v93
    %v238 = vpop.permute.xlu0 %237
    %239 = vset.pattern.permute.xlu0 5
    %240 = vperm.xlu0 %239, %v94
    %v241 = vpop.permute.xlu0 %240
    %vm242 = vcmp.eq.s32.totalorder %v96, %v232
    %vm243 = vcmp.eq.s32.totalorder %v97, %v232
    %vm244 = vcmp.eq.s32.totalorder %v96, %v235
    %vm245 = vcmp.eq.s32.totalorder %v97, %v235
    %vm246 = vcmp.eq.s32.totalorder %v96, %v238
    %vm247 = vcmp.eq.s32.totalorder %v97, %v238
    %vm248 = vcmp.eq.s32.totalorder %v96, %v241
    %vm249 = vcmp.eq.s32.totalorder %v97, %v241
    %vm250 = vmor %vm222, %vm242
    %vm251 = vmor %vm223, %vm243
    %vm252 = vmor %vm224, %vm244
    %vm253 = vmor %vm225, %vm245
    %vm254 = vmor %vm226, %vm246
    %vm255 = vmor %vm227, %vm247
    %vm256 = vmor %vm228, %vm248
    %vm257 = vmor %vm229, %vm249
    %258 = vset.pattern.permute.xlu0 6
    %259 = vperm.xlu0 %258, %v91
    %v260 = vpop.permute.xlu0 %259
    %261 = vset.pattern.permute.xlu0 6
    %262 = vperm.xlu0 %261, %v92
    %v263 = vpop.permute.xlu0 %262
    %264 = vset.pattern.permute.xlu0 6
    %265 = vperm.xlu0 %264, %v93
    %v266 = vpop.permute.xlu0 %265
    %267 = vset.pattern.permute.xlu0 6
    %268 = vperm.xlu0 %267, %v94
    %v269 = vpop.permute.xlu0 %268
    %vm270 = vcmp.eq.s32.totalorder %v96, %v260
    %vm271 = vcmp.eq.s32.totalorder %v97, %v260
    %vm272 = vcmp.eq.s32.totalorder %v96, %v263
    %vm273 = vcmp.eq.s32.totalorder %v97, %v263
    %vm274 = vcmp.eq.s32.totalorder %v96, %v266
    %vm275 = vcmp.eq.s32.totalorder %v97, %v266
    %vm276 = vcmp.eq.s32.totalorder %v96, %v269
    %vm277 = vcmp.eq.s32.totalorder %v97, %v269
    %vm278 = vmor %vm250, %vm270
    %vm279 = vmor %vm251, %vm271
    %vm280 = vmor %vm252, %vm272
    %vm281 = vmor %vm253, %vm273
    %vm282 = vmor %vm254, %vm274
    %vm283 = vmor %vm255, %vm275
    %vm284 = vmor %vm256, %vm276
    %vm285 = vmor %vm257, %vm277
    %286 = vset.pattern.permute.xlu0 7
    %287 = vperm.xlu0 %286, %v91
    %v288 = vpop.permute.xlu0 %287
    %289 = vset.pattern.permute.xlu0 7
    %290 = vperm.xlu0 %289, %v92
    %v291 = vpop.permute.xlu0 %290
    %292 = vset.pattern.permute.xlu0 7
    %293 = vperm.xlu0 %292, %v93
    %v294 = vpop.permute.xlu0 %293
    %295 = vset.pattern.permute.xlu0 7
    %296 = vperm.xlu0 %295, %v94
    %v297 = vpop.permute.xlu0 %296
    %vm298 = vcmp.eq.s32.totalorder %v96, %v288
    %vm299 = vcmp.eq.s32.totalorder %v97, %v288
    %vm300 = vcmp.eq.s32.totalorder %v96, %v291
    %vm301 = vcmp.eq.s32.totalorder %v97, %v291
    %vm302 = vcmp.eq.s32.totalorder %v96, %v294
    %vm303 = vcmp.eq.s32.totalorder %v97, %v294
    %vm304 = vcmp.eq.s32.totalorder %v96, %v297
    %vm305 = vcmp.eq.s32.totalorder %v97, %v297
    %vm306 = vmor %vm278, %vm298
    %vm307 = vmor %vm279, %vm299
    %vm308 = vmor %vm280, %vm300
    %vm309 = vmor %vm281, %vm301
    %vm310 = vmor %vm282, %vm302
    %vm311 = vmor %vm283, %vm303
    %vm312 = vmor %vm284, %vm304
    %vm313 = vmor %vm285, %vm305
    %314 = vset.pattern.permute.xlu0 8
    %315 = vperm.xlu0 %314, %v91
    %v316 = vpop.permute.xlu0 %315
    %317 = vset.pattern.permute.xlu0 8
    %318 = vperm.xlu0 %317, %v92
    %v319 = vpop.permute.xlu0 %318
    %320 = vset.pattern.permute.xlu0 8
    %321 = vperm.xlu0 %320, %v93
    %v322 = vpop.permute.xlu0 %321
    %323 = vset.pattern.permute.xlu0 8
    %324 = vperm.xlu0 %323, %v94
    %v325 = vpop.permute.xlu0 %324
    %vm326 = vcmp.eq.s32.totalorder %v96, %v316
    %vm327 = vcmp.eq.s32.totalorder %v97, %v316
    %vm328 = vcmp.eq.s32.totalorder %v96, %v319
    %vm329 = vcmp.eq.s32.totalorder %v97, %v319
    %vm330 = vcmp.eq.s32.totalorder %v96, %v322
    %vm331 = vcmp.eq.s32.totalorder %v97, %v322
    %vm332 = vcmp.eq.s32.totalorder %v96, %v325
    %vm333 = vcmp.eq.s32.totalorder %v97, %v325
    %vm334 = vmor %vm306, %vm326
    %vm335 = vmor %vm307, %vm327
    %vm336 = vmor %vm308, %vm328
    %vm337 = vmor %vm309, %vm329
    %vm338 = vmor %vm310, %vm330
    %vm339 = vmor %vm311, %vm331
    %vm340 = vmor %vm312, %vm332
    %vm341 = vmor %vm313, %vm333
    %v342 = vsel %vm334, 1, 0
    %v343 = vsel %vm335, 1, 0
    %v344 = vsel %vm336, 1, 0
    %v345 = vsel %vm337, 1, 0
    %v346 = vsel %vm338, 1, 0
    %v347 = vsel %vm339, 1, 0
    %v348 = vsel %vm340, 1, 0
    %v349 = vsel %vm341, 1, 0
    %v350 = vcvt.s32.f32 %v342
    %v351 = vcvt.s32.f32 %v343
    %v352 = vcvt.s32.f32 %v344
    %v353 = vcvt.s32.f32 %v345
    %v354 = vcvt.s32.f32 %v346
    %v355 = vcvt.s32.f32 %v347
    %v356 = vcvt.s32.f32 %v348
    %v357 = vcvt.s32.f32 %v349
    %v358 = vld [vmem:[%s2] sm:$0xff]
    %v359 = vld [vmem:[%s2 + $0x8] sm:$0xff]
    %v360 = vld [vmem:[%s2 + $0x10] sm:$0xff]
    %v361 = vld [vmem:[%s2 + $0x18] sm:$0xff]
    %v362 = vld [vmem:[%s2 + $0x20] sm:$0xff]
    %v363 = vld [vmem:[%s2 + $0x28] sm:$0xff]
    %v364 = vld [vmem:[%s2 + $0x30] sm:$0xff]
    %v365 = vld [vmem:[%s2 + $0x38] sm:$0xff]
    %v366 = vld [vmem:[%s2 + $0x40] sm:$0xff]
    %v367 = vld [vmem:[%s2 + $0x48] sm:$0xff]
    %v368 = vld [vmem:[%s2 + $0x50] sm:$0xff]
    %v369 = vld [vmem:[%s2 + $0x58] sm:$0xff]
    %v370 = vld [vmem:[%s2 + $0x60] sm:$0xff]
    %v371 = vld [vmem:[%s2 + $0x68] sm:$0xff]
    %v372 = vld [vmem:[%s2 + $0x70] sm:$0xff]
    %v373 = vld [vmem:[%s2 + $0x78] sm:$0xff]
    %v374 = vld [vmem:[%s2 + $0x80] sm:$0xff]
    %v375 = vld [vmem:[%s2 + $0x88] sm:$0xff]
    %v376 = vld [vmem:[%s2 + $0x90] sm:$0xff]
    %v377 = vld [vmem:[%s2 + $0x98] sm:$0xff]
    %v378 = vld [vmem:[%s2 + $0xa0] sm:$0xff]
    %v379 = vld [vmem:[%s2 + $0xa8] sm:$0xff]
    %v380 = vld [vmem:[%s2 + $0xb0] sm:$0xff]
    %v381 = vld [vmem:[%s2 + $0xb8] sm:$0xff]
    %v382 = vld [vmem:[%s2 + $0xc0] sm:$0xff]
    %v383 = vld [vmem:[%s2 + $0xc8] sm:$0xff]
    %v384 = vld [vmem:[%s2 + $0xd0] sm:$0xff]
    %v385 = vld [vmem:[%s2 + $0xd8] sm:$0xff]
    %v386 = vld [vmem:[%s2 + $0xe0] sm:$0xff]
    %v387 = vld [vmem:[%s2 + $0xe8] sm:$0xff]
    %v388 = vld [vmem:[%s2 + $0xf0] sm:$0xff]
    %v389 = vld [vmem:[%s2 + $0xf8] sm:$0xff]
    %390 = vmatprep.subr.mxu0 0.0
    %391 = vmatpush1.msra.mxu0 %v358
    %392 = vmatprep.subr.mxu0 0.0
    %393 = vmatpush1.msra.mxu0 %v359
    %394 = vmatprep.subr.mxu0 0.0
    %395 = vmatpush1.msra.mxu0 %v360
    %396 = vmatprep.subr.mxu0 0.0
    %397 = vmatpush1.msra.mxu0 %v361
    %398 = vmatprep.subr.mxu0 0.0
    %399 = vmatpush1.msra.mxu0 %v362
    %400 = vmatprep.subr.mxu0 0.0
    %401 = vmatpush1.msra.mxu0 %v363
    %402 = vmatprep.subr.mxu0 0.0
    %403 = vmatpush1.msra.mxu0 %v364
    %404 = vmatprep.subr.mxu0 0.0
    %405 = vmatpush1.msra.mxu0 %v365
    %406 = vmatprep.subr.mxu0 0.0
    %407 = vmatpush1.msra.mxu0 %v366
    %408 = vmatprep.subr.mxu0 0.0
    %409 = vmatpush1.msra.mxu0 %v367
    %410 = vmatprep.subr.mxu0 0.0
    %411 = vmatpush1.msra.mxu0 %v368
    %412 = vmatprep.subr.mxu0 0.0
    %413 = vmatpush1.msra.mxu0 %v369
    %414 = vmatprep.subr.mxu0 0.0
    %415 = vmatpush1.msra.mxu0 %v370
    %416 = vmatprep.subr.mxu0 0.0
    %417 = vmatpush1.msra.mxu0 %v371
    %418 = vmatprep.subr.mxu0 0.0
    %419 = vmatpush1.msra.mxu0 %v372
    %420 = vmatprep.subr.mxu0 0.0
    %421 = vmatpush1.msra.mxu0 %v373
    %422 = vmatprep.subr.mxu0 0.0
    %423 = vmatpush1.msra.mxu0 %v374
    %424 = vmatprep.subr.mxu0 0.0
    %425 = vmatpush1.msra.mxu0 %v375
    %426 = vmatprep.subr.mxu0 0.0
    %427 = vmatpush1.msra.mxu0 %v376
    %428 = vmatprep.subr.mxu0 0.0
    %429 = vmatpush1.msra.mxu0 %v377
    %430 = vmatprep.subr.mxu0 0.0
    %431 = vmatpush1.msra.mxu0 %v378
    %432 = vmatprep.subr.mxu0 0.0
    %433 = vmatpush1.msra.mxu0 %v379
    %434 = vmatprep.subr.mxu0 0.0
    %435 = vmatpush1.msra.mxu0 %v380
    %436 = vmatprep.subr.mxu0 0.0
    %437 = vmatpush1.msra.mxu0 %v381
    %438 = vmatprep.subr.mxu0 0.0
    %439 = vmatpush1.msra.mxu0 %v382
    %440 = vmatprep.subr.mxu0 0.0
    %441 = vmatpush1.msra.mxu0 %v383
    %442 = vmatprep.subr.mxu0 0.0
    %443 = vmatpush1.msra.mxu0 %v384
    %444 = vmatprep.subr.mxu0 0.0
    %445 = vmatpush1.msra.mxu0 %v385
    %446 = vmatprep.subr.mxu0 0.0
    %447 = vmatpush1.msra.mxu0 %v386
    %448 = vmatprep.subr.mxu0 0.0
    %449 = vmatpush1.msra.mxu0 %v387
    %450 = vmatprep.subr.mxu0 0.0
    %451 = vmatpush1.msra.mxu0 %v388
    %452 = vmatprep.subr.mxu0 0.0
    %453 = vmatpush1.msra.mxu0 %v389
    %454 = vmatprep.mubr.f32.mxu0 %v351
    %455 = vmatmul.mubr.f32.gmra.mrb[0].mxu0 %v350
    %v456 = vpop.f32.mrb[0].mxu0
    %v457 = vadd.f32 0.0, %v456
    %v458 = vpop.f32.mrb[0].mxu0
    %459 = vmatprep.mubr.f32.mxu0 %v353
    %460 = vmatmul.mubr.f32.gmra.mrb[0].mxu0 %v352
    %v461 = vpop.f32.mrb[0].mxu0
    %v462 = vadd.f32 0.0, %v461
    %v463 = vpop.f32.mrb[0].mxu0
    %464 = vmatprep.mubr.f32.mxu0 %v355
    %465 = vmatmul.mubr.f32.gmra.mrb[0].mxu0 %v354
    %v466 = vpop.f32.mrb[0].mxu0
    %v467 = vadd.f32 0.0, %v466
    %v468 = vpop.f32.mrb[0].mxu0
    %469 = vmatprep.mubr.f32.mxu0 %v357
    %470 = vmatmul.mubr.f32.gmra.mrb[0].mxu0 %v356
    %v471 = vpop.f32.mrb[0].mxu0
    %v472 = vadd.f32 0.0, %v471
    %v473 = vpop.f32.mrb[0].mxu0
    %474 = vdwg.mxu0
    %vm475 = vcmask 261120
    %v476 = vsel %vm475, %v87, 0.0
    %477 = vadd.xlane.f32.xlu0 %v476
    %v478 = vpop.xlane.xlu0 %477
    %v479 = vsel %vm475, %v88, 0.0
    %480 = vadd.xlane.f32.xlu0 %v479
    %v481 = vpop.xlane.xlu0 %480
    %v482 = vsel %vm475, %v89, 0.0
    %483 = vadd.xlane.f32.xlu0 %v482
    %v484 = vpop.xlane.xlu0 %483
    %v485 = vsel %vm475, %v90, 0.0
    %486 = vadd.xlane.f32.xlu0 %v485
    %v487 = vpop.xlane.xlu0 %486
    %vm488 = vcmp.gt.f32.partialorder %v478, 0.0
    %vm489 = vcmp.gt.f32.partialorder %v481, 0.0
    %vm490 = vcmp.gt.f32.partialorder %v484, 0.0
    %vm491 = vcmp.gt.f32.partialorder %v487, 0.0
    %v492 = vmax.f32 %v478, 1.0
    %v493 = vmax.f32 %v481, 1.0
    %v494 = vmax.f32 %v484, 1.0
    %v495 = vmax.f32 %v487, 1.0
    %v496 = vrcp.pop %v492
    %v497 = vmul.f32 1.0, %v496
    %v498 = vrcp.pop %v493
    %v499 = vmul.f32 1.0, %v498
    %v500 = vrcp.pop %v494
    %v501 = vmul.f32 1.0, %v500
    %v502 = vrcp.pop %v495
    %v503 = vmul.f32 1.0, %v502
    %v504 = vadd.f32 %v492, 1.0
    %v505 = vadd.f32 %v493, 1.0
    %v506 = vadd.f32 %v494, 1.0
    %v507 = vadd.f32 %v495, 1.0
    %v508 = vlog2.pop %v504
    %v509 = vmul.f32 %v508, 0.6931472
    %v510 = vlog2.pop %v505
    %v511 = vmul.f32 %v510, 0.6931472
    %v512 = vlog2.pop %v506
    %v513 = vmul.f32 %v512, 0.6931472
    %v514 = vlog2.pop %v507
    %v515 = vmul.f32 %v514, 0.6931472
    %v516 = vmul.f32 %v509, 0.4028027
    %v517 = vmul.f32 %v511, 0.4028027
    %v518 = vmul.f32 %v513, 0.4028027
    %v519 = vmul.f32 %v515, 0.4028027
    %v520 = vrcp.pop %v509
    %v521 = vmul.f32 2.482605, %v520
    %v522 = vrcp.pop %v511
    %v523 = vmul.f32 2.482605, %v522
    %v524 = vrcp.pop %v513
    %v525 = vmul.f32 2.482605, %v524
    %v526 = vrcp.pop %v515
    %v527 = vmul.f32 2.482605, %v526
    %v528 = vpack.c.bf16 %v88, %v87
    %v529 = vpack.c.bf16 %v90, %v89
    %v530 = vmul.f32 %v457, %v457
    %v531 = vmul.f32 %v462, %v462
    %v532 = vmul.f32 %v467, %v467
    %v533 = vmul.f32 %v472, %v472
    %v534 = vpack.c.bf16 %v462, %v457
    %v535 = vpack.c.bf16 %v531, %v530
    %v536 = vpack.c.bf16 %v472, %v467
    %v537 = vpack.c.bf16 %v533, %v532
    %v539 = vsel %vm475, %v528, 0
    %v542 = vsel %vm475, %v529, 0
    %544 = vmatprep.subr.bf16.mxu0 %v535
    %545 = vmatpush1.bf16.msra.mxu0 %v534
    %546 = vmatprep.subr.bf16.mxu0 %v537
    %547 = vmatpush1.bf16.msra.mxu0 %v536
    %548 = vmatprep.subr.bf16.mxu0 0
    %549 = vmatpush1.bf16.msra.mxu0 0
    %550 = vmatprep.subr.bf16.mxu0 0
    %551 = vmatpush1.bf16.msra.mxu0 0
    %552 = vmatprep.subr.bf16.mxu0 0
    %553 = vmatpush1.bf16.msra.mxu0 0
    %554 = vmatprep.subr.bf16.mxu0 0
    %555 = vmatpush1.bf16.msra.mxu0 0
    %556 = vmatprep.subr.bf16.mxu0 0
    %557 = vmatpush1.bf16.msra.mxu0 0
    %558 = vmatprep.subr.bf16.mxu0 0
    %559 = vmatpush1.bf16.msra.mxu0 0
    %560 = vmatprep.subr.bf16.mxu0 0
    %561 = vmatpush1.bf16.msra.mxu0 0
    %562 = vmatprep.subr.bf16.mxu0 0
    %563 = vmatpush1.bf16.msra.mxu0 0
    %564 = vmatprep.subr.bf16.mxu0 0
    %565 = vmatpush1.bf16.msra.mxu0 0
    %566 = vmatprep.subr.bf16.mxu0 0
    %567 = vmatpush1.bf16.msra.mxu0 0
    %568 = vmatprep.subr.bf16.mxu0 0
    %569 = vmatpush1.bf16.msra.mxu0 0
    %570 = vmatprep.subr.bf16.mxu0 0
    %571 = vmatpush1.bf16.msra.mxu0 0
    %572 = vmatprep.subr.bf16.mxu0 0
    %573 = vmatpush1.bf16.msra.mxu0 0
    %574 = vmatprep.subr.bf16.mxu0 0
    %575 = vmatpush1.bf16.msra.mxu0 0
    %576 = vmatprep.mubr.bf16.mxu0 0
    %577 = vmatmul.mubr.bf16.gmra.mrb[0].mxu0 %v539
    %v578 = vpop.f32.mrb[0].mxu0
    %v579 = vadd.f32 0.0, %v578
    %v580 = vpop.f32.mrb[0].mxu0
    %v581 = vadd.f32 0.0, %v580
    %v582 = vpop.f32.mrb[0].mxu0
    %v583 = vadd.f32 0.0, %v582
    %v584 = vpop.f32.mrb[0].mxu0
    %v585 = vadd.f32 0.0, %v584
    %586 = vmatprep.mubr.bf16.mxu0 0
    %587 = vmatmul.mubr.bf16.gmra.mrb[0].mxu0 %v542
    %v588 = vpop.f32.mrb[0].mxu0
    %v589 = vadd.f32 0.0, %v588
    %v590 = vpop.f32.mrb[0].mxu0
    %v591 = vadd.f32 0.0, %v590
    %v592 = vpop.f32.mrb[0].mxu0
    %v593 = vadd.f32 0.0, %v592
    %v594 = vpop.f32.mrb[0].mxu0
    %v595 = vadd.f32 0.0, %v594
    %596 = vdwg.mxu0
    %v597 = vmul.f32 %v579, %v497
    %v598 = vmul.f32 %v583, %v499
    %v599 = vmul.f32 %v589, %v501
    %v600 = vmul.f32 %v593, %v503
    %v601 = vmul.f32 %v581, %v497
    %v602 = vmul.f32 %v585, %v499
    %v603 = vmul.f32 %v591, %v501
    %v604 = vmul.f32 %v595, %v503
    %v605 = vmul.f32 %v597, %v597
    %v606 = vmul.f32 %v598, %v598
    %v607 = vmul.f32 %v599, %v599
    %v608 = vmul.f32 %v600, %v600
    %v609 = vsub.f32 %v601, %v605
    %v610 = vsub.f32 %v602, %v606
    %v611 = vsub.f32 %v603, %v607
    %v612 = vsub.f32 %v604, %v608
    %v613 = vmax.f32 %v609, 0.0
    %v614 = vmax.f32 %v610, 0.0
    %v615 = vmax.f32 %v611, 0.0
    %v616 = vmax.f32 %v612, 0.0
    %v617 = vadd.f32 %v613, 1e-05
    %v618 = vadd.f32 %v614, 1e-05
    %v619 = vadd.f32 %v615, 1e-05
    %v620 = vadd.f32 %v616, 1e-05
    %v621 = vrsqrt.pop %v617
    %v622 = vmul.f32 %v617, %v621
    %vm623 = vcmp.eq.f32.partialorder %v617, inf
    %v624 = vsel %vm623, %v617, %v622
    %vm625 = vcmp.eq.f32.partialorder %v617, 0.0
    %v626 = vand.u32 %v617, 2147483648
    %v627 = vsel %vm625, %v626, %v624
    %v628 = vrsqrt.pop %v618
    %v629 = vmul.f32 %v618, %v628
    %vm630 = vcmp.eq.f32.partialorder %v618, inf
    %v631 = vsel %vm630, %v618, %v629
    %vm632 = vcmp.eq.f32.partialorder %v618, 0.0
    %v633 = vand.u32 %v618, 2147483648
    %v634 = vsel %vm632, %v633, %v631
    %v635 = vrsqrt.pop %v619
    %v636 = vmul.f32 %v619, %v635
    %vm637 = vcmp.eq.f32.partialorder %v619, inf
    %v638 = vsel %vm637, %v619, %v636
    %vm639 = vcmp.eq.f32.partialorder %v619, 0.0
    %v640 = vand.u32 %v619, 2147483648
    %v641 = vsel %vm639, %v640, %v638
    %v642 = vrsqrt.pop %v620
    %v643 = vmul.f32 %v620, %v642
    %vm644 = vcmp.eq.f32.partialorder %v620, inf
    %v645 = vsel %vm644, %v620, %v643
    %vm646 = vcmp.eq.f32.partialorder %v620, 0.0
    %v647 = vand.u32 %v620, 2147483648
    %v648 = vsel %vm646, %v647, %v645
    %v649 = vsub.f32 0.0, %v457
    %v650 = vsub.f32 0.0, %v462
    %v651 = vsub.f32 0.0, %v467
    %v652 = vsub.f32 0.0, %v472
    %vm653 = vcmp.ne.f32.partialorder %v87, 0.0
    %vm654 = vcmp.ne.f32.partialorder %v88, 0.0
    %vm655 = vcmp.ne.f32.partialorder %v89, 0.0
    %vm656 = vcmp.ne.f32.partialorder %v90, 0.0
    %v657 = vlaneseq
    %v658 = vshrl.u32 %v657, 7
    %v659 = vsub.s32 0, %v658
    %v660 = vrot.slane %v457, %v659
    %v661 = vlaneseq
    %v662 = vshrl.u32 %v661, 7
    %v663 = vsub.s32 0, %v662
    %v664 = vrot.slane %v649, %v663
    %v665 = vmax.f32 %v660, -3e+38
    %v666 = vmax.f32 %v664, -3e+38
    %v667 = vsel %vm653, 1, 0
    %v668 = vsel %vm654, 1, 0
    %v669 = vsel %vm655, 1, 0
    %v670 = vsel %vm656, 1, 0
    %671 = vset.pattern.permute.xlu0 0
    %672 = vperm.xlu0 %671, %v667
    %v673 = vpop.permute.xlu0 %672
    %674 = vset.pattern.permute.xlu0 0
    %675 = vperm.xlu0 %674, %v668
    %v676 = vpop.permute.xlu0 %675
    %677 = vset.pattern.permute.xlu0 0
    %678 = vperm.xlu0 %677, %v669
    %v679 = vpop.permute.xlu0 %678
    %680 = vset.pattern.permute.xlu0 0
    %681 = vperm.xlu0 %680, %v670
    %v682 = vpop.permute.xlu0 %681
    %vm683 = vcmp.eq.s32.totalorder %v673, 1
    %vm684 = vcmp.eq.s32.totalorder %v676, 1
    %vm685 = vcmp.eq.s32.totalorder %v679, 1
    %vm686 = vcmp.eq.s32.totalorder %v682, 1
    %v687 = vsel %vm683, %v665, -3e+38
    %v688 = vsel %vm683, %v666, -3e+38
    %v689 = vsel %vm684, %v665, -3e+38
    %v690 = vsel %vm684, %v666, -3e+38
    %v691 = vsel %vm685, %v665, -3e+38
    %v692 = vsel %vm685, %v666, -3e+38
    %v693 = vsel %vm686, %v665, -3e+38
    %v694 = vsel %vm686, %v666, -3e+38
    %v695 = vlaneseq
    %v696 = vshrl.u32 %v695, 7
    %v697 = vsub.s32 1, %v696
    %v698 = vrot.slane %v457, %v697
    %v699 = vlaneseq
    %v700 = vshrl.u32 %v699, 7
    %v701 = vsub.s32 1, %v700
    %v702 = vrot.slane %v649, %v701
    %v703 = vmax.f32 %v687, %v698
    %v704 = vmax.f32 %v688, %v702
    %v705 = vmax.f32 %v689, %v698
    %v706 = vmax.f32 %v690, %v702
    %v707 = vmax.f32 %v691, %v698
    %v708 = vmax.f32 %v692, %v702
    %v709 = vmax.f32 %v693, %v698
    %v710 = vmax.f32 %v694, %v702
    %711 = vset.pattern.permute.xlu0 1
    %712 = vperm.xlu0 %711, %v667
    %v713 = vpop.permute.xlu0 %712
    %714 = vset.pattern.permute.xlu0 1
    %715 = vperm.xlu0 %714, %v668
    %v716 = vpop.permute.xlu0 %715
    %717 = vset.pattern.permute.xlu0 1
    %718 = vperm.xlu0 %717, %v669
    %v719 = vpop.permute.xlu0 %718
    %720 = vset.pattern.permute.xlu0 1
    %721 = vperm.xlu0 %720, %v670
    %v722 = vpop.permute.xlu0 %721
    %vm723 = vcmp.eq.s32.totalorder %v713, 1
    %vm724 = vcmp.eq.s32.totalorder %v716, 1
    %vm725 = vcmp.eq.s32.totalorder %v719, 1
    %vm726 = vcmp.eq.s32.totalorder %v722, 1
    %v727 = vsel %vm723, %v703, %v687
    %v728 = vsel %vm723, %v704, %v688
    %v729 = vsel %vm724, %v705, %v689
    %v730 = vsel %vm724, %v706, %v690
    %v731 = vsel %vm725, %v707, %v691
    %v732 = vsel %vm725, %v708, %v692
    %v733 = vsel %vm726, %v709, %v693
    %v734 = vsel %vm726, %v710, %v694
    %v735 = vlaneseq
    %v736 = vshrl.u32 %v735, 7
    %v737 = vsub.s32 2, %v736
    %v738 = vrot.slane %v457, %v737
    %v739 = vlaneseq
    %v740 = vshrl.u32 %v739, 7
    %v741 = vsub.s32 2, %v740
    %v742 = vrot.slane %v649, %v741
    %v743 = vmax.f32 %v727, %v738
    %v744 = vmax.f32 %v728, %v742
    %v745 = vmax.f32 %v729, %v738
    %v746 = vmax.f32 %v730, %v742
    %v747 = vmax.f32 %v731, %v738
    %v748 = vmax.f32 %v732, %v742
    %v749 = vmax.f32 %v733, %v738
    %v750 = vmax.f32 %v734, %v742
    %751 = vset.pattern.permute.xlu0 2
    %752 = vperm.xlu0 %751, %v667
    %v753 = vpop.permute.xlu0 %752
    %754 = vset.pattern.permute.xlu0 2
    %755 = vperm.xlu0 %754, %v668
    %v756 = vpop.permute.xlu0 %755
    %757 = vset.pattern.permute.xlu0 2
    %758 = vperm.xlu0 %757, %v669
    %v759 = vpop.permute.xlu0 %758
    %760 = vset.pattern.permute.xlu0 2
    %761 = vperm.xlu0 %760, %v670
    %v762 = vpop.permute.xlu0 %761
    %vm763 = vcmp.eq.s32.totalorder %v753, 1
    %vm764 = vcmp.eq.s32.totalorder %v756, 1
    %vm765 = vcmp.eq.s32.totalorder %v759, 1
    %vm766 = vcmp.eq.s32.totalorder %v762, 1
    %v767 = vsel %vm763, %v743, %v727
    %v768 = vsel %vm763, %v744, %v728
    %v769 = vsel %vm764, %v745, %v729
    %v770 = vsel %vm764, %v746, %v730
    %v771 = vsel %vm765, %v747, %v731
    %v772 = vsel %vm765, %v748, %v732
    %v773 = vsel %vm766, %v749, %v733
    %v774 = vsel %vm766, %v750, %v734
    %v775 = vlaneseq
    %v776 = vshrl.u32 %v775, 7
    %v777 = vsub.s32 3, %v776
    %v778 = vrot.slane %v457, %v777
    %v779 = vlaneseq
    %v780 = vshrl.u32 %v779, 7
    %v781 = vsub.s32 3, %v780
    %v782 = vrot.slane %v649, %v781
    %v783 = vmax.f32 %v767, %v778
    %v784 = vmax.f32 %v768, %v782
    %v785 = vmax.f32 %v769, %v778
    %v786 = vmax.f32 %v770, %v782
    %v787 = vmax.f32 %v771, %v778
    %v788 = vmax.f32 %v772, %v782
    %v789 = vmax.f32 %v773, %v778
    %v790 = vmax.f32 %v774, %v782
    %791 = vset.pattern.permute.xlu0 3
    %792 = vperm.xlu0 %791, %v667
    %v793 = vpop.permute.xlu0 %792
    %794 = vset.pattern.permute.xlu0 3
    %795 = vperm.xlu0 %794, %v668
    %v796 = vpop.permute.xlu0 %795
    %797 = vset.pattern.permute.xlu0 3
    %798 = vperm.xlu0 %797, %v669
    %v799 = vpop.permute.xlu0 %798
    %800 = vset.pattern.permute.xlu0 3
    %801 = vperm.xlu0 %800, %v670
    %v802 = vpop.permute.xlu0 %801
    %vm803 = vcmp.eq.s32.totalorder %v793, 1
    %vm804 = vcmp.eq.s32.totalorder %v796, 1
    %vm805 = vcmp.eq.s32.totalorder %v799, 1
    %vm806 = vcmp.eq.s32.totalorder %v802, 1
    %v807 = vsel %vm803, %v783, %v767
    %v808 = vsel %vm803, %v784, %v768
    %v809 = vsel %vm804, %v785, %v769
    %v810 = vsel %vm804, %v786, %v770
    %v811 = vsel %vm805, %v787, %v771
    %v812 = vsel %vm805, %v788, %v772
    %v813 = vsel %vm806, %v789, %v773
    %v814 = vsel %vm806, %v790, %v774
    %v815 = vlaneseq
    %v816 = vshrl.u32 %v815, 7
    %v817 = vsub.s32 4, %v816
    %v818 = vrot.slane %v457, %v817
    %v819 = vlaneseq
    %v820 = vshrl.u32 %v819, 7
    %v821 = vsub.s32 4, %v820
    %v822 = vrot.slane %v649, %v821
    %v823 = vmax.f32 %v807, %v818
    %v824 = vmax.f32 %v808, %v822
    %v825 = vmax.f32 %v809, %v818
    %v826 = vmax.f32 %v810, %v822
    %v827 = vmax.f32 %v811, %v818
    %v828 = vmax.f32 %v812, %v822
    %v829 = vmax.f32 %v813, %v818
    %v830 = vmax.f32 %v814, %v822
    %831 = vset.pattern.permute.xlu0 4
    %832 = vperm.xlu0 %831, %v667
    %v833 = vpop.permute.xlu0 %832
    %834 = vset.pattern.permute.xlu0 4
    %835 = vperm.xlu0 %834, %v668
    %v836 = vpop.permute.xlu0 %835
    %837 = vset.pattern.permute.xlu0 4
    %838 = vperm.xlu0 %837, %v669
    %v839 = vpop.permute.xlu0 %838
    %840 = vset.pattern.permute.xlu0 4
    %841 = vperm.xlu0 %840, %v670
    %v842 = vpop.permute.xlu0 %841
    %vm843 = vcmp.eq.s32.totalorder %v833, 1
    %vm844 = vcmp.eq.s32.totalorder %v836, 1
    %vm845 = vcmp.eq.s32.totalorder %v839, 1
    %vm846 = vcmp.eq.s32.totalorder %v842, 1
    %v847 = vsel %vm843, %v823, %v807
    %v848 = vsel %vm843, %v824, %v808
    %v849 = vsel %vm844, %v825, %v809
    %v850 = vsel %vm844, %v826, %v810
    %v851 = vsel %vm845, %v827, %v811
    %v852 = vsel %vm845, %v828, %v812
    %v853 = vsel %vm846, %v829, %v813
    %v854 = vsel %vm846, %v830, %v814
    %v855 = vlaneseq
    %v856 = vshrl.u32 %v855, 7
    %v857 = vsub.s32 5, %v856
    %v858 = vrot.slane %v457, %v857
    %v859 = vlaneseq
    %v860 = vshrl.u32 %v859, 7
    %v861 = vsub.s32 5, %v860
    %v862 = vrot.slane %v649, %v861
    %v863 = vmax.f32 %v847, %v858
    %v864 = vmax.f32 %v848, %v862
    %v865 = vmax.f32 %v849, %v858
    %v866 = vmax.f32 %v850, %v862
    %v867 = vmax.f32 %v851, %v858
    %v868 = vmax.f32 %v852, %v862
    %v869 = vmax.f32 %v853, %v858
    %v870 = vmax.f32 %v854, %v862
    %871 = vset.pattern.permute.xlu0 5
    %872 = vperm.xlu0 %871, %v667
    %v873 = vpop.permute.xlu0 %872
    %874 = vset.pattern.permute.xlu0 5
    %875 = vperm.xlu0 %874, %v668
    %v876 = vpop.permute.xlu0 %875
    %877 = vset.pattern.permute.xlu0 5
    %878 = vperm.xlu0 %877, %v669
    %v879 = vpop.permute.xlu0 %878
    %880 = vset.pattern.permute.xlu0 5
    %881 = vperm.xlu0 %880, %v670
    %v882 = vpop.permute.xlu0 %881
    %vm883 = vcmp.eq.s32.totalorder %v873, 1
    %vm884 = vcmp.eq.s32.totalorder %v876, 1
    %vm885 = vcmp.eq.s32.totalorder %v879, 1
    %vm886 = vcmp.eq.s32.totalorder %v882, 1
    %v887 = vsel %vm883, %v863, %v847
    %v888 = vsel %vm883, %v864, %v848
    %v889 = vsel %vm884, %v865, %v849
    %v890 = vsel %vm884, %v866, %v850
    %v891 = vsel %vm885, %v867, %v851
    %v892 = vsel %vm885, %v868, %v852
    %v893 = vsel %vm886, %v869, %v853
    %v894 = vsel %vm886, %v870, %v854
    %v895 = vlaneseq
    %v896 = vshrl.u32 %v895, 7
    %v897 = vsub.s32 6, %v896
    %v898 = vrot.slane %v457, %v897
    %v899 = vlaneseq
    %v900 = vshrl.u32 %v899, 7
    %v901 = vsub.s32 6, %v900
    %v902 = vrot.slane %v649, %v901
    %v903 = vmax.f32 %v887, %v898
    %v904 = vmax.f32 %v888, %v902
    %v905 = vmax.f32 %v889, %v898
    %v906 = vmax.f32 %v890, %v902
    %v907 = vmax.f32 %v891, %v898
    %v908 = vmax.f32 %v892, %v902
    %v909 = vmax.f32 %v893, %v898
    %v910 = vmax.f32 %v894, %v902
    %911 = vset.pattern.permute.xlu0 6
    %912 = vperm.xlu0 %911, %v667
    %v913 = vpop.permute.xlu0 %912
    %914 = vset.pattern.permute.xlu0 6
    %915 = vperm.xlu0 %914, %v668
    %v916 = vpop.permute.xlu0 %915
    %917 = vset.pattern.permute.xlu0 6
    %918 = vperm.xlu0 %917, %v669
    %v919 = vpop.permute.xlu0 %918
    %920 = vset.pattern.permute.xlu0 6
    %921 = vperm.xlu0 %920, %v670
    %v922 = vpop.permute.xlu0 %921
    %vm923 = vcmp.eq.s32.totalorder %v913, 1
    %vm924 = vcmp.eq.s32.totalorder %v916, 1
    %vm925 = vcmp.eq.s32.totalorder %v919, 1
    %vm926 = vcmp.eq.s32.totalorder %v922, 1
    %v927 = vsel %vm923, %v903, %v887
    %v928 = vsel %vm923, %v904, %v888
    %v929 = vsel %vm924, %v905, %v889
    %v930 = vsel %vm924, %v906, %v890
    %v931 = vsel %vm925, %v907, %v891
    %v932 = vsel %vm925, %v908, %v892
    %v933 = vsel %vm926, %v909, %v893
    %v934 = vsel %vm926, %v910, %v894
    %v935 = vlaneseq
    %v936 = vshrl.u32 %v935, 7
    %v937 = vsub.s32 7, %v936
    %v938 = vrot.slane %v457, %v937
    %v939 = vlaneseq
    %v940 = vshrl.u32 %v939, 7
    %v941 = vsub.s32 7, %v940
    %v942 = vrot.slane %v649, %v941
    %v943 = vmax.f32 %v927, %v938
    %v944 = vmax.f32 %v928, %v942
    %v945 = vmax.f32 %v929, %v938
    %v946 = vmax.f32 %v930, %v942
    %v947 = vmax.f32 %v931, %v938
    %v948 = vmax.f32 %v932, %v942
    %v949 = vmax.f32 %v933, %v938
    %v950 = vmax.f32 %v934, %v942
    %951 = vset.pattern.permute.xlu0 7
    %952 = vperm.xlu0 %951, %v667
    %v953 = vpop.permute.xlu0 %952
    %954 = vset.pattern.permute.xlu0 7
    %955 = vperm.xlu0 %954, %v668
    %v956 = vpop.permute.xlu0 %955
    %957 = vset.pattern.permute.xlu0 7
    %958 = vperm.xlu0 %957, %v669
    %v959 = vpop.permute.xlu0 %958
    %960 = vset.pattern.permute.xlu0 7
    %961 = vperm.xlu0 %960, %v670
    %v962 = vpop.permute.xlu0 %961
    %vm963 = vcmp.eq.s32.totalorder %v953, 1
    %vm964 = vcmp.eq.s32.totalorder %v956, 1
    %vm965 = vcmp.eq.s32.totalorder %v959, 1
    %vm966 = vcmp.eq.s32.totalorder %v962, 1
    %v967 = vsel %vm963, %v943, %v927
    %v968 = vsel %vm963, %v944, %v928
    %v969 = vsel %vm964, %v945, %v929
    %v970 = vsel %vm964, %v946, %v930
    %v971 = vsel %vm965, %v947, %v931
    %v972 = vsel %vm965, %v948, %v932
    %v973 = vsel %vm966, %v949, %v933
    %v974 = vsel %vm966, %v950, %v934
    %v975 = vlaneseq
    %v976 = vshrl.u32 %v975, 7
    %v977 = vsub.s32 0, %v976
    %v978 = vrot.slane %v462, %v977
    %v979 = vlaneseq
    %v980 = vshrl.u32 %v979, 7
    %v981 = vsub.s32 0, %v980
    %v982 = vrot.slane %v650, %v981
    %v983 = vmax.f32 %v967, %v978
    %v984 = vmax.f32 %v968, %v982
    %v985 = vmax.f32 %v969, %v978
    %v986 = vmax.f32 %v970, %v982
    %v987 = vmax.f32 %v971, %v978
    %v988 = vmax.f32 %v972, %v982
    %v989 = vmax.f32 %v973, %v978
    %v990 = vmax.f32 %v974, %v982
    %991 = vset.pattern.permute.xlu0 8
    %992 = vperm.xlu0 %991, %v667
    %v993 = vpop.permute.xlu0 %992
    %994 = vset.pattern.permute.xlu0 8
    %995 = vperm.xlu0 %994, %v668
    %v996 = vpop.permute.xlu0 %995
    %997 = vset.pattern.permute.xlu0 8
    %998 = vperm.xlu0 %997, %v669
    %v999 = vpop.permute.xlu0 %998
    %1000 = vset.pattern.permute.xlu0 8
    %1001 = vperm.xlu0 %1000, %v670
    %v1002 = vpop.permute.xlu0 %1001
    %vm1003 = vcmp.eq.s32.totalorder %v993, 1
    %vm1004 = vcmp.eq.s32.totalorder %v996, 1
    %vm1005 = vcmp.eq.s32.totalorder %v999, 1
    %vm1006 = vcmp.eq.s32.totalorder %v1002, 1
    %v1007 = vsel %vm1003, %v983, %v967
    %v1008 = vsel %vm1003, %v984, %v968
    %v1009 = vsel %vm1004, %v985, %v969
    %v1010 = vsel %vm1004, %v986, %v970
    %v1011 = vsel %vm1005, %v987, %v971
    %v1012 = vsel %vm1005, %v988, %v972
    %v1013 = vsel %vm1006, %v989, %v973
    %v1014 = vsel %vm1006, %v990, %v974
    %v1015 = vlaneseq
    %v1016 = vshrl.u32 %v1015, 7
    %v1017 = vsub.s32 1, %v1016
    %v1018 = vrot.slane %v462, %v1017
    %v1019 = vlaneseq
    %v1020 = vshrl.u32 %v1019, 7
    %v1021 = vsub.s32 1, %v1020
    %v1022 = vrot.slane %v650, %v1021
    %v1023 = vmax.f32 %v1007, %v1018
    %v1024 = vmax.f32 %v1008, %v1022
    %v1025 = vmax.f32 %v1009, %v1018
    %v1026 = vmax.f32 %v1010, %v1022
    %v1027 = vmax.f32 %v1011, %v1018
    %v1028 = vmax.f32 %v1012, %v1022
    %v1029 = vmax.f32 %v1013, %v1018
    %v1030 = vmax.f32 %v1014, %v1022
    %1031 = vset.pattern.permute.xlu0 9
    %1032 = vperm.xlu0 %1031, %v667
    %v1033 = vpop.permute.xlu0 %1032
    %1034 = vset.pattern.permute.xlu0 9
    %1035 = vperm.xlu0 %1034, %v668
    %v1036 = vpop.permute.xlu0 %1035
    %1037 = vset.pattern.permute.xlu0 9
    %1038 = vperm.xlu0 %1037, %v669
    %v1039 = vpop.permute.xlu0 %1038
    %1040 = vset.pattern.permute.xlu0 9
    %1041 = vperm.xlu0 %1040, %v670
    %v1042 = vpop.permute.xlu0 %1041
    %vm1043 = vcmp.eq.s32.totalorder %v1033, 1
    %vm1044 = vcmp.eq.s32.totalorder %v1036, 1
    %vm1045 = vcmp.eq.s32.totalorder %v1039, 1
    %vm1046 = vcmp.eq.s32.totalorder %v1042, 1
    %v1047 = vsel %vm1043, %v1023, %v1007
    %v1048 = vsel %vm1043, %v1024, %v1008
    %v1049 = vsel %vm1044, %v1025, %v1009
    %v1050 = vsel %vm1044, %v1026, %v1010
    %v1051 = vsel %vm1045, %v1027, %v1011
    %v1052 = vsel %vm1045, %v1028, %v1012
    %v1053 = vsel %vm1046, %v1029, %v1013
    %v1054 = vsel %vm1046, %v1030, %v1014
    %v1055 = vlaneseq
    %v1056 = vshrl.u32 %v1055, 7
    %v1057 = vsub.s32 2, %v1056
    %v1058 = vrot.slane %v462, %v1057
    %v1059 = vlaneseq
    %v1060 = vshrl.u32 %v1059, 7
    %v1061 = vsub.s32 2, %v1060
    %v1062 = vrot.slane %v650, %v1061
    %v1063 = vmax.f32 %v1047, %v1058
    %v1064 = vmax.f32 %v1048, %v1062
    %v1065 = vmax.f32 %v1049, %v1058
    %v1066 = vmax.f32 %v1050, %v1062
    %v1067 = vmax.f32 %v1051, %v1058
    %v1068 = vmax.f32 %v1052, %v1062
    %v1069 = vmax.f32 %v1053, %v1058
    %v1070 = vmax.f32 %v1054, %v1062
    %1071 = vset.pattern.permute.xlu0 10
    %1072 = vperm.xlu0 %1071, %v667
    %v1073 = vpop.permute.xlu0 %1072
    %1074 = vset.pattern.permute.xlu0 10
    %1075 = vperm.xlu0 %1074, %v668
    %v1076 = vpop.permute.xlu0 %1075
    %1077 = vset.pattern.permute.xlu0 10
    %1078 = vperm.xlu0 %1077, %v669
    %v1079 = vpop.permute.xlu0 %1078
    %1080 = vset.pattern.permute.xlu0 10
    %1081 = vperm.xlu0 %1080, %v670
    %v1082 = vpop.permute.xlu0 %1081
    %vm1083 = vcmp.eq.s32.totalorder %v1073, 1
    %vm1084 = vcmp.eq.s32.totalorder %v1076, 1
    %vm1085 = vcmp.eq.s32.totalorder %v1079, 1
    %vm1086 = vcmp.eq.s32.totalorder %v1082, 1
    %v1087 = vsel %vm1083, %v1063, %v1047
    %v1088 = vsel %vm1083, %v1064, %v1048
    %v1089 = vsel %vm1084, %v1065, %v1049
    %v1090 = vsel %vm1084, %v1066, %v1050
    %v1091 = vsel %vm1085, %v1067, %v1051
    %v1092 = vsel %vm1085, %v1068, %v1052
    %v1093 = vsel %vm1086, %v1069, %v1053
    %v1094 = vsel %vm1086, %v1070, %v1054
    %v1095 = vlaneseq
    %v1096 = vshrl.u32 %v1095, 7
    %v1097 = vsub.s32 3, %v1096
    %v1098 = vrot.slane %v462, %v1097
    %v1099 = vlaneseq
    %v1100 = vshrl.u32 %v1099, 7
    %v1101 = vsub.s32 3, %v1100
    %v1102 = vrot.slane %v650, %v1101
    %v1103 = vmax.f32 %v1087, %v1098
    %v1104 = vmax.f32 %v1088, %v1102
    %v1105 = vmax.f32 %v1089, %v1098
    %v1106 = vmax.f32 %v1090, %v1102
    %v1107 = vmax.f32 %v1091, %v1098
    %v1108 = vmax.f32 %v1092, %v1102
    %v1109 = vmax.f32 %v1093, %v1098
    %v1110 = vmax.f32 %v1094, %v1102
    %1111 = vset.pattern.permute.xlu0 11
    %1112 = vperm.xlu0 %1111, %v667
    %v1113 = vpop.permute.xlu0 %1112
    %1114 = vset.pattern.permute.xlu0 11
    %1115 = vperm.xlu0 %1114, %v668
    %v1116 = vpop.permute.xlu0 %1115
    %1117 = vset.pattern.permute.xlu0 11
    %1118 = vperm.xlu0 %1117, %v669
    %v1119 = vpop.permute.xlu0 %1118
    %1120 = vset.pattern.permute.xlu0 11
    %1121 = vperm.xlu0 %1120, %v670
    %v1122 = vpop.permute.xlu0 %1121
    %vm1123 = vcmp.eq.s32.totalorder %v1113, 1
    %vm1124 = vcmp.eq.s32.totalorder %v1116, 1
    %vm1125 = vcmp.eq.s32.totalorder %v1119, 1
    %vm1126 = vcmp.eq.s32.totalorder %v1122, 1
    %v1127 = vsel %vm1123, %v1103, %v1087
    %v1128 = vsel %vm1123, %v1104, %v1088
    %v1129 = vsel %vm1124, %v1105, %v1089
    %v1130 = vsel %vm1124, %v1106, %v1090
    %v1131 = vsel %vm1125, %v1107, %v1091
    %v1132 = vsel %vm1125, %v1108, %v1092
    %v1133 = vsel %vm1126, %v1109, %v1093
    %v1134 = vsel %vm1126, %v1110, %v1094
    %v1135 = vlaneseq
    %v1136 = vshrl.u32 %v1135, 7
    %v1137 = vsub.s32 4, %v1136
    %v1138 = vrot.slane %v462, %v1137
    %v1139 = vlaneseq
    %v1140 = vshrl.u32 %v1139, 7
    %v1141 = vsub.s32 4, %v1140
    %v1142 = vrot.slane %v650, %v1141
    %v1143 = vmax.f32 %v1127, %v1138
    %v1144 = vmax.f32 %v1128, %v1142
    %v1145 = vmax.f32 %v1129, %v1138
    %v1146 = vmax.f32 %v1130, %v1142
    %v1147 = vmax.f32 %v1131, %v1138
    %v1148 = vmax.f32 %v1132, %v1142
    %v1149 = vmax.f32 %v1133, %v1138
    %v1150 = vmax.f32 %v1134, %v1142
    %1151 = vset.pattern.permute.xlu0 12
    %1152 = vperm.xlu0 %1151, %v667
    %v1153 = vpop.permute.xlu0 %1152
    %1154 = vset.pattern.permute.xlu0 12
    %1155 = vperm.xlu0 %1154, %v668
    %v1156 = vpop.permute.xlu0 %1155
    %1157 = vset.pattern.permute.xlu0 12
    %1158 = vperm.xlu0 %1157, %v669
    %v1159 = vpop.permute.xlu0 %1158
    %1160 = vset.pattern.permute.xlu0 12
    %1161 = vperm.xlu0 %1160, %v670
    %v1162 = vpop.permute.xlu0 %1161
    %vm1163 = vcmp.eq.s32.totalorder %v1153, 1
    %vm1164 = vcmp.eq.s32.totalorder %v1156, 1
    %vm1165 = vcmp.eq.s32.totalorder %v1159, 1
    %vm1166 = vcmp.eq.s32.totalorder %v1162, 1
    %v1167 = vsel %vm1163, %v1143, %v1127
    %v1168 = vsel %vm1163, %v1144, %v1128
    %v1169 = vsel %vm1164, %v1145, %v1129
    %v1170 = vsel %vm1164, %v1146, %v1130
    %v1171 = vsel %vm1165, %v1147, %v1131
    %v1172 = vsel %vm1165, %v1148, %v1132
    %v1173 = vsel %vm1166, %v1149, %v1133
    %v1174 = vsel %vm1166, %v1150, %v1134
    %v1175 = vlaneseq
    %v1176 = vshrl.u32 %v1175, 7
    %v1177 = vsub.s32 5, %v1176
    %v1178 = vrot.slane %v462, %v1177
    %v1179 = vlaneseq
    %v1180 = vshrl.u32 %v1179, 7
    %v1181 = vsub.s32 5, %v1180
    %v1182 = vrot.slane %v650, %v1181
    %v1183 = vmax.f32 %v1167, %v1178
    %v1184 = vmax.f32 %v1168, %v1182
    %v1185 = vmax.f32 %v1169, %v1178
    %v1186 = vmax.f32 %v1170, %v1182
    %v1187 = vmax.f32 %v1171, %v1178
    %v1188 = vmax.f32 %v1172, %v1182
    %v1189 = vmax.f32 %v1173, %v1178
    %v1190 = vmax.f32 %v1174, %v1182
    %1191 = vset.pattern.permute.xlu0 13
    %1192 = vperm.xlu0 %1191, %v667
    %v1193 = vpop.permute.xlu0 %1192
    %1194 = vset.pattern.permute.xlu0 13
    %1195 = vperm.xlu0 %1194, %v668
    %v1196 = vpop.permute.xlu0 %1195
    %1197 = vset.pattern.permute.xlu0 13
    %1198 = vperm.xlu0 %1197, %v669
    %v1199 = vpop.permute.xlu0 %1198
    %1200 = vset.pattern.permute.xlu0 13
    %1201 = vperm.xlu0 %1200, %v670
    %v1202 = vpop.permute.xlu0 %1201
    %vm1203 = vcmp.eq.s32.totalorder %v1193, 1
    %vm1204 = vcmp.eq.s32.totalorder %v1196, 1
    %vm1205 = vcmp.eq.s32.totalorder %v1199, 1
    %vm1206 = vcmp.eq.s32.totalorder %v1202, 1
    %v1207 = vsel %vm1203, %v1183, %v1167
    %v1208 = vsel %vm1203, %v1184, %v1168
    %v1209 = vsel %vm1204, %v1185, %v1169
    %v1210 = vsel %vm1204, %v1186, %v1170
    %v1211 = vsel %vm1205, %v1187, %v1171
    %v1212 = vsel %vm1205, %v1188, %v1172
    %v1213 = vsel %vm1206, %v1189, %v1173
    %v1214 = vsel %vm1206, %v1190, %v1174
    %v1215 = vlaneseq
    %v1216 = vshrl.u32 %v1215, 7
    %v1217 = vsub.s32 6, %v1216
    %v1218 = vrot.slane %v462, %v1217
    %v1219 = vlaneseq
    %v1220 = vshrl.u32 %v1219, 7
    %v1221 = vsub.s32 6, %v1220
    %v1222 = vrot.slane %v650, %v1221
    %v1223 = vmax.f32 %v1207, %v1218
    %v1224 = vmax.f32 %v1208, %v1222
    %v1225 = vmax.f32 %v1209, %v1218
    %v1226 = vmax.f32 %v1210, %v1222
    %v1227 = vmax.f32 %v1211, %v1218
    %v1228 = vmax.f32 %v1212, %v1222
    %v1229 = vmax.f32 %v1213, %v1218
    %v1230 = vmax.f32 %v1214, %v1222
    %1231 = vset.pattern.permute.xlu0 14
    %1232 = vperm.xlu0 %1231, %v667
    %v1233 = vpop.permute.xlu0 %1232
    %1234 = vset.pattern.permute.xlu0 14
    %1235 = vperm.xlu0 %1234, %v668
    %v1236 = vpop.permute.xlu0 %1235
    %1237 = vset.pattern.permute.xlu0 14
    %1238 = vperm.xlu0 %1237, %v669
    %v1239 = vpop.permute.xlu0 %1238
    %1240 = vset.pattern.permute.xlu0 14
    %1241 = vperm.xlu0 %1240, %v670
    %v1242 = vpop.permute.xlu0 %1241
    %vm1243 = vcmp.eq.s32.totalorder %v1233, 1
    %vm1244 = vcmp.eq.s32.totalorder %v1236, 1
    %vm1245 = vcmp.eq.s32.totalorder %v1239, 1
    %vm1246 = vcmp.eq.s32.totalorder %v1242, 1
    %v1247 = vsel %vm1243, %v1223, %v1207
    %v1248 = vsel %vm1243, %v1224, %v1208
    %v1249 = vsel %vm1244, %v1225, %v1209
    %v1250 = vsel %vm1244, %v1226, %v1210
    %v1251 = vsel %vm1245, %v1227, %v1211
    %v1252 = vsel %vm1245, %v1228, %v1212
    %v1253 = vsel %vm1246, %v1229, %v1213
    %v1254 = vsel %vm1246, %v1230, %v1214
    %v1255 = vlaneseq
    %v1256 = vshrl.u32 %v1255, 7
    %v1257 = vsub.s32 7, %v1256
    %v1258 = vrot.slane %v462, %v1257
    %v1259 = vlaneseq
    %v1260 = vshrl.u32 %v1259, 7
    %v1261 = vsub.s32 7, %v1260
    %v1262 = vrot.slane %v650, %v1261
    %v1263 = vmax.f32 %v1247, %v1258
    %v1264 = vmax.f32 %v1248, %v1262
    %v1265 = vmax.f32 %v1249, %v1258
    %v1266 = vmax.f32 %v1250, %v1262
    %v1267 = vmax.f32 %v1251, %v1258
    %v1268 = vmax.f32 %v1252, %v1262
    %v1269 = vmax.f32 %v1253, %v1258
    %v1270 = vmax.f32 %v1254, %v1262
    %1271 = vset.pattern.permute.xlu0 15
    %1272 = vperm.xlu0 %1271, %v667
    %v1273 = vpop.permute.xlu0 %1272
    %1274 = vset.pattern.permute.xlu0 15
    %1275 = vperm.xlu0 %1274, %v668
    %v1276 = vpop.permute.xlu0 %1275
    %1277 = vset.pattern.permute.xlu0 15
    %1278 = vperm.xlu0 %1277, %v669
    %v1279 = vpop.permute.xlu0 %1278
    %1280 = vset.pattern.permute.xlu0 15
    %1281 = vperm.xlu0 %1280, %v670
    %v1282 = vpop.permute.xlu0 %1281
    %vm1283 = vcmp.eq.s32.totalorder %v1273, 1
    %vm1284 = vcmp.eq.s32.totalorder %v1276, 1
    %vm1285 = vcmp.eq.s32.totalorder %v1279, 1
    %vm1286 = vcmp.eq.s32.totalorder %v1282, 1
    %v1287 = vsel %vm1283, %v1263, %v1247
    %v1288 = vsel %vm1283, %v1264, %v1248
    %v1289 = vsel %vm1284, %v1265, %v1249
    %v1290 = vsel %vm1284, %v1266, %v1250
    %v1291 = vsel %vm1285, %v1267, %v1251
    %v1292 = vsel %vm1285, %v1268, %v1252
    %v1293 = vsel %vm1286, %v1269, %v1253
    %v1294 = vsel %vm1286, %v1270, %v1254
    %v1295 = vlaneseq
    %v1296 = vshrl.u32 %v1295, 7
    %v1297 = vsub.s32 0, %v1296
    %v1298 = vrot.slane %v467, %v1297
    %v1299 = vlaneseq
    %v1300 = vshrl.u32 %v1299, 7
    %v1301 = vsub.s32 0, %v1300
    %v1302 = vrot.slane %v651, %v1301
    %v1303 = vmax.f32 %v1287, %v1298
    %v1304 = vmax.f32 %v1288, %v1302
    %v1305 = vmax.f32 %v1289, %v1298
    %v1306 = vmax.f32 %v1290, %v1302
    %v1307 = vmax.f32 %v1291, %v1298
    %v1308 = vmax.f32 %v1292, %v1302
    %v1309 = vmax.f32 %v1293, %v1298
    %v1310 = vmax.f32 %v1294, %v1302
    %1311 = vset.pattern.permute.xlu0 16
    %1312 = vperm.xlu0 %1311, %v667
    %v1313 = vpop.permute.xlu0 %1312
    %1314 = vset.pattern.permute.xlu0 16
    %1315 = vperm.xlu0 %1314, %v668
    %v1316 = vpop.permute.xlu0 %1315
    %1317 = vset.pattern.permute.xlu0 16
    %1318 = vperm.xlu0 %1317, %v669
    %v1319 = vpop.permute.xlu0 %1318
    %1320 = vset.pattern.permute.xlu0 16
    %1321 = vperm.xlu0 %1320, %v670
    %v1322 = vpop.permute.xlu0 %1321
    %vm1323 = vcmp.eq.s32.totalorder %v1313, 1
    %vm1324 = vcmp.eq.s32.totalorder %v1316, 1
    %vm1325 = vcmp.eq.s32.totalorder %v1319, 1
    %vm1326 = vcmp.eq.s32.totalorder %v1322, 1
    %v1327 = vsel %vm1323, %v1303, %v1287
    %v1328 = vsel %vm1323, %v1304, %v1288
    %v1329 = vsel %vm1324, %v1305, %v1289
    %v1330 = vsel %vm1324, %v1306, %v1290
    %v1331 = vsel %vm1325, %v1307, %v1291
    %v1332 = vsel %vm1325, %v1308, %v1292
    %v1333 = vsel %vm1326, %v1309, %v1293
    %v1334 = vsel %vm1326, %v1310, %v1294
    %v1335 = vlaneseq
    %v1336 = vshrl.u32 %v1335, 7
    %v1337 = vsub.s32 1, %v1336
    %v1338 = vrot.slane %v467, %v1337
    %v1339 = vlaneseq
    %v1340 = vshrl.u32 %v1339, 7
    %v1341 = vsub.s32 1, %v1340
    %v1342 = vrot.slane %v651, %v1341
    %v1343 = vmax.f32 %v1327, %v1338
    %v1344 = vmax.f32 %v1328, %v1342
    %v1345 = vmax.f32 %v1329, %v1338
    %v1346 = vmax.f32 %v1330, %v1342
    %v1347 = vmax.f32 %v1331, %v1338
    %v1348 = vmax.f32 %v1332, %v1342
    %v1349 = vmax.f32 %v1333, %v1338
    %v1350 = vmax.f32 %v1334, %v1342
    %1351 = vset.pattern.permute.xlu0 17
    %1352 = vperm.xlu0 %1351, %v667
    %v1353 = vpop.permute.xlu0 %1352
    %1354 = vset.pattern.permute.xlu0 17
    %1355 = vperm.xlu0 %1354, %v668
    %v1356 = vpop.permute.xlu0 %1355
    %1357 = vset.pattern.permute.xlu0 17
    %1358 = vperm.xlu0 %1357, %v669
    %v1359 = vpop.permute.xlu0 %1358
    %1360 = vset.pattern.permute.xlu0 17
    %1361 = vperm.xlu0 %1360, %v670
    %v1362 = vpop.permute.xlu0 %1361
    %vm1363 = vcmp.eq.s32.totalorder %v1353, 1
    %vm1364 = vcmp.eq.s32.totalorder %v1356, 1
    %vm1365 = vcmp.eq.s32.totalorder %v1359, 1
    %vm1366 = vcmp.eq.s32.totalorder %v1362, 1
    %v1367 = vsel %vm1363, %v1343, %v1327
    %v1368 = vsel %vm1363, %v1344, %v1328
    %v1369 = vsel %vm1364, %v1345, %v1329
    %v1370 = vsel %vm1364, %v1346, %v1330
    %v1371 = vsel %vm1365, %v1347, %v1331
    %v1372 = vsel %vm1365, %v1348, %v1332
    %v1373 = vsel %vm1366, %v1349, %v1333
    %v1374 = vsel %vm1366, %v1350, %v1334
    %v1375 = vlaneseq
    %v1376 = vshrl.u32 %v1375, 7
    %v1377 = vsub.s32 2, %v1376
    %v1378 = vrot.slane %v467, %v1377
    %v1379 = vlaneseq
    %v1380 = vshrl.u32 %v1379, 7
    %v1381 = vsub.s32 2, %v1380
    %v1382 = vrot.slane %v651, %v1381
    %v1383 = vmax.f32 %v1367, %v1378
    %v1384 = vmax.f32 %v1368, %v1382
    %v1385 = vmax.f32 %v1369, %v1378
    %v1386 = vmax.f32 %v1370, %v1382
    %v1387 = vmax.f32 %v1371, %v1378
    %v1388 = vmax.f32 %v1372, %v1382
    %v1389 = vmax.f32 %v1373, %v1378
    %v1390 = vmax.f32 %v1374, %v1382
    %1391 = vset.pattern.permute.xlu0 18
    %1392 = vperm.xlu0 %1391, %v667
    %v1393 = vpop.permute.xlu0 %1392
    %1394 = vset.pattern.permute.xlu0 18
    %1395 = vperm.xlu0 %1394, %v668
    %v1396 = vpop.permute.xlu0 %1395
    %1397 = vset.pattern.permute.xlu0 18
    %1398 = vperm.xlu0 %1397, %v669
    %v1399 = vpop.permute.xlu0 %1398
    %1400 = vset.pattern.permute.xlu0 18
    %1401 = vperm.xlu0 %1400, %v670
    %v1402 = vpop.permute.xlu0 %1401
    %vm1403 = vcmp.eq.s32.totalorder %v1393, 1
    %vm1404 = vcmp.eq.s32.totalorder %v1396, 1
    %vm1405 = vcmp.eq.s32.totalorder %v1399, 1
    %vm1406 = vcmp.eq.s32.totalorder %v1402, 1
    %v1407 = vsel %vm1403, %v1383, %v1367
    %v1408 = vsel %vm1403, %v1384, %v1368
    %v1409 = vsel %vm1404, %v1385, %v1369
    %v1410 = vsel %vm1404, %v1386, %v1370
    %v1411 = vsel %vm1405, %v1387, %v1371
    %v1412 = vsel %vm1405, %v1388, %v1372
    %v1413 = vsel %vm1406, %v1389, %v1373
    %v1414 = vsel %vm1406, %v1390, %v1374
    %v1415 = vlaneseq
    %v1416 = vshrl.u32 %v1415, 7
    %v1417 = vsub.s32 3, %v1416
    %v1418 = vrot.slane %v467, %v1417
    %v1419 = vlaneseq
    %v1420 = vshrl.u32 %v1419, 7
    %v1421 = vsub.s32 3, %v1420
    %v1422 = vrot.slane %v651, %v1421
    %v1423 = vmax.f32 %v1407, %v1418
    %v1424 = vmax.f32 %v1408, %v1422
    %v1425 = vmax.f32 %v1409, %v1418
    %v1426 = vmax.f32 %v1410, %v1422
    %v1427 = vmax.f32 %v1411, %v1418
    %v1428 = vmax.f32 %v1412, %v1422
    %v1429 = vmax.f32 %v1413, %v1418
    %v1430 = vmax.f32 %v1414, %v1422
    %1431 = vset.pattern.permute.xlu0 19
    %1432 = vperm.xlu0 %1431, %v667
    %v1433 = vpop.permute.xlu0 %1432
    %1434 = vset.pattern.permute.xlu0 19
    %1435 = vperm.xlu0 %1434, %v668
    %v1436 = vpop.permute.xlu0 %1435
    %1437 = vset.pattern.permute.xlu0 19
    %1438 = vperm.xlu0 %1437, %v669
    %v1439 = vpop.permute.xlu0 %1438
    %1440 = vset.pattern.permute.xlu0 19
    %1441 = vperm.xlu0 %1440, %v670
    %v1442 = vpop.permute.xlu0 %1441
    %vm1443 = vcmp.eq.s32.totalorder %v1433, 1
    %vm1444 = vcmp.eq.s32.totalorder %v1436, 1
    %vm1445 = vcmp.eq.s32.totalorder %v1439, 1
    %vm1446 = vcmp.eq.s32.totalorder %v1442, 1
    %v1447 = vsel %vm1443, %v1423, %v1407
    %v1448 = vsel %vm1443, %v1424, %v1408
    %v1449 = vsel %vm1444, %v1425, %v1409
    %v1450 = vsel %vm1444, %v1426, %v1410
    %v1451 = vsel %vm1445, %v1427, %v1411
    %v1452 = vsel %vm1445, %v1428, %v1412
    %v1453 = vsel %vm1446, %v1429, %v1413
    %v1454 = vsel %vm1446, %v1430, %v1414
    %v1455 = vlaneseq
    %v1456 = vshrl.u32 %v1455, 7
    %v1457 = vsub.s32 4, %v1456
    %v1458 = vrot.slane %v467, %v1457
    %v1459 = vlaneseq
    %v1460 = vshrl.u32 %v1459, 7
    %v1461 = vsub.s32 4, %v1460
    %v1462 = vrot.slane %v651, %v1461
    %v1463 = vmax.f32 %v1447, %v1458
    %v1464 = vmax.f32 %v1448, %v1462
    %v1465 = vmax.f32 %v1449, %v1458
    %v1466 = vmax.f32 %v1450, %v1462
    %v1467 = vmax.f32 %v1451, %v1458
    %v1468 = vmax.f32 %v1452, %v1462
    %v1469 = vmax.f32 %v1453, %v1458
    %v1470 = vmax.f32 %v1454, %v1462
    %1471 = vset.pattern.permute.xlu0 20
    %1472 = vperm.xlu0 %1471, %v667
    %v1473 = vpop.permute.xlu0 %1472
    %1474 = vset.pattern.permute.xlu0 20
    %1475 = vperm.xlu0 %1474, %v668
    %v1476 = vpop.permute.xlu0 %1475
    %1477 = vset.pattern.permute.xlu0 20
    %1478 = vperm.xlu0 %1477, %v669
    %v1479 = vpop.permute.xlu0 %1478
    %1480 = vset.pattern.permute.xlu0 20
    %1481 = vperm.xlu0 %1480, %v670
    %v1482 = vpop.permute.xlu0 %1481
    %vm1483 = vcmp.eq.s32.totalorder %v1473, 1
    %vm1484 = vcmp.eq.s32.totalorder %v1476, 1
    %vm1485 = vcmp.eq.s32.totalorder %v1479, 1
    %vm1486 = vcmp.eq.s32.totalorder %v1482, 1
    %v1487 = vsel %vm1483, %v1463, %v1447
    %v1488 = vsel %vm1483, %v1464, %v1448
    %v1489 = vsel %vm1484, %v1465, %v1449
    %v1490 = vsel %vm1484, %v1466, %v1450
    %v1491 = vsel %vm1485, %v1467, %v1451
    %v1492 = vsel %vm1485, %v1468, %v1452
    %v1493 = vsel %vm1486, %v1469, %v1453
    %v1494 = vsel %vm1486, %v1470, %v1454
    %v1495 = vlaneseq
    %v1496 = vshrl.u32 %v1495, 7
    %v1497 = vsub.s32 5, %v1496
    %v1498 = vrot.slane %v467, %v1497
    %v1499 = vlaneseq
    %v1500 = vshrl.u32 %v1499, 7
    %v1501 = vsub.s32 5, %v1500
    %v1502 = vrot.slane %v651, %v1501
    %v1503 = vmax.f32 %v1487, %v1498
    %v1504 = vmax.f32 %v1488, %v1502
    %v1505 = vmax.f32 %v1489, %v1498
    %v1506 = vmax.f32 %v1490, %v1502
    %v1507 = vmax.f32 %v1491, %v1498
    %v1508 = vmax.f32 %v1492, %v1502
    %v1509 = vmax.f32 %v1493, %v1498
    %v1510 = vmax.f32 %v1494, %v1502
    %1511 = vset.pattern.permute.xlu0 21
    %1512 = vperm.xlu0 %1511, %v667
    %v1513 = vpop.permute.xlu0 %1512
    %1514 = vset.pattern.permute.xlu0 21
    %1515 = vperm.xlu0 %1514, %v668
    %v1516 = vpop.permute.xlu0 %1515
    %1517 = vset.pattern.permute.xlu0 21
    %1518 = vperm.xlu0 %1517, %v669
    %v1519 = vpop.permute.xlu0 %1518
    %1520 = vset.pattern.permute.xlu0 21
    %1521 = vperm.xlu0 %1520, %v670
    %v1522 = vpop.permute.xlu0 %1521
    %vm1523 = vcmp.eq.s32.totalorder %v1513, 1
    %vm1524 = vcmp.eq.s32.totalorder %v1516, 1
    %vm1525 = vcmp.eq.s32.totalorder %v1519, 1
    %vm1526 = vcmp.eq.s32.totalorder %v1522, 1
    %v1527 = vsel %vm1523, %v1503, %v1487
    %v1528 = vsel %vm1523, %v1504, %v1488
    %v1529 = vsel %vm1524, %v1505, %v1489
    %v1530 = vsel %vm1524, %v1506, %v1490
    %v1531 = vsel %vm1525, %v1507, %v1491
    %v1532 = vsel %vm1525, %v1508, %v1492
    %v1533 = vsel %vm1526, %v1509, %v1493
    %v1534 = vsel %vm1526, %v1510, %v1494
    %v1535 = vlaneseq
    %v1536 = vshrl.u32 %v1535, 7
    %v1537 = vsub.s32 6, %v1536
    %v1538 = vrot.slane %v467, %v1537
    %v1539 = vlaneseq
    %v1540 = vshrl.u32 %v1539, 7
    %v1541 = vsub.s32 6, %v1540
    %v1542 = vrot.slane %v651, %v1541
    %v1543 = vmax.f32 %v1527, %v1538
    %v1544 = vmax.f32 %v1528, %v1542
    %v1545 = vmax.f32 %v1529, %v1538
    %v1546 = vmax.f32 %v1530, %v1542
    %v1547 = vmax.f32 %v1531, %v1538
    %v1548 = vmax.f32 %v1532, %v1542
    %v1549 = vmax.f32 %v1533, %v1538
    %v1550 = vmax.f32 %v1534, %v1542
    %1551 = vset.pattern.permute.xlu0 22
    %1552 = vperm.xlu0 %1551, %v667
    %v1553 = vpop.permute.xlu0 %1552
    %1554 = vset.pattern.permute.xlu0 22
    %1555 = vperm.xlu0 %1554, %v668
    %v1556 = vpop.permute.xlu0 %1555
    %1557 = vset.pattern.permute.xlu0 22
    %1558 = vperm.xlu0 %1557, %v669
    %v1559 = vpop.permute.xlu0 %1558
    %1560 = vset.pattern.permute.xlu0 22
    %1561 = vperm.xlu0 %1560, %v670
    %v1562 = vpop.permute.xlu0 %1561
    %vm1563 = vcmp.eq.s32.totalorder %v1553, 1
    %vm1564 = vcmp.eq.s32.totalorder %v1556, 1
    %vm1565 = vcmp.eq.s32.totalorder %v1559, 1
    %vm1566 = vcmp.eq.s32.totalorder %v1562, 1
    %v1567 = vsel %vm1563, %v1543, %v1527
    %v1568 = vsel %vm1563, %v1544, %v1528
    %v1569 = vsel %vm1564, %v1545, %v1529
    %v1570 = vsel %vm1564, %v1546, %v1530
    %v1571 = vsel %vm1565, %v1547, %v1531
    %v1572 = vsel %vm1565, %v1548, %v1532
    %v1573 = vsel %vm1566, %v1549, %v1533
    %v1574 = vsel %vm1566, %v1550, %v1534
    %v1575 = vlaneseq
    %v1576 = vshrl.u32 %v1575, 7
    %v1577 = vsub.s32 7, %v1576
    %v1578 = vrot.slane %v467, %v1577
    %v1579 = vlaneseq
    %v1580 = vshrl.u32 %v1579, 7
    %v1581 = vsub.s32 7, %v1580
    %v1582 = vrot.slane %v651, %v1581
    %v1583 = vmax.f32 %v1567, %v1578
    %v1584 = vmax.f32 %v1568, %v1582
    %v1585 = vmax.f32 %v1569, %v1578
    %v1586 = vmax.f32 %v1570, %v1582
    %v1587 = vmax.f32 %v1571, %v1578
    %v1588 = vmax.f32 %v1572, %v1582
    %v1589 = vmax.f32 %v1573, %v1578
    %v1590 = vmax.f32 %v1574, %v1582
    %1591 = vset.pattern.permute.xlu0 23
    %1592 = vperm.xlu0 %1591, %v667
    %v1593 = vpop.permute.xlu0 %1592
    %1594 = vset.pattern.permute.xlu0 23
    %1595 = vperm.xlu0 %1594, %v668
    %v1596 = vpop.permute.xlu0 %1595
    %1597 = vset.pattern.permute.xlu0 23
    %1598 = vperm.xlu0 %1597, %v669
    %v1599 = vpop.permute.xlu0 %1598
    %1600 = vset.pattern.permute.xlu0 23
    %1601 = vperm.xlu0 %1600, %v670
    %v1602 = vpop.permute.xlu0 %1601
    %vm1603 = vcmp.eq.s32.totalorder %v1593, 1
    %vm1604 = vcmp.eq.s32.totalorder %v1596, 1
    %vm1605 = vcmp.eq.s32.totalorder %v1599, 1
    %vm1606 = vcmp.eq.s32.totalorder %v1602, 1
    %v1607 = vsel %vm1603, %v1583, %v1567
    %v1608 = vsel %vm1603, %v1584, %v1568
    %v1609 = vsel %vm1604, %v1585, %v1569
    %v1610 = vsel %vm1604, %v1586, %v1570
    %v1611 = vsel %vm1605, %v1587, %v1571
    %v1612 = vsel %vm1605, %v1588, %v1572
    %v1613 = vsel %vm1606, %v1589, %v1573
    %v1614 = vsel %vm1606, %v1590, %v1574
    %v1615 = vlaneseq
    %v1616 = vshrl.u32 %v1615, 7
    %v1617 = vsub.s32 0, %v1616
    %v1618 = vrot.slane %v472, %v1617
    %v1619 = vlaneseq
    %v1620 = vshrl.u32 %v1619, 7
    %v1621 = vsub.s32 0, %v1620
    %v1622 = vrot.slane %v652, %v1621
    %v1623 = vmax.f32 %v1607, %v1618
    %v1624 = vmax.f32 %v1608, %v1622
    %v1625 = vmax.f32 %v1609, %v1618
    %v1626 = vmax.f32 %v1610, %v1622
    %v1627 = vmax.f32 %v1611, %v1618
    %v1628 = vmax.f32 %v1612, %v1622
    %v1629 = vmax.f32 %v1613, %v1618
    %v1630 = vmax.f32 %v1614, %v1622
    %1631 = vset.pattern.permute.xlu0 24
    %1632 = vperm.xlu0 %1631, %v667
    %v1633 = vpop.permute.xlu0 %1632
    %1634 = vset.pattern.permute.xlu0 24
    %1635 = vperm.xlu0 %1634, %v668
    %v1636 = vpop.permute.xlu0 %1635
    %1637 = vset.pattern.permute.xlu0 24
    %1638 = vperm.xlu0 %1637, %v669
    %v1639 = vpop.permute.xlu0 %1638
    %1640 = vset.pattern.permute.xlu0 24
    %1641 = vperm.xlu0 %1640, %v670
    %v1642 = vpop.permute.xlu0 %1641
    %vm1643 = vcmp.eq.s32.totalorder %v1633, 1
    %vm1644 = vcmp.eq.s32.totalorder %v1636, 1
    %vm1645 = vcmp.eq.s32.totalorder %v1639, 1
    %vm1646 = vcmp.eq.s32.totalorder %v1642, 1
    %v1647 = vsel %vm1643, %v1623, %v1607
    %v1648 = vsel %vm1643, %v1624, %v1608
    %v1649 = vsel %vm1644, %v1625, %v1609
    %v1650 = vsel %vm1644, %v1626, %v1610
    %v1651 = vsel %vm1645, %v1627, %v1611
    %v1652 = vsel %vm1645, %v1628, %v1612
    %v1653 = vsel %vm1646, %v1629, %v1613
    %v1654 = vsel %vm1646, %v1630, %v1614
    %v1655 = vlaneseq
    %v1656 = vshrl.u32 %v1655, 7
    %v1657 = vsub.s32 1, %v1656
    %v1658 = vrot.slane %v472, %v1657
    %v1659 = vlaneseq
    %v1660 = vshrl.u32 %v1659, 7
    %v1661 = vsub.s32 1, %v1660
    %v1662 = vrot.slane %v652, %v1661
    %v1663 = vmax.f32 %v1647, %v1658
    %v1664 = vmax.f32 %v1648, %v1662
    %v1665 = vmax.f32 %v1649, %v1658
    %v1666 = vmax.f32 %v1650, %v1662
    %v1667 = vmax.f32 %v1651, %v1658
    %v1668 = vmax.f32 %v1652, %v1662
    %v1669 = vmax.f32 %v1653, %v1658
    %v1670 = vmax.f32 %v1654, %v1662
    %1671 = vset.pattern.permute.xlu0 25
    %1672 = vperm.xlu0 %1671, %v667
    %v1673 = vpop.permute.xlu0 %1672
    %1674 = vset.pattern.permute.xlu0 25
    %1675 = vperm.xlu0 %1674, %v668
    %v1676 = vpop.permute.xlu0 %1675
    %1677 = vset.pattern.permute.xlu0 25
    %1678 = vperm.xlu0 %1677, %v669
    %v1679 = vpop.permute.xlu0 %1678
    %1680 = vset.pattern.permute.xlu0 25
    %1681 = vperm.xlu0 %1680, %v670
    %v1682 = vpop.permute.xlu0 %1681
    %vm1683 = vcmp.eq.s32.totalorder %v1673, 1
    %vm1684 = vcmp.eq.s32.totalorder %v1676, 1
    %vm1685 = vcmp.eq.s32.totalorder %v1679, 1
    %vm1686 = vcmp.eq.s32.totalorder %v1682, 1
    %v1687 = vsel %vm1683, %v1663, %v1647
    %v1688 = vsel %vm1683, %v1664, %v1648
    %v1689 = vsel %vm1684, %v1665, %v1649
    %v1690 = vsel %vm1684, %v1666, %v1650
    %v1691 = vsel %vm1685, %v1667, %v1651
    %v1692 = vsel %vm1685, %v1668, %v1652
    %v1693 = vsel %vm1686, %v1669, %v1653
    %v1694 = vsel %vm1686, %v1670, %v1654
    %v1695 = vlaneseq
    %v1696 = vshrl.u32 %v1695, 7
    %v1697 = vsub.s32 2, %v1696
    %v1698 = vrot.slane %v472, %v1697
    %v1699 = vlaneseq
    %v1700 = vshrl.u32 %v1699, 7
    %v1701 = vsub.s32 2, %v1700
    %v1702 = vrot.slane %v652, %v1701
    %v1703 = vmax.f32 %v1687, %v1698
    %v1704 = vmax.f32 %v1688, %v1702
    %v1705 = vmax.f32 %v1689, %v1698
    %v1706 = vmax.f32 %v1690, %v1702
    %v1707 = vmax.f32 %v1691, %v1698
    %v1708 = vmax.f32 %v1692, %v1702
    %v1709 = vmax.f32 %v1693, %v1698
    %v1710 = vmax.f32 %v1694, %v1702
    %1711 = vset.pattern.permute.xlu0 26
    %1712 = vperm.xlu0 %1711, %v667
    %v1713 = vpop.permute.xlu0 %1712
    %1714 = vset.pattern.permute.xlu0 26
    %1715 = vperm.xlu0 %1714, %v668
    %v1716 = vpop.permute.xlu0 %1715
    %1717 = vset.pattern.permute.xlu0 26
    %1718 = vperm.xlu0 %1717, %v669
    %v1719 = vpop.permute.xlu0 %1718
    %1720 = vset.pattern.permute.xlu0 26
    %1721 = vperm.xlu0 %1720, %v670
    %v1722 = vpop.permute.xlu0 %1721
    %vm1723 = vcmp.eq.s32.totalorder %v1713, 1
    %vm1724 = vcmp.eq.s32.totalorder %v1716, 1
    %vm1725 = vcmp.eq.s32.totalorder %v1719, 1
    %vm1726 = vcmp.eq.s32.totalorder %v1722, 1
    %v1727 = vsel %vm1723, %v1703, %v1687
    %v1728 = vsel %vm1723, %v1704, %v1688
    %v1729 = vsel %vm1724, %v1705, %v1689
    %v1730 = vsel %vm1724, %v1706, %v1690
    %v1731 = vsel %vm1725, %v1707, %v1691
    %v1732 = vsel %vm1725, %v1708, %v1692
    %v1733 = vsel %vm1726, %v1709, %v1693
    %v1734 = vsel %vm1726, %v1710, %v1694
    %v1735 = vlaneseq
    %v1736 = vshrl.u32 %v1735, 7
    %v1737 = vsub.s32 3, %v1736
    %v1738 = vrot.slane %v472, %v1737
    %v1739 = vlaneseq
    %v1740 = vshrl.u32 %v1739, 7
    %v1741 = vsub.s32 3, %v1740
    %v1742 = vrot.slane %v652, %v1741
    %v1743 = vmax.f32 %v1727, %v1738
    %v1744 = vmax.f32 %v1728, %v1742
    %v1745 = vmax.f32 %v1729, %v1738
    %v1746 = vmax.f32 %v1730, %v1742
    %v1747 = vmax.f32 %v1731, %v1738
    %v1748 = vmax.f32 %v1732, %v1742
    %v1749 = vmax.f32 %v1733, %v1738
    %v1750 = vmax.f32 %v1734, %v1742
    %1751 = vset.pattern.permute.xlu0 27
    %1752 = vperm.xlu0 %1751, %v667
    %v1753 = vpop.permute.xlu0 %1752
    %1754 = vset.pattern.permute.xlu0 27
    %1755 = vperm.xlu0 %1754, %v668
    %v1756 = vpop.permute.xlu0 %1755
    %1757 = vset.pattern.permute.xlu0 27
    %1758 = vperm.xlu0 %1757, %v669
    %v1759 = vpop.permute.xlu0 %1758
    %1760 = vset.pattern.permute.xlu0 27
    %1761 = vperm.xlu0 %1760, %v670
    %v1762 = vpop.permute.xlu0 %1761
    %vm1763 = vcmp.eq.s32.totalorder %v1753, 1
    %vm1764 = vcmp.eq.s32.totalorder %v1756, 1
    %vm1765 = vcmp.eq.s32.totalorder %v1759, 1
    %vm1766 = vcmp.eq.s32.totalorder %v1762, 1
    %v1767 = vsel %vm1763, %v1743, %v1727
    %v1768 = vsel %vm1763, %v1744, %v1728
    %v1769 = vsel %vm1764, %v1745, %v1729
    %v1770 = vsel %vm1764, %v1746, %v1730
    %v1771 = vsel %vm1765, %v1747, %v1731
    %v1772 = vsel %vm1765, %v1748, %v1732
    %v1773 = vsel %vm1766, %v1749, %v1733
    %v1774 = vsel %vm1766, %v1750, %v1734
    %v1775 = vlaneseq
    %v1776 = vshrl.u32 %v1775, 7
    %v1777 = vsub.s32 4, %v1776
    %v1778 = vrot.slane %v472, %v1777
    %v1779 = vlaneseq
    %v1780 = vshrl.u32 %v1779, 7
    %v1781 = vsub.s32 4, %v1780
    %v1782 = vrot.slane %v652, %v1781
    %v1783 = vmax.f32 %v1767, %v1778
    %v1784 = vmax.f32 %v1768, %v1782
    %v1785 = vmax.f32 %v1769, %v1778
    %v1786 = vmax.f32 %v1770, %v1782
    %v1787 = vmax.f32 %v1771, %v1778
    %v1788 = vmax.f32 %v1772, %v1782
    %v1789 = vmax.f32 %v1773, %v1778
    %v1790 = vmax.f32 %v1774, %v1782
    %1791 = vset.pattern.permute.xlu0 28
    %1792 = vperm.xlu0 %1791, %v667
    %v1793 = vpop.permute.xlu0 %1792
    %1794 = vset.pattern.permute.xlu0 28
    %1795 = vperm.xlu0 %1794, %v668
    %v1796 = vpop.permute.xlu0 %1795
    %1797 = vset.pattern.permute.xlu0 28
    %1798 = vperm.xlu0 %1797, %v669
    %v1799 = vpop.permute.xlu0 %1798
    %1800 = vset.pattern.permute.xlu0 28
    %1801 = vperm.xlu0 %1800, %v670
    %v1802 = vpop.permute.xlu0 %1801
    %vm1803 = vcmp.eq.s32.totalorder %v1793, 1
    %vm1804 = vcmp.eq.s32.totalorder %v1796, 1
    %vm1805 = vcmp.eq.s32.totalorder %v1799, 1
    %vm1806 = vcmp.eq.s32.totalorder %v1802, 1
    %v1807 = vsel %vm1803, %v1783, %v1767
    %v1808 = vsel %vm1803, %v1784, %v1768
    %v1809 = vsel %vm1804, %v1785, %v1769
    %v1810 = vsel %vm1804, %v1786, %v1770
    %v1811 = vsel %vm1805, %v1787, %v1771
    %v1812 = vsel %vm1805, %v1788, %v1772
    %v1813 = vsel %vm1806, %v1789, %v1773
    %v1814 = vsel %vm1806, %v1790, %v1774
    %v1815 = vlaneseq
    %v1816 = vshrl.u32 %v1815, 7
    %v1817 = vsub.s32 5, %v1816
    %v1818 = vrot.slane %v472, %v1817
    %v1819 = vlaneseq
    %v1820 = vshrl.u32 %v1819, 7
    %v1821 = vsub.s32 5, %v1820
    %v1822 = vrot.slane %v652, %v1821
    %v1823 = vmax.f32 %v1807, %v1818
    %v1824 = vmax.f32 %v1808, %v1822
    %v1825 = vmax.f32 %v1809, %v1818
    %v1826 = vmax.f32 %v1810, %v1822
    %v1827 = vmax.f32 %v1811, %v1818
    %v1828 = vmax.f32 %v1812, %v1822
    %v1829 = vmax.f32 %v1813, %v1818
    %v1830 = vmax.f32 %v1814, %v1822
    %1831 = vset.pattern.permute.xlu0 29
    %1832 = vperm.xlu0 %1831, %v667
    %v1833 = vpop.permute.xlu0 %1832
    %1834 = vset.pattern.permute.xlu0 29
    %1835 = vperm.xlu0 %1834, %v668
    %v1836 = vpop.permute.xlu0 %1835
    %1837 = vset.pattern.permute.xlu0 29
    %1838 = vperm.xlu0 %1837, %v669
    %v1839 = vpop.permute.xlu0 %1838
    %1840 = vset.pattern.permute.xlu0 29
    %1841 = vperm.xlu0 %1840, %v670
    %v1842 = vpop.permute.xlu0 %1841
    %vm1843 = vcmp.eq.s32.totalorder %v1833, 1
    %vm1844 = vcmp.eq.s32.totalorder %v1836, 1
    %vm1845 = vcmp.eq.s32.totalorder %v1839, 1
    %vm1846 = vcmp.eq.s32.totalorder %v1842, 1
    %v1847 = vsel %vm1843, %v1823, %v1807
    %v1848 = vsel %vm1843, %v1824, %v1808
    %v1849 = vsel %vm1844, %v1825, %v1809
    %v1850 = vsel %vm1844, %v1826, %v1810
    %v1851 = vsel %vm1845, %v1827, %v1811
    %v1852 = vsel %vm1845, %v1828, %v1812
    %v1853 = vsel %vm1846, %v1829, %v1813
    %v1854 = vsel %vm1846, %v1830, %v1814
    %v1855 = vlaneseq
    %v1856 = vshrl.u32 %v1855, 7
    %v1857 = vsub.s32 6, %v1856
    %v1858 = vrot.slane %v472, %v1857
    %v1859 = vlaneseq
    %v1860 = vshrl.u32 %v1859, 7
    %v1861 = vsub.s32 6, %v1860
    %v1862 = vrot.slane %v652, %v1861
    %v1863 = vmax.f32 %v1847, %v1858
    %v1864 = vmax.f32 %v1848, %v1862
    %v1865 = vmax.f32 %v1849, %v1858
    %v1866 = vmax.f32 %v1850, %v1862
    %v1867 = vmax.f32 %v1851, %v1858
    %v1868 = vmax.f32 %v1852, %v1862
    %v1869 = vmax.f32 %v1853, %v1858
    %v1870 = vmax.f32 %v1854, %v1862
    %1871 = vset.pattern.permute.xlu0 30
    %1872 = vperm.xlu0 %1871, %v667
    %v1873 = vpop.permute.xlu0 %1872
    %1874 = vset.pattern.permute.xlu0 30
    %1875 = vperm.xlu0 %1874, %v668
    %v1876 = vpop.permute.xlu0 %1875
    %1877 = vset.pattern.permute.xlu0 30
    %1878 = vperm.xlu0 %1877, %v669
    %v1879 = vpop.permute.xlu0 %1878
    %1880 = vset.pattern.permute.xlu0 30
    %1881 = vperm.xlu0 %1880, %v670
    %v1882 = vpop.permute.xlu0 %1881
    %vm1883 = vcmp.eq.s32.totalorder %v1873, 1
    %vm1884 = vcmp.eq.s32.totalorder %v1876, 1
    %vm1885 = vcmp.eq.s32.totalorder %v1879, 1
    %vm1886 = vcmp.eq.s32.totalorder %v1882, 1
    %v1887 = vsel %vm1883, %v1863, %v1847
    %v1888 = vsel %vm1883, %v1864, %v1848
    %v1889 = vsel %vm1884, %v1865, %v1849
    %v1890 = vsel %vm1884, %v1866, %v1850
    %v1891 = vsel %vm1885, %v1867, %v1851
    %v1892 = vsel %vm1885, %v1868, %v1852
    %v1893 = vsel %vm1886, %v1869, %v1853
    %v1894 = vsel %vm1886, %v1870, %v1854
    %v1895 = vlaneseq
    %v1896 = vshrl.u32 %v1895, 7
    %v1897 = vsub.s32 7, %v1896
    %v1898 = vrot.slane %v472, %v1897
    %v1899 = vlaneseq
    %v1900 = vshrl.u32 %v1899, 7
    %v1901 = vsub.s32 7, %v1900
    %v1902 = vrot.slane %v652, %v1901
    %v1903 = vmax.f32 %v1887, %v1898
    %v1904 = vmax.f32 %v1888, %v1902
    %v1905 = vmax.f32 %v1889, %v1898
    %v1906 = vmax.f32 %v1890, %v1902
    %v1907 = vmax.f32 %v1891, %v1898
    %v1908 = vmax.f32 %v1892, %v1902
    %v1909 = vmax.f32 %v1893, %v1898
    %v1910 = vmax.f32 %v1894, %v1902
    %1911 = vset.pattern.permute.xlu0 31
    %1912 = vperm.xlu0 %1911, %v667
    %v1913 = vpop.permute.xlu0 %1912
    %1914 = vset.pattern.permute.xlu0 31
    %1915 = vperm.xlu0 %1914, %v668
    %v1916 = vpop.permute.xlu0 %1915
    %1917 = vset.pattern.permute.xlu0 31
    %1918 = vperm.xlu0 %1917, %v669
    %v1919 = vpop.permute.xlu0 %1918
    %1920 = vset.pattern.permute.xlu0 31
    %1921 = vperm.xlu0 %1920, %v670
    %v1922 = vpop.permute.xlu0 %1921
    %vm1923 = vcmp.eq.s32.totalorder %v1913, 1
    %vm1924 = vcmp.eq.s32.totalorder %v1916, 1
    %vm1925 = vcmp.eq.s32.totalorder %v1919, 1
    %vm1926 = vcmp.eq.s32.totalorder %v1922, 1
    %v1927 = vsel %vm1923, %v1903, %v1887
    %v1928 = vsel %vm1923, %v1904, %v1888
    %v1929 = vsel %vm1924, %v1905, %v1889
    %v1930 = vsel %vm1924, %v1906, %v1890
    %v1931 = vsel %vm1925, %v1907, %v1891
    %v1932 = vsel %vm1925, %v1908, %v1892
    %v1933 = vsel %vm1926, %v1909, %v1893
    %v1934 = vsel %vm1926, %v1910, %v1894
    %v1935 = vsel %vm488, 1, 0
    %v1936 = vsel %vm489, 1, 0
    %v1937 = vsel %vm490, 1, 0
    %v1938 = vsel %vm491, 1, 0
    %vm1939 = vcmp.eq.s32.totalorder %v1935, 1
    %vm1940 = vcmp.eq.s32.totalorder %v1936, 1
    %vm1941 = vcmp.eq.s32.totalorder %v1937, 1
    %vm1942 = vcmp.eq.s32.totalorder %v1938, 1
    %v1943 = vsel %vm1939, %v1927, 0.0
    %v1944 = vsel %vm1939, %v1928, 0.0
    %v1945 = vsel %vm1940, %v1929, 0.0
    %v1946 = vsel %vm1940, %v1930, 0.0
    %v1947 = vsel %vm1941, %v1931, 0.0
    %v1948 = vsel %vm1941, %v1932, 0.0
    %v1949 = vsel %vm1942, %v1933, 0.0
    %v1950 = vsel %vm1942, %v1934, 0.0
    %v1951 = vsub.f32 0.0, %v1944
    %v1952 = vsub.f32 0.0, %v1946
    %v1953 = vsub.f32 0.0, %v1948
    %v1954 = vsub.f32 0.0, %v1950
    %v1955 = vmul.f32 %v597, %v516
    %v1956 = vmul.f32 %v1943, %v516
    %v1957 = vmul.f32 %v1951, %v516
    %v1958 = vmul.f32 %v627, %v516
    %v1959 = vmul.f32 %v598, %v517
    %v1960 = vmul.f32 %v1945, %v517
    %v1961 = vmul.f32 %v1952, %v517
    %v1962 = vmul.f32 %v634, %v517
    %v1963 = vmul.f32 %v599, %v518
    %v1964 = vmul.f32 %v1947, %v518
    %v1965 = vmul.f32 %v1953, %v518
    %v1966 = vmul.f32 %v641, %v518
    %v1967 = vmul.f32 %v600, %v519
    %v1968 = vmul.f32 %v1949, %v519
    %v1969 = vmul.f32 %v1954, %v519
    %v1970 = vmul.f32 %v648, %v519
    %v1971 = vmul.f32 %v597, %v521
    %v1972 = vmul.f32 %v1943, %v521
    %v1973 = vmul.f32 %v1951, %v521
    %v1974 = vmul.f32 %v627, %v521
    %v1975 = vmul.f32 %v598, %v523
    %v1976 = vmul.f32 %v1945, %v523
    %v1977 = vmul.f32 %v1952, %v523
    %v1978 = vmul.f32 %v634, %v523
    %v1979 = vmul.f32 %v599, %v525
    %v1980 = vmul.f32 %v1947, %v525
    %v1981 = vmul.f32 %v1953, %v525
    %v1982 = vmul.f32 %v641, %v525
    %v1983 = vmul.f32 %v600, %v527
    %v1984 = vmul.f32 %v1949, %v527
    %v1985 = vmul.f32 %v1954, %v527
    %v1986 = vmul.f32 %v648, %v527
    %v1987 = vpack.c.bf16 %v598, %v597
    %v1988 = vpack.c.bf16 %v1945, %v1943
    %v1989 = vpack.c.bf16 %v1952, %v1951
    %v1990 = vpack.c.bf16 %v634, %v627
    %v1991 = vpack.c.bf16 %v1959, %v1955
    %v1992 = vpack.c.bf16 %v1960, %v1956
    %v1993 = vpack.c.bf16 %v1961, %v1957
    %v1994 = vpack.c.bf16 %v1962, %v1958
    %v1995 = vpack.c.bf16 %v1975, %v1971
    %v1996 = vpack.c.bf16 %v1976, %v1972
    %v1997 = vpack.c.bf16 %v1977, %v1973
    %v1998 = vpack.c.bf16 %v1978, %v1974
    %v1999 = vpack.c.bf16 %v600, %v599
    %v2000 = vpack.c.bf16 %v1949, %v1947
    %v2001 = vpack.c.bf16 %v1954, %v1953
    %v2002 = vpack.c.bf16 %v648, %v641
    %v2003 = vpack.c.bf16 %v1967, %v1963
    %v2004 = vpack.c.bf16 %v1968, %v1964
    %v2005 = vpack.c.bf16 %v1969, %v1965
    %v2006 = vpack.c.bf16 %v1970, %v1966
    %v2007 = vpack.c.bf16 %v1983, %v1979
    %v2008 = vpack.c.bf16 %v1984, %v1980
    %v2009 = vpack.c.bf16 %v1985, %v1981
    %v2010 = vpack.c.bf16 %v1986, %v1982
    %v2011 = vld [vmem:[#allocation3] sm:$0xf]
    %v2012 = vld [vmem:[#allocation3 + $0x4] sm:$0xf]
    %v2013 = vld [vmem:[#allocation3 + $0x8] sm:$0xf]
    %v2014 = vld [vmem:[#allocation3 + $0xc] sm:$0xf]
    %v2015 = vld [vmem:[#allocation3 + $0x10] sm:$0xf]
    %v2016 = vld [vmem:[#allocation3 + $0x14] sm:$0xf]
    %v2017 = vld [vmem:[#allocation3 + $0x18] sm:$0xf]
    %v2018 = vld [vmem:[#allocation3 + $0x1c] sm:$0xf]
    %v2019 = vld [vmem:[#allocation3 + $0x20] sm:$0xf]
    %v2020 = vld [vmem:[#allocation3 + $0x24] sm:$0xf]
    %v2021 = vld [vmem:[#allocation3 + $0x28] sm:$0xf]
    %v2022 = vld [vmem:[#allocation3 + $0x2c] sm:$0xf]
    %v2023 = vld [vmem:[#allocation3 + $0x30] sm:$0xf]
    %v2024 = vld [vmem:[#allocation3 + $0x34] sm:$0xf]
    %v2025 = vld [vmem:[#allocation3 + $0x38] sm:$0xf]
    %v2026 = vld [vmem:[#allocation3 + $0x3c] sm:$0xf]
    %v2027 = vld [vmem:[#allocation3 + $0x40] sm:$0xf]
    %v2028 = vld [vmem:[#allocation3 + $0x44] sm:$0xf]
    %v2029 = vld [vmem:[#allocation3 + $0x48] sm:$0xf]
    %v2030 = vld [vmem:[#allocation3 + $0x4c] sm:$0xf]
    %v2031 = vld [vmem:[#allocation3 + $0x50] sm:$0xf]
    %v2032 = vld [vmem:[#allocation3 + $0x54] sm:$0xf]
    %v2033 = vld [vmem:[#allocation3 + $0x58] sm:$0xf]
    %v2034 = vld [vmem:[#allocation3 + $0x5c] sm:$0xf]
    %v2035 = vld [vmem:[#allocation3 + $0x60] sm:$0xf]
    %v2036 = vld [vmem:[#allocation3 + $0x64] sm:$0xf]
    %v2037 = vld [vmem:[#allocation3 + $0x68] sm:$0xf]
    %v2038 = vld [vmem:[#allocation3 + $0x6c] sm:$0xf]
    %v2039 = vld [vmem:[#allocation3 + $0x70] sm:$0xf]
    %v2040 = vld [vmem:[#allocation3 + $0x74] sm:$0xf]
    %v2041 = vld [vmem:[#allocation3 + $0x78] sm:$0xf]
    %v2042 = vld [vmem:[#allocation3 + $0x7c] sm:$0xf]
    %v2043 = vld [vmem:[#allocation3 + $0x80] sm:$0xf]
    %v2044 = vld [vmem:[#allocation3 + $0x84] sm:$0xf]
    %v2045 = vld [vmem:[#allocation3 + $0x88] sm:$0xf]
    %v2046 = vld [vmem:[#allocation3 + $0x8c] sm:$0xf]
    %v2047 = vld [vmem:[#allocation3 + $0x90] sm:$0xf]
    %v2048 = vld [vmem:[#allocation3 + $0x94] sm:$0xf]
    %v2049 = vld [vmem:[#allocation3 + $0x98] sm:$0xf]
    %v2050 = vld [vmem:[#allocation3 + $0x9c] sm:$0xf]
    %v2051 = vld [vmem:[#allocation3 + $0xa0] sm:$0xf]
    %v2052 = vld [vmem:[#allocation3 + $0xa4] sm:$0xf]
    %v2053 = vld [vmem:[#allocation3 + $0xa8] sm:$0xf]
    %v2054 = vld [vmem:[#allocation3 + $0xac] sm:$0xf]
    %v2055 = vld [vmem:[#allocation3 + $0xb0] sm:$0xf]
    %v2056 = vld [vmem:[#allocation3 + $0xb4] sm:$0xf]
    %v2057 = vld [vmem:[#allocation3 + $0xb8] sm:$0xf]
    %v2058 = vld [vmem:[#allocation3 + $0xbc] sm:$0xf]
    %v2059 = vld [vmem:[#allocation3 + $0xc0] sm:$0xf]
    %v2060 = vld [vmem:[#allocation3 + $0xc4] sm:$0xf]
    %v2061 = vld [vmem:[#allocation3 + $0xc8] sm:$0xf]
    %v2062 = vld [vmem:[#allocation3 + $0xcc] sm:$0xf]
    %v2063 = vld [vmem:[#allocation3 + $0xd0] sm:$0xf]
    %v2064 = vld [vmem:[#allocation3 + $0xd4] sm:$0xf]
    %v2065 = vld [vmem:[#allocation3 + $0xd8] sm:$0xf]
    %v2066 = vld [vmem:[#allocation3 + $0xdc] sm:$0xf]
    %v2067 = vld [vmem:[#allocation3 + $0xe0] sm:$0xf]
    %v2068 = vld [vmem:[#allocation3 + $0xe4] sm:$0xf]
    %v2069 = vld [vmem:[#allocation3 + $0xe8] sm:$0xf]
    %v2070 = vld [vmem:[#allocation3 + $0xec] sm:$0xf]
    %v2071 = vld [vmem:[#allocation3 + $0xf0] sm:$0xf]
    %v2072 = vld [vmem:[#allocation3 + $0xf4] sm:$0xf]
    %v2073 = vld [vmem:[#allocation3 + $0xf8] sm:$0xf]
    %v2074 = vld [vmem:[#allocation3 + $0xfc] sm:$0xf]
    %v2075 = vld [vmem:[#allocation3 + $0x100] sm:$0xf]
    %v2076 = vld [vmem:[#allocation3 + $0x104] sm:$0xf]
    %v2077 = vld [vmem:[#allocation3 + $0x108] sm:$0xf]
    %v2078 = vld [vmem:[#allocation3 + $0x10c] sm:$0xf]
    %v2079 = vld [vmem:[#allocation3 + $0x110] sm:$0xf]
    %v2080 = vld [vmem:[#allocation3 + $0x114] sm:$0xf]
    %v2081 = vld [vmem:[#allocation3 + $0x118] sm:$0xf]
    %v2082 = vld [vmem:[#allocation3 + $0x11c] sm:$0xf]
    %v2083 = vld [vmem:[#allocation3 + $0x120] sm:$0xf]
    %v2084 = vld [vmem:[#allocation3 + $0x124] sm:$0xf]
    %v2085 = vld [vmem:[#allocation3 + $0x128] sm:$0xf]
    %v2086 = vld [vmem:[#allocation3 + $0x12c] sm:$0xf]
    %v2087 = vld [vmem:[#allocation3 + $0x130] sm:$0xf]
    %v2088 = vld [vmem:[#allocation3 + $0x134] sm:$0xf]
    %v2089 = vld [vmem:[#allocation3 + $0x138] sm:$0xf]
    %v2090 = vld [vmem:[#allocation3 + $0x13c] sm:$0xf]
    %v2091 = vld [vmem:[#allocation3 + $0x140] sm:$0xf]
    %v2092 = vld [vmem:[#allocation3 + $0x144] sm:$0xf]
    %v2093 = vld [vmem:[#allocation3 + $0x148] sm:$0xf]
    %v2094 = vld [vmem:[#allocation3 + $0x14c] sm:$0xf]
    %v2095 = vld [vmem:[#allocation3 + $0x150] sm:$0xf]
    %v2096 = vld [vmem:[#allocation3 + $0x154] sm:$0xf]
    %v2097 = vld [vmem:[#allocation3 + $0x158] sm:$0xf]
    %v2098 = vld [vmem:[#allocation3 + $0x15c] sm:$0xf]
    %v2099 = vld [vmem:[#allocation3 + $0x160] sm:$0xf]
    %v2100 = vld [vmem:[#allocation3 + $0x164] sm:$0xf]
    %v2101 = vld [vmem:[#allocation3 + $0x168] sm:$0xf]
    %v2102 = vld [vmem:[#allocation3 + $0x16c] sm:$0xf]
    %v2103 = vld [vmem:[#allocation3 + $0x170] sm:$0xf]
    %v2104 = vld [vmem:[#allocation3 + $0x174] sm:$0xf]
    %v2105 = vld [vmem:[#allocation3 + $0x178] sm:$0xf]
    %v2106 = vld [vmem:[#allocation3 + $0x17c] sm:$0xf]
    %v2107 = vld [vmem:[#allocation3 + $0x180] sm:$0xf]
    %v2108 = vld [vmem:[#allocation3 + $0x184] sm:$0xf]
    %v2109 = vld [vmem:[#allocation3 + $0x188] sm:$0xf]
    %v2110 = vld [vmem:[#allocation3 + $0x18c] sm:$0xf]
    %v2111 = vld [vmem:[#allocation3 + $0x190] sm:$0xf]
    %v2112 = vld [vmem:[#allocation3 + $0x194] sm:$0xf]
    %v2113 = vld [vmem:[#allocation3 + $0x198] sm:$0xf]
    %v2114 = vld [vmem:[#allocation3 + $0x19c] sm:$0xf]
    %v2115 = vld [vmem:[#allocation3 + $0x1a0] sm:$0xf]
    %v2116 = vld [vmem:[#allocation3 + $0x1a4] sm:$0xf]
    %v2117 = vld [vmem:[#allocation3 + $0x1a8] sm:$0xf]
    %v2118 = vld [vmem:[#allocation3 + $0x1ac] sm:$0xf]
    %v2119 = vld [vmem:[#allocation3 + $0x1b0] sm:$0xf]
    %v2120 = vld [vmem:[#allocation3 + $0x1b4] sm:$0xf]
    %v2121 = vld [vmem:[#allocation3 + $0x1b8] sm:$0xf]
    %v2122 = vld [vmem:[#allocation3 + $0x1bc] sm:$0xf]
    %v2123 = vld [vmem:[#allocation3 + $0x1c0] sm:$0xf]
    %v2124 = vld [vmem:[#allocation3 + $0x1c4] sm:$0xf]
    %v2125 = vld [vmem:[#allocation3 + $0x1c8] sm:$0xf]
    %v2126 = vld [vmem:[#allocation3 + $0x1cc] sm:$0xf]
    %v2127 = vld [vmem:[#allocation3 + $0x1d0] sm:$0xf]
    %v2128 = vld [vmem:[#allocation3 + $0x1d4] sm:$0xf]
    %v2129 = vld [vmem:[#allocation3 + $0x1d8] sm:$0xf]
    %v2130 = vld [vmem:[#allocation3 + $0x1dc] sm:$0xf]
    %v2131 = vld [vmem:[#allocation3 + $0x1e0] sm:$0xf]
    %v2132 = vld [vmem:[#allocation3 + $0x1e4] sm:$0xf]
    %v2133 = vld [vmem:[#allocation3 + $0x1e8] sm:$0xf]
    %v2134 = vld [vmem:[#allocation3 + $0x1ec] sm:$0xf]
    %v2135 = vld [vmem:[#allocation3 + $0x1f0] sm:$0xf]
    %v2136 = vld [vmem:[#allocation3 + $0x1f4] sm:$0xf]
    %v2137 = vld [vmem:[#allocation3 + $0x1f8] sm:$0xf]
    %v2138 = vld [vmem:[#allocation3 + $0x1fc] sm:$0xf]
    %v2139 = vld [vmem:[#allocation3 + $0x200] sm:$0xf]
    %v2140 = vld [vmem:[#allocation3 + $0x204] sm:$0xf]
    %v2141 = vld [vmem:[#allocation3 + $0x208] sm:$0xf]
    %v2142 = vld [vmem:[#allocation3 + $0x20c] sm:$0xf]
    %v2143 = vld [vmem:[#allocation3 + $0x210] sm:$0xf]
    %v2144 = vld [vmem:[#allocation3 + $0x214] sm:$0xf]
    %v2145 = vld [vmem:[#allocation3 + $0x218] sm:$0xf]
    %v2146 = vld [vmem:[#allocation3 + $0x21c] sm:$0xf]
    %v2147 = vld [vmem:[#allocation3 + $0x220] sm:$0xf]
    %v2148 = vld [vmem:[#allocation3 + $0x224] sm:$0xf]
    %v2149 = vld [vmem:[#allocation3 + $0x228] sm:$0xf]
    %v2150 = vld [vmem:[#allocation3 + $0x22c] sm:$0xf]
    %v2151 = vld [vmem:[#allocation3 + $0x230] sm:$0xf]
    %v2152 = vld [vmem:[#allocation3 + $0x234] sm:$0xf]
    %v2153 = vld [vmem:[#allocation3 + $0x238] sm:$0xf]
    %v2154 = vld [vmem:[#allocation3 + $0x23c] sm:$0xf]
    %v2155 = vld [vmem:[#allocation3 + $0x240] sm:$0xf]
    %v2156 = vld [vmem:[#allocation3 + $0x244] sm:$0xf]
    %v2157 = vld [vmem:[#allocation3 + $0x248] sm:$0xf]
    %v2158 = vld [vmem:[#allocation3 + $0x24c] sm:$0xf]
    %v2159 = vld [vmem:[#allocation3 + $0x250] sm:$0xf]
    %v2160 = vld [vmem:[#allocation3 + $0x254] sm:$0xf]
    %v2161 = vld [vmem:[#allocation3 + $0x258] sm:$0xf]
    %v2162 = vld [vmem:[#allocation3 + $0x25c] sm:$0xf]
    %v2163 = vld [vmem:[#allocation3 + $0x260] sm:$0xf]
    %v2164 = vld [vmem:[#allocation3 + $0x264] sm:$0xf]
    %v2165 = vld [vmem:[#allocation3 + $0x268] sm:$0xf]
    %v2166 = vld [vmem:[#allocation3 + $0x26c] sm:$0xf]
    %v2167 = vld [vmem:[#allocation3 + $0x270] sm:$0xf]
    %v2168 = vld [vmem:[#allocation3 + $0x274] sm:$0xf]
    %v2169 = vld [vmem:[#allocation3 + $0x278] sm:$0xf]
    %v2170 = vld [vmem:[#allocation3 + $0x27c] sm:$0xf]
    %v2171 = vld [vmem:[#allocation3 + $0x280] sm:$0xf]
    %v2172 = vld [vmem:[#allocation3 + $0x284] sm:$0xf]
    %v2173 = vld [vmem:[#allocation3 + $0x288] sm:$0xf]
    %v2174 = vld [vmem:[#allocation3 + $0x28c] sm:$0xf]
    %v2175 = vld [vmem:[#allocation3 + $0x290] sm:$0xf]
    %v2176 = vld [vmem:[#allocation3 + $0x294] sm:$0xf]
    %v2177 = vld [vmem:[#allocation3 + $0x298] sm:$0xf]
    %v2178 = vld [vmem:[#allocation3 + $0x29c] sm:$0xf]
    %v2179 = vld [vmem:[#allocation3 + $0x2a0] sm:$0xf]
    %v2180 = vld [vmem:[#allocation3 + $0x2a4] sm:$0xf]
    %v2181 = vld [vmem:[#allocation3 + $0x2a8] sm:$0xf]
    %v2182 = vld [vmem:[#allocation3 + $0x2ac] sm:$0xf]
    %v2183 = vld [vmem:[#allocation3 + $0x2b0] sm:$0xf]
    %v2184 = vld [vmem:[#allocation3 + $0x2b4] sm:$0xf]
    %v2185 = vld [vmem:[#allocation3 + $0x2b8] sm:$0xf]
    %v2186 = vld [vmem:[#allocation3 + $0x2bc] sm:$0xf]
    %v2187 = vld [vmem:[#allocation3 + $0x2c0] sm:$0xf]
    %v2188 = vld [vmem:[#allocation3 + $0x2c4] sm:$0xf]
    %v2189 = vld [vmem:[#allocation3 + $0x2c8] sm:$0xf]
    %v2190 = vld [vmem:[#allocation3 + $0x2cc] sm:$0xf]
    %v2191 = vld [vmem:[#allocation3 + $0x2d0] sm:$0xf]
    %v2192 = vld [vmem:[#allocation3 + $0x2d4] sm:$0xf]
    %v2193 = vld [vmem:[#allocation3 + $0x2d8] sm:$0xf]
    %v2194 = vld [vmem:[#allocation3 + $0x2dc] sm:$0xf]
    %v2195 = vld [vmem:[#allocation3 + $0x2e0] sm:$0xf]
    %v2196 = vld [vmem:[#allocation3 + $0x2e4] sm:$0xf]
    %v2197 = vld [vmem:[#allocation3 + $0x2e8] sm:$0xf]
    %v2198 = vld [vmem:[#allocation3 + $0x2ec] sm:$0xf]
    %v2199 = vld [vmem:[#allocation3 + $0x2f0] sm:$0xf]
    %v2200 = vld [vmem:[#allocation3 + $0x2f4] sm:$0xf]
    %v2201 = vld [vmem:[#allocation3 + $0x2f8] sm:$0xf]
    %v2202 = vld [vmem:[#allocation3 + $0x2fc] sm:$0xf]
    %v2203 = vld [vmem:[#allocation6] sm:$0x1]
    %v2205 = vlaneseq
    %v2206 = vshrl.u32 %v2205, 7
    %v2207 = vsub.s32 0, %v2206
    %v2208 = vrot.slane %v2203, %v2207
    %v2402 = vunpack.c.l.b16 %v2011
    %v2403 = vunpack.c.l.b16 %v2012
    %v2404 = vunpack.c.l.b16 %v2013
    %v2405 = vunpack.c.l.b16 %v2014
    %v2406 = vunpack.c.l.b16 %v2015
    %v2407 = vunpack.c.l.b16 %v2016
    %v2408 = vunpack.c.l.b16 %v2017
    %v2409 = vunpack.c.l.b16 %v2018
    %v2410 = vunpack.c.l.b16 %v2019
    %v2411 = vunpack.c.l.b16 %v2020
    %v2412 = vunpack.c.l.b16 %v2021
    %v2413 = vunpack.c.l.b16 %v2022
    %v2414 = vunpack.c.l.b16 %v2023
    %v2415 = vunpack.c.l.b16 %v2024
    %v2416 = vunpack.c.l.b16 %v2025
    %v2417 = vunpack.c.l.b16 %v2026
    %v2418 = vunpack.c.l.b16 %v2027
    %v2419 = vunpack.c.l.b16 %v2028
    %v2420 = vunpack.c.l.b16 %v2029
    %v2421 = vunpack.c.l.b16 %v2030
    %v2422 = vunpack.c.l.b16 %v2031
    %v2423 = vunpack.c.l.b16 %v2032
    %v2424 = vunpack.c.l.b16 %v2033
    %v2425 = vunpack.c.l.b16 %v2034
    %v2426 = vunpack.c.l.b16 %v2035
    %v2427 = vunpack.c.l.b16 %v2036
    %v2428 = vunpack.c.l.b16 %v2037
    %v2429 = vunpack.c.l.b16 %v2038
    %v2430 = vunpack.c.l.b16 %v2039
    %v2431 = vunpack.c.l.b16 %v2040
    %v2432 = vunpack.c.l.b16 %v2041
    %v2433 = vunpack.c.l.b16 %v2042
    %v2434 = vunpack.c.l.b16 %v2043
    %v2435 = vunpack.c.l.b16 %v2044
    %v2436 = vunpack.c.l.b16 %v2045
    %v2437 = vunpack.c.l.b16 %v2046
    %v2438 = vunpack.c.l.b16 %v2047
    %v2439 = vunpack.c.l.b16 %v2048
    %v2440 = vunpack.c.l.b16 %v2049
    %v2441 = vunpack.c.l.b16 %v2050
    %v2442 = vunpack.c.l.b16 %v2051
    %v2443 = vunpack.c.l.b16 %v2052
    %v2444 = vunpack.c.l.b16 %v2053
    %v2445 = vunpack.c.l.b16 %v2054
    %v2446 = vunpack.c.l.b16 %v2055
    %v2447 = vunpack.c.l.b16 %v2056
    %v2448 = vunpack.c.l.b16 %v2057
    %v2449 = vunpack.c.l.b16 %v2058
    %v2450 = vunpack.c.l.b16 %v2059
    %v2451 = vunpack.c.l.b16 %v2060
    %v2452 = vunpack.c.l.b16 %v2061
    %v2453 = vunpack.c.l.b16 %v2062
    %v2454 = vunpack.c.l.b16 %v2063
    %v2455 = vunpack.c.l.b16 %v2064
    %v2456 = vunpack.c.l.b16 %v2065
    %v2457 = vunpack.c.l.b16 %v2066
    %v2458 = vunpack.c.l.b16 %v2067
    %v2459 = vunpack.c.l.b16 %v2068
    %v2460 = vunpack.c.l.b16 %v2069
    %v2461 = vunpack.c.l.b16 %v2070
    %v2462 = vunpack.c.l.b16 %v2071
    %v2463 = vunpack.c.l.b16 %v2072
    %v2464 = vunpack.c.l.b16 %v2073
    %v2465 = vunpack.c.l.b16 %v2074
    %v2466 = vunpack.c.l.b16 %v2075
    %v2467 = vunpack.c.l.b16 %v2076
    %v2468 = vunpack.c.l.b16 %v2077
    %v2469 = vunpack.c.l.b16 %v2078
    %v2470 = vunpack.c.l.b16 %v2079
    %v2471 = vunpack.c.l.b16 %v2080
    %v2472 = vunpack.c.l.b16 %v2081
    %v2473 = vunpack.c.l.b16 %v2082
    %v2474 = vunpack.c.l.b16 %v2083
    %v2475 = vunpack.c.l.b16 %v2084
    %v2476 = vunpack.c.l.b16 %v2085
    %v2477 = vunpack.c.l.b16 %v2086
    %v2478 = vunpack.c.l.b16 %v2087
    %v2479 = vunpack.c.l.b16 %v2088
    %v2480 = vunpack.c.l.b16 %v2089
    %v2481 = vunpack.c.l.b16 %v2090
    %v2482 = vunpack.c.l.b16 %v2091
    %v2483 = vunpack.c.l.b16 %v2092
    %v2484 = vunpack.c.l.b16 %v2093
    %v2485 = vunpack.c.l.b16 %v2094
    %v2486 = vunpack.c.l.b16 %v2095
    %v2487 = vunpack.c.l.b16 %v2096
    %v2488 = vunpack.c.l.b16 %v2097
    %v2489 = vunpack.c.l.b16 %v2098
    %v2490 = vunpack.c.l.b16 %v2099
    %v2491 = vunpack.c.l.b16 %v2100
    %v2492 = vunpack.c.l.b16 %v2101
    %v2493 = vunpack.c.l.b16 %v2102
    %v2494 = vunpack.c.l.b16 %v2103
    %v2495 = vunpack.c.l.b16 %v2104
    %v2496 = vunpack.c.l.b16 %v2105
    %v2497 = vunpack.c.l.b16 %v2106
    %v2498 = vunpack.c.l.b16 %v2107
    %v2499 = vunpack.c.l.b16 %v2108
    %v2500 = vunpack.c.l.b16 %v2109
    %v2501 = vunpack.c.l.b16 %v2110
    %v2502 = vunpack.c.l.b16 %v2111
    %v2503 = vunpack.c.l.b16 %v2112
    %v2504 = vunpack.c.l.b16 %v2113
    %v2505 = vunpack.c.l.b16 %v2114
    %v2506 = vunpack.c.l.b16 %v2115
    %v2507 = vunpack.c.l.b16 %v2116
    %v2508 = vunpack.c.l.b16 %v2117
    %v2509 = vunpack.c.l.b16 %v2118
    %v2510 = vunpack.c.l.b16 %v2119
    %v2511 = vunpack.c.l.b16 %v2120
    %v2512 = vunpack.c.l.b16 %v2121
    %v2513 = vunpack.c.l.b16 %v2122
    %v2514 = vunpack.c.l.b16 %v2123
    %v2515 = vunpack.c.l.b16 %v2124
    %v2516 = vunpack.c.l.b16 %v2125
    %v2517 = vunpack.c.l.b16 %v2126
    %v2518 = vunpack.c.l.b16 %v2127
    %v2519 = vunpack.c.l.b16 %v2128
    %v2520 = vunpack.c.l.b16 %v2129
    %v2521 = vunpack.c.l.b16 %v2130
    %v2522 = vunpack.c.l.b16 %v2131
    %v2523 = vunpack.c.l.b16 %v2132
    %v2524 = vunpack.c.l.b16 %v2133
    %v2525 = vunpack.c.l.b16 %v2134
    %v2526 = vunpack.c.l.b16 %v2135
    %v2527 = vunpack.c.l.b16 %v2136
    %v2528 = vunpack.c.l.b16 %v2137
    %v2529 = vunpack.c.l.b16 %v2138
    %v2530 = vunpack.c.l.b16 %v2139
    %v2531 = vunpack.c.l.b16 %v2140
    %v2532 = vunpack.c.l.b16 %v2141
    %v2533 = vunpack.c.l.b16 %v2142
    %v2534 = vunpack.c.l.b16 %v2143
    %v2535 = vunpack.c.l.b16 %v2144
    %v2536 = vunpack.c.l.b16 %v2145
    %v2537 = vunpack.c.l.b16 %v2146
    %v2538 = vunpack.c.l.b16 %v2147
    %v2539 = vunpack.c.l.b16 %v2148
    %v2540 = vunpack.c.l.b16 %v2149
    %v2541 = vunpack.c.l.b16 %v2150
    %v2542 = vunpack.c.l.b16 %v2151
    %v2543 = vunpack.c.l.b16 %v2152
    %v2544 = vunpack.c.l.b16 %v2153
    %v2545 = vunpack.c.l.b16 %v2154
    %v2546 = vunpack.c.l.b16 %v2155
    %v2547 = vunpack.c.l.b16 %v2156
    %v2548 = vunpack.c.l.b16 %v2157
    %v2549 = vunpack.c.l.b16 %v2158
    %v2550 = vunpack.c.l.b16 %v2159
    %v2551 = vunpack.c.l.b16 %v2160
    %v2552 = vunpack.c.l.b16 %v2161
    %v2553 = vunpack.c.l.b16 %v2162
    %v2554 = vunpack.c.l.b16 %v2163
    %v2555 = vunpack.c.l.b16 %v2164
    %v2556 = vunpack.c.l.b16 %v2165
    %v2557 = vunpack.c.l.b16 %v2166
    %v2558 = vunpack.c.l.b16 %v2167
    %v2559 = vunpack.c.l.b16 %v2168
    %v2560 = vunpack.c.l.b16 %v2169
    %v2561 = vunpack.c.l.b16 %v2170
    %v2562 = vunpack.c.l.b16 %v2171
    %v2563 = vunpack.c.l.b16 %v2172
    %v2564 = vunpack.c.l.b16 %v2173
    %v2565 = vunpack.c.l.b16 %v2174
    %v2566 = vunpack.c.l.b16 %v2175
    %v2567 = vunpack.c.l.b16 %v2176
    %v2568 = vunpack.c.l.b16 %v2177
    %v2569 = vunpack.c.l.b16 %v2178
    %v2570 = vunpack.c.l.b16 %v2179
    %v2571 = vunpack.c.l.b16 %v2180
    %v2572 = vunpack.c.l.b16 %v2181
    %v2573 = vunpack.c.l.b16 %v2182
    %v2574 = vunpack.c.l.b16 %v2183
    %v2575 = vunpack.c.l.b16 %v2184
    %v2576 = vunpack.c.l.b16 %v2185
    %v2577 = vunpack.c.l.b16 %v2186
    %v2578 = vunpack.c.l.b16 %v2187
    %v2579 = vunpack.c.l.b16 %v2188
    %v2580 = vunpack.c.l.b16 %v2189
    %v2581 = vunpack.c.l.b16 %v2190
    %v2582 = vunpack.c.l.b16 %v2191
    %v2583 = vunpack.c.l.b16 %v2192
    %v2584 = vunpack.c.l.b16 %v2193
    %v2585 = vunpack.c.l.b16 %v2194
    %v2586 = vunpack.c.l.b16 %v2195
    %v2587 = vunpack.c.l.b16 %v2196
    %v2588 = vunpack.c.l.b16 %v2197
    %v2589 = vunpack.c.l.b16 %v2198
    %v2590 = vunpack.c.l.b16 %v2199
    %v2591 = vunpack.c.l.b16 %v2200
    %v2592 = vunpack.c.l.b16 %v2201
    %v2593 = vunpack.c.l.b16 %v2202
    %v2594 = vpack.c.b16 %v2403, %v2402
    %v2595 = vpack.c.b16 %v2405, %v2404
    %v2596 = vpack.c.b16 %v2407, %v2406
    %v2597 = vpack.c.b16 %v2409, %v2408
    %v2598 = vpack.c.b16 %v2411, %v2410
    %v2599 = vpack.c.b16 %v2413, %v2412
    %v2600 = vpack.c.b16 %v2415, %v2414
    %v2601 = vpack.c.b16 %v2417, %v2416
    %v2602 = vpack.c.b16 %v2419, %v2418
    %v2603 = vpack.c.b16 %v2421, %v2420
    %v2604 = vpack.c.b16 %v2423, %v2422
    %v2605 = vpack.c.b16 %v2425, %v2424
    %v2606 = vpack.c.b16 %v2427, %v2426
    %v2607 = vpack.c.b16 %v2429, %v2428
    %v2608 = vpack.c.b16 %v2431, %v2430
    %v2609 = vpack.c.b16 %v2433, %v2432
    %v2610 = vpack.c.b16 %v2435, %v2434
    %v2611 = vpack.c.b16 %v2437, %v2436
    %v2612 = vpack.c.b16 %v2439, %v2438
    %v2613 = vpack.c.b16 %v2441, %v2440
    %v2614 = vpack.c.b16 %v2443, %v2442
    %v2615 = vpack.c.b16 %v2445, %v2444
    %v2616 = vpack.c.b16 %v2447, %v2446
    %v2617 = vpack.c.b16 %v2449, %v2448
    %v2618 = vpack.c.b16 %v2451, %v2450
    %v2619 = vpack.c.b16 %v2453, %v2452
    %v2620 = vpack.c.b16 %v2455, %v2454
    %v2621 = vpack.c.b16 %v2457, %v2456
    %v2622 = vpack.c.b16 %v2459, %v2458
    %v2623 = vpack.c.b16 %v2461, %v2460
    %v2624 = vpack.c.b16 %v2463, %v2462
    %v2625 = vpack.c.b16 %v2465, %v2464
    %v2626 = vpack.c.b16 %v2467, %v2466
    %v2627 = vpack.c.b16 %v2469, %v2468
    %v2628 = vpack.c.b16 %v2471, %v2470
    %v2629 = vpack.c.b16 %v2473, %v2472
    %v2630 = vpack.c.b16 %v2475, %v2474
    %v2631 = vpack.c.b16 %v2477, %v2476
    %v2632 = vpack.c.b16 %v2479, %v2478
    %v2633 = vpack.c.b16 %v2481, %v2480
    %v2634 = vpack.c.b16 %v2483, %v2482
    %v2635 = vpack.c.b16 %v2485, %v2484
    %v2636 = vpack.c.b16 %v2487, %v2486
    %v2637 = vpack.c.b16 %v2489, %v2488
    %v2638 = vpack.c.b16 %v2491, %v2490
    %v2639 = vpack.c.b16 %v2493, %v2492
    %v2640 = vpack.c.b16 %v2495, %v2494
    %v2641 = vpack.c.b16 %v2497, %v2496
    %v2642 = vpack.c.b16 %v2499, %v2498
    %v2643 = vpack.c.b16 %v2501, %v2500
    %v2644 = vpack.c.b16 %v2503, %v2502
    %v2645 = vpack.c.b16 %v2505, %v2504
    %v2646 = vpack.c.b16 %v2507, %v2506
    %v2647 = vpack.c.b16 %v2509, %v2508
    %v2648 = vpack.c.b16 %v2511, %v2510
    %v2649 = vpack.c.b16 %v2513, %v2512
    %v2650 = vpack.c.b16 %v2515, %v2514
    %v2651 = vpack.c.b16 %v2517, %v2516
    %v2652 = vpack.c.b16 %v2519, %v2518
    %v2653 = vpack.c.b16 %v2521, %v2520
    %v2654 = vpack.c.b16 %v2523, %v2522
    %v2655 = vpack.c.b16 %v2525, %v2524
    %v2656 = vpack.c.b16 %v2527, %v2526
    %v2657 = vpack.c.b16 %v2529, %v2528
    %v2658 = vpack.c.b16 %v2531, %v2530
    %v2659 = vpack.c.b16 %v2533, %v2532
    %v2660 = vpack.c.b16 %v2535, %v2534
    %v2661 = vpack.c.b16 %v2537, %v2536
    %v2662 = vpack.c.b16 %v2539, %v2538
    %v2663 = vpack.c.b16 %v2541, %v2540
    %v2664 = vpack.c.b16 %v2543, %v2542
    %v2665 = vpack.c.b16 %v2545, %v2544
    %v2666 = vpack.c.b16 %v2547, %v2546
    %v2667 = vpack.c.b16 %v2549, %v2548
    %v2668 = vpack.c.b16 %v2551, %v2550
    %v2669 = vpack.c.b16 %v2553, %v2552
    %v2670 = vpack.c.b16 %v2555, %v2554
    %v2671 = vpack.c.b16 %v2557, %v2556
    %v2672 = vpack.c.b16 %v2559, %v2558
    %v2673 = vpack.c.b16 %v2561, %v2560
    %v2674 = vpack.c.b16 %v2563, %v2562
    %v2675 = vpack.c.b16 %v2565, %v2564
    %v2676 = vpack.c.b16 %v2567, %v2566
    %v2677 = vpack.c.b16 %v2569, %v2568
    %v2678 = vpack.c.b16 %v2571, %v2570
    %v2679 = vpack.c.b16 %v2573, %v2572
    %v2680 = vpack.c.b16 %v2575, %v2574
    %v2681 = vpack.c.b16 %v2577, %v2576
    %v2682 = vpack.c.b16 %v2579, %v2578
    %v2683 = vpack.c.b16 %v2581, %v2580
    %v2684 = vpack.c.b16 %v2583, %v2582
    %v2685 = vpack.c.b16 %v2585, %v2584
    %v2686 = vpack.c.b16 %v2587, %v2586
    %v2687 = vpack.c.b16 %v2589, %v2588
    %v2688 = vpack.c.b16 %v2591, %v2590
    %v2689 = vpack.c.b16 %v2593, %v2592
    %2786 = vmatprep.subr.bf16.mxu0 0
    %2787 = vmatpush1.bf16.msra.mxu0 %v2594
    %2788 = vmatprep.subr.bf16.mxu0 0
    %2789 = vmatpush1.bf16.msra.mxu0 %v2595
    %2790 = vmatprep.subr.bf16.mxu0 0
    %2791 = vmatpush1.bf16.msra.mxu0 %v2596
    %2792 = vmatprep.subr.bf16.mxu0 0
    %2793 = vmatpush1.bf16.msra.mxu0 %v2597
    %2794 = vmatprep.subr.bf16.mxu0 0
    %2795 = vmatpush1.bf16.msra.mxu0 %v2598
    %2796 = vmatprep.subr.bf16.mxu0 0
    %2797 = vmatpush1.bf16.msra.mxu0 %v2599
    %2798 = vmatprep.subr.bf16.mxu0 0
    %2799 = vmatpush1.bf16.msra.mxu0 %v2600
    %2800 = vmatprep.subr.bf16.mxu0 0
    %2801 = vmatpush1.bf16.msra.mxu0 %v2601
    %2802 = vmatprep.subr.bf16.mxu0 0
    %2803 = vmatpush1.bf16.msra.mxu0 %v2602
    %2804 = vmatprep.subr.bf16.mxu0 0
    %2805 = vmatpush1.bf16.msra.mxu0 %v2603
    %2806 = vmatprep.subr.bf16.mxu0 0
    %2807 = vmatpush1.bf16.msra.mxu0 %v2604
    %2808 = vmatprep.subr.bf16.mxu0 0
    %2809 = vmatpush1.bf16.msra.mxu0 %v2605
    %2810 = vmatprep.subr.bf16.mxu0 0
    %2811 = vmatpush1.bf16.msra.mxu0 %v2606
    %2812 = vmatprep.subr.bf16.mxu0 0
    %2813 = vmatpush1.bf16.msra.mxu0 %v2607
    %2814 = vmatprep.subr.bf16.mxu0 0
    %2815 = vmatpush1.bf16.msra.mxu0 %v2608
    %2816 = vmatprep.subr.bf16.mxu0 0
    %2817 = vmatpush1.bf16.msra.mxu0 %v2609
    %2818 = vmatprep.mubr.bf16.mxu0 %v1988
    %2819 = vmatmul.mubr.bf16.gmra.mrb[0].mxu0 %v1987
    %v2820 = vpop.f32.mrb[0].mxu0
    %v2821 = vadd.f32 %v2208, %v2820
    %v2822 = vpop.f32.mrb[0].mxu0
    %v2823 = vpop.f32.mrb[0].mxu0
    %v2824 = vadd.f32 %v2208, %v2823
    %v2825 = vpop.f32.mrb[0].mxu0
    %2826 = vmatprep.mubr.bf16.mxu0 %v2000
    %2827 = vmatmul.mubr.bf16.gmra.mrb[0].mxu0 %v1999
    %v2828 = vpop.f32.mrb[0].mxu0
    %v2829 = vadd.f32 %v2208, %v2828
    %v2830 = vpop.f32.mrb[0].mxu0
    %v2831 = vpop.f32.mrb[0].mxu0
    %v2832 = vadd.f32 %v2208, %v2831
    %v2833 = vpop.f32.mrb[0].mxu0
    %2834 = vdwg.mxu0
    %2835 = vmatprep.subr.bf16.mxu0 0
    %2836 = vmatpush1.bf16.msra.mxu0 %v2610
    %2837 = vmatprep.subr.bf16.mxu0 0
    %2838 = vmatpush1.bf16.msra.mxu0 %v2611
    %2839 = vmatprep.subr.bf16.mxu0 0
    %2840 = vmatpush1.bf16.msra.mxu0 %v2612
    %2841 = vmatprep.subr.bf16.mxu0 0
    %2842 = vmatpush1.bf16.msra.mxu0 %v2613
    %2843 = vmatprep.subr.bf16.mxu0 0
    %2844 = vmatpush1.bf16.msra.mxu0 %v2614
    %2845 = vmatprep.subr.bf16.mxu0 0
    %2846 = vmatpush1.bf16.msra.mxu0 %v2615
    %2847 = vmatprep.subr.bf16.mxu0 0
    %2848 = vmatpush1.bf16.msra.mxu0 %v2616
    %2849 = vmatprep.subr.bf16.mxu0 0
    %2850 = vmatpush1.bf16.msra.mxu0 %v2617
    %2851 = vmatprep.subr.bf16.mxu0 0
    %2852 = vmatpush1.bf16.msra.mxu0 %v2618
    %2853 = vmatprep.subr.bf16.mxu0 0
    %2854 = vmatpush1.bf16.msra.mxu0 %v2619
    %2855 = vmatprep.subr.bf16.mxu0 0
    %2856 = vmatpush1.bf16.msra.mxu0 %v2620
    %2857 = vmatprep.subr.bf16.mxu0 0
    %2858 = vmatpush1.bf16.msra.mxu0 %v2621
    %2859 = vmatprep.subr.bf16.mxu0 0
    %2860 = vmatpush1.bf16.msra.mxu0 %v2622
    %2861 = vmatprep.subr.bf16.mxu0 0
    %2862 = vmatpush1.bf16.msra.mxu0 %v2623
    %2863 = vmatprep.subr.bf16.mxu0 0
    %2864 = vmatpush1.bf16.msra.mxu0 %v2624
    %2865 = vmatprep.subr.bf16.mxu0 0
    %2866 = vmatpush1.bf16.msra.mxu0 %v2625
    %2867 = vmatprep.mubr.bf16.mxu0 %v1990
    %2868 = vmatmul.mubr.bf16.gmra.mrb[0].mxu0 %v1989
    %v2869 = vpop.f32.mrb[0].mxu0
    %v2870 = vadd.f32 %v2821, %v2869
    %v2871 = vpop.f32.mrb[0].mxu0
    %v2872 = vpop.f32.mrb[0].mxu0
    %v2873 = vadd.f32 %v2824, %v2872
    %v2874 = vpop.f32.mrb[0].mxu0
    %2875 = vmatprep.mubr.bf16.mxu0 %v2002
    %2876 = vmatmul.mubr.bf16.gmra.mrb[0].mxu0 %v2001
    %v2877 = vpop.f32.mrb[0].mxu0
    %v2878 = vadd.f32 %v2829, %v2877
    %v2879 = vpop.f32.mrb[0].mxu0
    %v2880 = vpop.f32.mrb[0].mxu0
    %v2881 = vadd.f32 %v2832, %v2880
    %v2882 = vpop.f32.mrb[0].mxu0
    %2883 = vdwg.mxu0
    %2884 = vmatprep.subr.bf16.mxu0 0
    %2885 = vmatpush1.bf16.msra.mxu0 %v2626
    %2886 = vmatprep.subr.bf16.mxu0 0
    %2887 = vmatpush1.bf16.msra.mxu0 %v2627
    %2888 = vmatprep.subr.bf16.mxu0 0
    %2889 = vmatpush1.bf16.msra.mxu0 %v2628
    %2890 = vmatprep.subr.bf16.mxu0 0
    %2891 = vmatpush1.bf16.msra.mxu0 %v2629
    %2892 = vmatprep.subr.bf16.mxu0 0
    %2893 = vmatpush1.bf16.msra.mxu0 %v2630
    %2894 = vmatprep.subr.bf16.mxu0 0
    %2895 = vmatpush1.bf16.msra.mxu0 %v2631
    %2896 = vmatprep.subr.bf16.mxu0 0
    %2897 = vmatpush1.bf16.msra.mxu0 %v2632
    %2898 = vmatprep.subr.bf16.mxu0 0
    %2899 = vmatpush1.bf16.msra.mxu0 %v2633
    %2900 = vmatprep.subr.bf16.mxu0 0
    %2901 = vmatpush1.bf16.msra.mxu0 %v2634
    %2902 = vmatprep.subr.bf16.mxu0 0
    %2903 = vmatpush1.bf16.msra.mxu0 %v2635
    %2904 = vmatprep.subr.bf16.mxu0 0
    %2905 = vmatpush1.bf16.msra.mxu0 %v2636
    %2906 = vmatprep.subr.bf16.mxu0 0
    %2907 = vmatpush1.bf16.msra.mxu0 %v2637
    %2908 = vmatprep.subr.bf16.mxu0 0
    %2909 = vmatpush1.bf16.msra.mxu0 %v2638
    %2910 = vmatprep.subr.bf16.mxu0 0
    %2911 = vmatpush1.bf16.msra.mxu0 %v2639
    %2912 = vmatprep.subr.bf16.mxu0 0
    %2913 = vmatpush1.bf16.msra.mxu0 %v2640
    %2914 = vmatprep.subr.bf16.mxu0 0
    %2915 = vmatpush1.bf16.msra.mxu0 %v2641
    %2916 = vmatprep.mubr.bf16.mxu0 %v1992
    %2917 = vmatmul.mubr.bf16.gmra.mrb[0].mxu0 %v1991
    %v2918 = vpop.f32.mrb[0].mxu0
    %v2919 = vadd.f32 %v2870, %v2918
    %v2920 = vpop.f32.mrb[0].mxu0
    %v2921 = vpop.f32.mrb[0].mxu0
    %v2922 = vadd.f32 %v2873, %v2921
    %v2923 = vpop.f32.mrb[0].mxu0
    %2924 = vmatprep.mubr.bf16.mxu0 %v2004
    %2925 = vmatmul.mubr.bf16.gmra.mrb[0].mxu0 %v2003
    %v2926 = vpop.f32.mrb[0].mxu0
    %v2927 = vadd.f32 %v2878, %v2926
    %v2928 = vpop.f32.mrb[0].mxu0
    %v2929 = vpop.f32.mrb[0].mxu0
    %v2930 = vadd.f32 %v2881, %v2929
    %v2931 = vpop.f32.mrb[0].mxu0
    %2932 = vdwg.mxu0
    %2933 = vmatprep.subr.bf16.mxu0 0
    %2934 = vmatpush1.bf16.msra.mxu0 %v2642
    %2935 = vmatprep.subr.bf16.mxu0 0
    %2936 = vmatpush1.bf16.msra.mxu0 %v2643
    %2937 = vmatprep.subr.bf16.mxu0 0
    %2938 = vmatpush1.bf16.msra.mxu0 %v2644
    %2939 = vmatprep.subr.bf16.mxu0 0
    %2940 = vmatpush1.bf16.msra.mxu0 %v2645
    %2941 = vmatprep.subr.bf16.mxu0 0
    %2942 = vmatpush1.bf16.msra.mxu0 %v2646
    %2943 = vmatprep.subr.bf16.mxu0 0
    %2944 = vmatpush1.bf16.msra.mxu0 %v2647
    %2945 = vmatprep.subr.bf16.mxu0 0
    %2946 = vmatpush1.bf16.msra.mxu0 %v2648
    %2947 = vmatprep.subr.bf16.mxu0 0
    %2948 = vmatpush1.bf16.msra.mxu0 %v2649
    %2949 = vmatprep.subr.bf16.mxu0 0
    %2950 = vmatpush1.bf16.msra.mxu0 %v2650
    %2951 = vmatprep.subr.bf16.mxu0 0
    %2952 = vmatpush1.bf16.msra.mxu0 %v2651
    %2953 = vmatprep.subr.bf16.mxu0 0
    %2954 = vmatpush1.bf16.msra.mxu0 %v2652
    %2955 = vmatprep.subr.bf16.mxu0 0
    %2956 = vmatpush1.bf16.msra.mxu0 %v2653
    %2957 = vmatprep.subr.bf16.mxu0 0
    %2958 = vmatpush1.bf16.msra.mxu0 %v2654
    %2959 = vmatprep.subr.bf16.mxu0 0
    %2960 = vmatpush1.bf16.msra.mxu0 %v2655
    %2961 = vmatprep.subr.bf16.mxu0 0
    %2962 = vmatpush1.bf16.msra.mxu0 %v2656
    %2963 = vmatprep.subr.bf16.mxu0 0
    %2964 = vmatpush1.bf16.msra.mxu0 %v2657
    %2965 = vmatprep.mubr.bf16.mxu0 %v1994
    %2966 = vmatmul.mubr.bf16.gmra.mrb[0].mxu0 %v1993
    %v2967 = vpop.f32.mrb[0].mxu0
    %v2968 = vadd.f32 %v2919, %v2967
    %v2969 = vpop.f32.mrb[0].mxu0
    %v2970 = vpop.f32.mrb[0].mxu0
    %v2971 = vadd.f32 %v2922, %v2970
    %v2972 = vpop.f32.mrb[0].mxu0
    %2973 = vmatprep.mubr.bf16.mxu0 %v2006
    %2974 = vmatmul.mubr.bf16.gmra.mrb[0].mxu0 %v2005
    %v2975 = vpop.f32.mrb[0].mxu0
    %v2976 = vadd.f32 %v2927, %v2975
    %v2977 = vpop.f32.mrb[0].mxu0
    %v2978 = vpop.f32.mrb[0].mxu0
    %v2979 = vadd.f32 %v2930, %v2978
    %v2980 = vpop.f32.mrb[0].mxu0
    %2981 = vdwg.mxu0
    %2982 = vmatprep.subr.bf16.mxu0 0
    %2983 = vmatpush1.bf16.msra.mxu0 %v2658
    %2984 = vmatprep.subr.bf16.mxu0 0
    %2985 = vmatpush1.bf16.msra.mxu0 %v2659
    %2986 = vmatprep.subr.bf16.mxu0 0
    %2987 = vmatpush1.bf16.msra.mxu0 %v2660
    %2988 = vmatprep.subr.bf16.mxu0 0
    %2989 = vmatpush1.bf16.msra.mxu0 %v2661
    %2990 = vmatprep.subr.bf16.mxu0 0
    %2991 = vmatpush1.bf16.msra.mxu0 %v2662
    %2992 = vmatprep.subr.bf16.mxu0 0
    %2993 = vmatpush1.bf16.msra.mxu0 %v2663
    %2994 = vmatprep.subr.bf16.mxu0 0
    %2995 = vmatpush1.bf16.msra.mxu0 %v2664
    %2996 = vmatprep.subr.bf16.mxu0 0
    %2997 = vmatpush1.bf16.msra.mxu0 %v2665
    %2998 = vmatprep.subr.bf16.mxu0 0
    %2999 = vmatpush1.bf16.msra.mxu0 %v2666
    %3000 = vmatprep.subr.bf16.mxu0 0
    %3001 = vmatpush1.bf16.msra.mxu0 %v2667
    %3002 = vmatprep.subr.bf16.mxu0 0
    %3003 = vmatpush1.bf16.msra.mxu0 %v2668
    %3004 = vmatprep.subr.bf16.mxu0 0
    %3005 = vmatpush1.bf16.msra.mxu0 %v2669
    %3006 = vmatprep.subr.bf16.mxu0 0
    %3007 = vmatpush1.bf16.msra.mxu0 %v2670
    %3008 = vmatprep.subr.bf16.mxu0 0
    %3009 = vmatpush1.bf16.msra.mxu0 %v2671
    %3010 = vmatprep.subr.bf16.mxu0 0
    %3011 = vmatpush1.bf16.msra.mxu0 %v2672
    %3012 = vmatprep.subr.bf16.mxu0 0
    %3013 = vmatpush1.bf16.msra.mxu0 %v2673
    %3014 = vmatprep.mubr.bf16.mxu0 %v1996
    %3015 = vmatmul.mubr.bf16.gmra.mrb[0].mxu0 %v1995
    %v3016 = vpop.f32.mrb[0].mxu0
    %v3017 = vadd.f32 %v2968, %v3016
    %v3018 = vpop.f32.mrb[0].mxu0
    %v3019 = vpop.f32.mrb[0].mxu0
    %v3020 = vadd.f32 %v2971, %v3019
    %v3021 = vpop.f32.mrb[0].mxu0
    %3022 = vmatprep.mubr.bf16.mxu0 %v2008
    %3023 = vmatmul.mubr.bf16.gmra.mrb[0].mxu0 %v2007
    %v3024 = vpop.f32.mrb[0].mxu0
    %v3025 = vadd.f32 %v2976, %v3024
    %v3026 = vpop.f32.mrb[0].mxu0
    %v3027 = vpop.f32.mrb[0].mxu0
    %v3028 = vadd.f32 %v2979, %v3027
    %v3029 = vpop.f32.mrb[0].mxu0
    %3030 = vdwg.mxu0
    %3031 = vmatprep.subr.bf16.mxu0 0
    %3032 = vmatpush1.bf16.msra.mxu0 %v2674
    %3033 = vmatprep.subr.bf16.mxu0 0
    %3034 = vmatpush1.bf16.msra.mxu0 %v2675
    %3035 = vmatprep.subr.bf16.mxu0 0
    %3036 = vmatpush1.bf16.msra.mxu0 %v2676
    %3037 = vmatprep.subr.bf16.mxu0 0
    %3038 = vmatpush1.bf16.msra.mxu0 %v2677
    %3039 = vmatprep.subr.bf16.mxu0 0
    %3040 = vmatpush1.bf16.msra.mxu0 %v2678
    %3041 = vmatprep.subr.bf16.mxu0 0
    %3042 = vmatpush1.bf16.msra.mxu0 %v2679
    %3043 = vmatprep.subr.bf16.mxu0 0
    %3044 = vmatpush1.bf16.msra.mxu0 %v2680
    %3045 = vmatprep.subr.bf16.mxu0 0
    %3046 = vmatpush1.bf16.msra.mxu0 %v2681
    %3047 = vmatprep.subr.bf16.mxu0 0
    %3048 = vmatpush1.bf16.msra.mxu0 %v2682
    %3049 = vmatprep.subr.bf16.mxu0 0
    %3050 = vmatpush1.bf16.msra.mxu0 %v2683
    %3051 = vmatprep.subr.bf16.mxu0 0
    %3052 = vmatpush1.bf16.msra.mxu0 %v2684
    %3053 = vmatprep.subr.bf16.mxu0 0
    %3054 = vmatpush1.bf16.msra.mxu0 %v2685
    %3055 = vmatprep.subr.bf16.mxu0 0
    %3056 = vmatpush1.bf16.msra.mxu0 %v2686
    %3057 = vmatprep.subr.bf16.mxu0 0
    %3058 = vmatpush1.bf16.msra.mxu0 %v2687
    %3059 = vmatprep.subr.bf16.mxu0 0
    %3060 = vmatpush1.bf16.msra.mxu0 %v2688
    %3061 = vmatprep.subr.bf16.mxu0 0
    %3062 = vmatpush1.bf16.msra.mxu0 %v2689
    %3063 = vmatprep.mubr.bf16.mxu0 %v1998
    %3064 = vmatmul.mubr.bf16.gmra.mrb[0].mxu0 %v1997
    %v3065 = vpop.f32.mrb[0].mxu0
    %v3066 = vadd.f32 %v3017, %v3065
    %v3067 = vpop.f32.mrb[0].mxu0
    %v3068 = vpop.f32.mrb[0].mxu0
    %v3069 = vadd.f32 %v3020, %v3068
    %v3070 = vpop.f32.mrb[0].mxu0
    %3071 = vmatprep.mubr.bf16.mxu0 %v2010
    %3072 = vmatmul.mubr.bf16.gmra.mrb[0].mxu0 %v2009
    %v3073 = vpop.f32.mrb[0].mxu0
    %v3074 = vadd.f32 %v3025, %v3073
    %v3075 = vpop.f32.mrb[0].mxu0
    %v3076 = vpop.f32.mrb[0].mxu0
    %v3077 = vadd.f32 %v3028, %v3076
    %v3078 = vpop.f32.mrb[0].mxu0
    %3079 = vdwg.mxu0
    %v3080 = vmax.f32 %v3066, 0.0
    %v3081 = vmax.f32 %v3069, 0.0
    %v3082 = vmax.f32 %v3074, 0.0
    %v3083 = vmax.f32 %v3077, 0.0
    %v3084 = vadd.f32 %v457, %v3080
    %v3085 = vadd.f32 %v462, %v3081
    %v3086 = vadd.f32 %v467, %v3082
    %v3087 = vadd.f32 %v472, %v3083
    %v3088 = vmul.f32 %v3084, %v3084
    %v3089 = vmul.f32 %v3085, %v3085
    %v3090 = vmul.f32 %v3086, %v3086
    %v3091 = vmul.f32 %v3087, %v3087
    %v3092 = vpack.c.bf16 %v3085, %v3084
    %v3093 = vpack.c.bf16 %v3089, %v3088
    %v3094 = vpack.c.bf16 %v3087, %v3086
    %v3095 = vpack.c.bf16 %v3091, %v3090
    %3096 = vmatprep.subr.bf16.mxu0 %v3093
    %3097 = vmatpush1.bf16.msra.mxu0 %v3092
    %3098 = vmatprep.subr.bf16.mxu0 %v3095
    %3099 = vmatpush1.bf16.msra.mxu0 %v3094
    %3100 = vmatprep.subr.bf16.mxu0 0
    %3101 = vmatpush1.bf16.msra.mxu0 0
    %3102 = vmatprep.subr.bf16.mxu0 0
    %3103 = vmatpush1.bf16.msra.mxu0 0
    %3104 = vmatprep.subr.bf16.mxu0 0
    %3105 = vmatpush1.bf16.msra.mxu0 0
    %3106 = vmatprep.subr.bf16.mxu0 0
    %3107 = vmatpush1.bf16.msra.mxu0 0
    %3108 = vmatprep.subr.bf16.mxu0 0
    %3109 = vmatpush1.bf16.msra.mxu0 0
    %3110 = vmatprep.subr.bf16.mxu0 0
    %3111 = vmatpush1.bf16.msra.mxu0 0
    %3112 = vmatprep.subr.bf16.mxu0 0
    %3113 = vmatpush1.bf16.msra.mxu0 0
    %3114 = vmatprep.subr.bf16.mxu0 0
    %3115 = vmatpush1.bf16.msra.mxu0 0
    %3116 = vmatprep.subr.bf16.mxu0 0
    %3117 = vmatpush1.bf16.msra.mxu0 0
    %3118 = vmatprep.subr.bf16.mxu0 0
    %3119 = vmatpush1.bf16.msra.mxu0 0
    %3120 = vmatprep.subr.bf16.mxu0 0
    %3121 = vmatpush1.bf16.msra.mxu0 0
    %3122 = vmatprep.subr.bf16.mxu0 0
    %3123 = vmatpush1.bf16.msra.mxu0 0
    %3124 = vmatprep.subr.bf16.mxu0 0
    %3125 = vmatpush1.bf16.msra.mxu0 0
    %3126 = vmatprep.subr.bf16.mxu0 0
    %3127 = vmatpush1.bf16.msra.mxu0 0
    %3128 = vmatprep.mubr.bf16.mxu0 0
    %3129 = vmatmul.mubr.bf16.gmra.mrb[0].mxu0 %v539
    %v3130 = vpop.f32.mrb[0].mxu0
    %v3131 = vadd.f32 0.0, %v3130
    %v3132 = vpop.f32.mrb[0].mxu0
    %v3133 = vadd.f32 0.0, %v3132
    %v3134 = vpop.f32.mrb[0].mxu0
    %v3135 = vadd.f32 0.0, %v3134
    %v3136 = vpop.f32.mrb[0].mxu0
    %v3137 = vadd.f32 0.0, %v3136
    %3138 = vmatprep.mubr.bf16.mxu0 0
    %3139 = vmatmul.mubr.bf16.gmra.mrb[0].mxu0 %v542
    %v3140 = vpop.f32.mrb[0].mxu0
    %v3141 = vadd.f32 0.0, %v3140
    %v3142 = vpop.f32.mrb[0].mxu0
    %v3143 = vadd.f32 0.0, %v3142
    %v3144 = vpop.f32.mrb[0].mxu0
    %v3145 = vadd.f32 0.0, %v3144
    %v3146 = vpop.f32.mrb[0].mxu0
    %v3147 = vadd.f32 0.0, %v3146
    %3148 = vdwg.mxu0
    %v3149 = vmul.f32 %v3131, %v497
    %v3150 = vmul.f32 %v3135, %v499
    %v3151 = vmul.f32 %v3141, %v501
    %v3152 = vmul.f32 %v3145, %v503
    %v3153 = vmul.f32 %v3133, %v497
    %v3154 = vmul.f32 %v3137, %v499
    %v3155 = vmul.f32 %v3143, %v501
    %v3156 = vmul.f32 %v3147, %v503
    %v3157 = vmul.f32 %v3149, %v3149
    %v3158 = vmul.f32 %v3150, %v3150
    %v3159 = vmul.f32 %v3151, %v3151
    %v3160 = vmul.f32 %v3152, %v3152
    %v3161 = vsub.f32 %v3153, %v3157
    %v3162 = vsub.f32 %v3154, %v3158
    %v3163 = vsub.f32 %v3155, %v3159
    %v3164 = vsub.f32 %v3156, %v3160
    %v3165 = vmax.f32 %v3161, 0.0
    %v3166 = vmax.f32 %v3162, 0.0
    %v3167 = vmax.f32 %v3163, 0.0
    %v3168 = vmax.f32 %v3164, 0.0
    %v3169 = vadd.f32 %v3165, 1e-05
    %v3170 = vadd.f32 %v3166, 1e-05
    %v3171 = vadd.f32 %v3167, 1e-05
    %v3172 = vadd.f32 %v3168, 1e-05
    %v3173 = vrsqrt.pop %v3169
    %v3174 = vmul.f32 %v3169, %v3173
    %vm3175 = vcmp.eq.f32.partialorder %v3169, inf
    %v3176 = vsel %vm3175, %v3169, %v3174
    %vm3177 = vcmp.eq.f32.partialorder %v3169, 0.0
    %v3178 = vand.u32 %v3169, 2147483648
    %v3179 = vsel %vm3177, %v3178, %v3176
    %v3180 = vrsqrt.pop %v3170
    %v3181 = vmul.f32 %v3170, %v3180
    %vm3182 = vcmp.eq.f32.partialorder %v3170, inf
    %v3183 = vsel %vm3182, %v3170, %v3181
    %vm3184 = vcmp.eq.f32.partialorder %v3170, 0.0
    %v3185 = vand.u32 %v3170, 2147483648
    %v3186 = vsel %vm3184, %v3185, %v3183
    %v3187 = vrsqrt.pop %v3171
    %v3188 = vmul.f32 %v3171, %v3187
    %vm3189 = vcmp.eq.f32.partialorder %v3171, inf
    %v3190 = vsel %vm3189, %v3171, %v3188
    %vm3191 = vcmp.eq.f32.partialorder %v3171, 0.0
    %v3192 = vand.u32 %v3171, 2147483648
    %v3193 = vsel %vm3191, %v3192, %v3190
    %v3194 = vrsqrt.pop %v3172
    %v3195 = vmul.f32 %v3172, %v3194
    %vm3196 = vcmp.eq.f32.partialorder %v3172, inf
    %v3197 = vsel %vm3196, %v3172, %v3195
    %vm3198 = vcmp.eq.f32.partialorder %v3172, 0.0
    %v3199 = vand.u32 %v3172, 2147483648
    %v3200 = vsel %vm3198, %v3199, %v3197
    %v3201 = vsub.f32 0.0, %v3084
    %v3202 = vsub.f32 0.0, %v3085
    %v3203 = vsub.f32 0.0, %v3086
    %v3204 = vsub.f32 0.0, %v3087
    %v3205 = vlaneseq
    %v3206 = vshrl.u32 %v3205, 7
    %v3207 = vsub.s32 0, %v3206
    %v3208 = vrot.slane %v3084, %v3207
    %v3209 = vlaneseq
    %v3210 = vshrl.u32 %v3209, 7
    %v3211 = vsub.s32 0, %v3210
    %v3212 = vrot.slane %v3201, %v3211
    %v3213 = vmax.f32 %v3208, -3e+38
    %v3214 = vmax.f32 %v3212, -3e+38
    %v3215 = vsel %vm683, %v3213, -3e+38
    %v3216 = vsel %vm683, %v3214, -3e+38
    %v3217 = vsel %vm684, %v3213, -3e+38
    %v3218 = vsel %vm684, %v3214, -3e+38
    %v3219 = vsel %vm685, %v3213, -3e+38
    %v3220 = vsel %vm685, %v3214, -3e+38
    %v3221 = vsel %vm686, %v3213, -3e+38
    %v3222 = vsel %vm686, %v3214, -3e+38
    %v3223 = vlaneseq
    %v3224 = vshrl.u32 %v3223, 7
    %v3225 = vsub.s32 1, %v3224
    %v3226 = vrot.slane %v3084, %v3225
    %v3227 = vlaneseq
    %v3228 = vshrl.u32 %v3227, 7
    %v3229 = vsub.s32 1, %v3228
    %v3230 = vrot.slane %v3201, %v3229
    %v3231 = vmax.f32 %v3215, %v3226
    %v3232 = vmax.f32 %v3216, %v3230
    %v3233 = vmax.f32 %v3217, %v3226
    %v3234 = vmax.f32 %v3218, %v3230
    %v3235 = vmax.f32 %v3219, %v3226
    %v3236 = vmax.f32 %v3220, %v3230
    %v3237 = vmax.f32 %v3221, %v3226
    %v3238 = vmax.f32 %v3222, %v3230
    %v3239 = vsel %vm723, %v3231, %v3215
    %v3240 = vsel %vm723, %v3232, %v3216
    %v3241 = vsel %vm724, %v3233, %v3217
    %v3242 = vsel %vm724, %v3234, %v3218
    %v3243 = vsel %vm725, %v3235, %v3219
    %v3244 = vsel %vm725, %v3236, %v3220
    %v3245 = vsel %vm726, %v3237, %v3221
    %v3246 = vsel %vm726, %v3238, %v3222
    %v3247 = vlaneseq
    %v3248 = vshrl.u32 %v3247, 7
    %v3249 = vsub.s32 2, %v3248
    %v3250 = vrot.slane %v3084, %v3249
    %v3251 = vlaneseq
    %v3252 = vshrl.u32 %v3251, 7
    %v3253 = vsub.s32 2, %v3252
    %v3254 = vrot.slane %v3201, %v3253
    %v3255 = vmax.f32 %v3239, %v3250
    %v3256 = vmax.f32 %v3240, %v3254
    %v3257 = vmax.f32 %v3241, %v3250
    %v3258 = vmax.f32 %v3242, %v3254
    %v3259 = vmax.f32 %v3243, %v3250
    %v3260 = vmax.f32 %v3244, %v3254
    %v3261 = vmax.f32 %v3245, %v3250
    %v3262 = vmax.f32 %v3246, %v3254
    %v3263 = vsel %vm763, %v3255, %v3239
    %v3264 = vsel %vm763, %v3256, %v3240
    %v3265 = vsel %vm764, %v3257, %v3241
    %v3266 = vsel %vm764, %v3258, %v3242
    %v3267 = vsel %vm765, %v3259, %v3243
    %v3268 = vsel %vm765, %v3260, %v3244
    %v3269 = vsel %vm766, %v3261, %v3245
    %v3270 = vsel %vm766, %v3262, %v3246
    %v3271 = vlaneseq
    %v3272 = vshrl.u32 %v3271, 7
    %v3273 = vsub.s32 3, %v3272
    %v3274 = vrot.slane %v3084, %v3273
    %v3275 = vlaneseq
    %v3276 = vshrl.u32 %v3275, 7
    %v3277 = vsub.s32 3, %v3276
    %v3278 = vrot.slane %v3201, %v3277
    %v3279 = vmax.f32 %v3263, %v3274
    %v3280 = vmax.f32 %v3264, %v3278
    %v3281 = vmax.f32 %v3265, %v3274
    %v3282 = vmax.f32 %v3266, %v3278
    %v3283 = vmax.f32 %v3267, %v3274
    %v3284 = vmax.f32 %v3268, %v3278
    %v3285 = vmax.f32 %v3269, %v3274
    %v3286 = vmax.f32 %v3270, %v3278
    %v3287 = vsel %vm803, %v3279, %v3263
    %v3288 = vsel %vm803, %v3280, %v3264
    %v3289 = vsel %vm804, %v3281, %v3265
    %v3290 = vsel %vm804, %v3282, %v3266
    %v3291 = vsel %vm805, %v3283, %v3267
    %v3292 = vsel %vm805, %v3284, %v3268
    %v3293 = vsel %vm806, %v3285, %v3269
    %v3294 = vsel %vm806, %v3286, %v3270
    %v3295 = vlaneseq
    %v3296 = vshrl.u32 %v3295, 7
    %v3297 = vsub.s32 4, %v3296
    %v3298 = vrot.slane %v3084, %v3297
    %v3299 = vlaneseq
    %v3300 = vshrl.u32 %v3299, 7
    %v3301 = vsub.s32 4, %v3300
    %v3302 = vrot.slane %v3201, %v3301
    %v3303 = vmax.f32 %v3287, %v3298
    %v3304 = vmax.f32 %v3288, %v3302
    %v3305 = vmax.f32 %v3289, %v3298
    %v3306 = vmax.f32 %v3290, %v3302
    %v3307 = vmax.f32 %v3291, %v3298
    %v3308 = vmax.f32 %v3292, %v3302
    %v3309 = vmax.f32 %v3293, %v3298
    %v3310 = vmax.f32 %v3294, %v3302
    %v3311 = vsel %vm843, %v3303, %v3287
    %v3312 = vsel %vm843, %v3304, %v3288
    %v3313 = vsel %vm844, %v3305, %v3289
    %v3314 = vsel %vm844, %v3306, %v3290
    %v3315 = vsel %vm845, %v3307, %v3291
    %v3316 = vsel %vm845, %v3308, %v3292
    %v3317 = vsel %vm846, %v3309, %v3293
    %v3318 = vsel %vm846, %v3310, %v3294
    %v3319 = vlaneseq
    %v3320 = vshrl.u32 %v3319, 7
    %v3321 = vsub.s32 5, %v3320
    %v3322 = vrot.slane %v3084, %v3321
    %v3323 = vlaneseq
    %v3324 = vshrl.u32 %v3323, 7
    %v3325 = vsub.s32 5, %v3324
    %v3326 = vrot.slane %v3201, %v3325
    %v3327 = vmax.f32 %v3311, %v3322
    %v3328 = vmax.f32 %v3312, %v3326
    %v3329 = vmax.f32 %v3313, %v3322
    %v3330 = vmax.f32 %v3314, %v3326
    %v3331 = vmax.f32 %v3315, %v3322
    %v3332 = vmax.f32 %v3316, %v3326
    %v3333 = vmax.f32 %v3317, %v3322
    %v3334 = vmax.f32 %v3318, %v3326
    %v3335 = vsel %vm883, %v3327, %v3311
    %v3336 = vsel %vm883, %v3328, %v3312
    %v3337 = vsel %vm884, %v3329, %v3313
    %v3338 = vsel %vm884, %v3330, %v3314
    %v3339 = vsel %vm885, %v3331, %v3315
    %v3340 = vsel %vm885, %v3332, %v3316
    %v3341 = vsel %vm886, %v3333, %v3317
    %v3342 = vsel %vm886, %v3334, %v3318
    %v3343 = vlaneseq
    %v3344 = vshrl.u32 %v3343, 7
    %v3345 = vsub.s32 6, %v3344
    %v3346 = vrot.slane %v3084, %v3345
    %v3347 = vlaneseq
    %v3348 = vshrl.u32 %v3347, 7
    %v3349 = vsub.s32 6, %v3348
    %v3350 = vrot.slane %v3201, %v3349
    %v3351 = vmax.f32 %v3335, %v3346
    %v3352 = vmax.f32 %v3336, %v3350
    %v3353 = vmax.f32 %v3337, %v3346
    %v3354 = vmax.f32 %v3338, %v3350
    %v3355 = vmax.f32 %v3339, %v3346
    %v3356 = vmax.f32 %v3340, %v3350
    %v3357 = vmax.f32 %v3341, %v3346
    %v3358 = vmax.f32 %v3342, %v3350
    %v3359 = vsel %vm923, %v3351, %v3335
    %v3360 = vsel %vm923, %v3352, %v3336
    %v3361 = vsel %vm924, %v3353, %v3337
    %v3362 = vsel %vm924, %v3354, %v3338
    %v3363 = vsel %vm925, %v3355, %v3339
    %v3364 = vsel %vm925, %v3356, %v3340
    %v3365 = vsel %vm926, %v3357, %v3341
    %v3366 = vsel %vm926, %v3358, %v3342
    %v3367 = vlaneseq
    %v3368 = vshrl.u32 %v3367, 7
    %v3369 = vsub.s32 7, %v3368
    %v3370 = vrot.slane %v3084, %v3369
    %v3371 = vlaneseq
    %v3372 = vshrl.u32 %v3371, 7
    %v3373 = vsub.s32 7, %v3372
    %v3374 = vrot.slane %v3201, %v3373
    %v3375 = vmax.f32 %v3359, %v3370
    %v3376 = vmax.f32 %v3360, %v3374
    %v3377 = vmax.f32 %v3361, %v3370
    %v3378 = vmax.f32 %v3362, %v3374
    %v3379 = vmax.f32 %v3363, %v3370
    %v3380 = vmax.f32 %v3364, %v3374
    %v3381 = vmax.f32 %v3365, %v3370
    %v3382 = vmax.f32 %v3366, %v3374
    %v3383 = vsel %vm963, %v3375, %v3359
    %v3384 = vsel %vm963, %v3376, %v3360
    %v3385 = vsel %vm964, %v3377, %v3361
    %v3386 = vsel %vm964, %v3378, %v3362
    %v3387 = vsel %vm965, %v3379, %v3363
    %v3388 = vsel %vm965, %v3380, %v3364
    %v3389 = vsel %vm966, %v3381, %v3365
    %v3390 = vsel %vm966, %v3382, %v3366
    %v3391 = vlaneseq
    %v3392 = vshrl.u32 %v3391, 7
    %v3393 = vsub.s32 0, %v3392
    %v3394 = vrot.slane %v3085, %v3393
    %v3395 = vlaneseq
    %v3396 = vshrl.u32 %v3395, 7
    %v3397 = vsub.s32 0, %v3396
    %v3398 = vrot.slane %v3202, %v3397
    %v3399 = vmax.f32 %v3383, %v3394
    %v3400 = vmax.f32 %v3384, %v3398
    %v3401 = vmax.f32 %v3385, %v3394
    %v3402 = vmax.f32 %v3386, %v3398
    %v3403 = vmax.f32 %v3387, %v3394
    %v3404 = vmax.f32 %v3388, %v3398
    %v3405 = vmax.f32 %v3389, %v3394
    %v3406 = vmax.f32 %v3390, %v3398
    %v3407 = vsel %vm1003, %v3399, %v3383
    %v3408 = vsel %vm1003, %v3400, %v3384
    %v3409 = vsel %vm1004, %v3401, %v3385
    %v3410 = vsel %vm1004, %v3402, %v3386
    %v3411 = vsel %vm1005, %v3403, %v3387
    %v3412 = vsel %vm1005, %v3404, %v3388
    %v3413 = vsel %vm1006, %v3405, %v3389
    %v3414 = vsel %vm1006, %v3406, %v3390
    %v3415 = vlaneseq
    %v3416 = vshrl.u32 %v3415, 7
    %v3417 = vsub.s32 1, %v3416
    %v3418 = vrot.slane %v3085, %v3417
    %v3419 = vlaneseq
    %v3420 = vshrl.u32 %v3419, 7
    %v3421 = vsub.s32 1, %v3420
    %v3422 = vrot.slane %v3202, %v3421
    %v3423 = vmax.f32 %v3407, %v3418
    %v3424 = vmax.f32 %v3408, %v3422
    %v3425 = vmax.f32 %v3409, %v3418
    %v3426 = vmax.f32 %v3410, %v3422
    %v3427 = vmax.f32 %v3411, %v3418
    %v3428 = vmax.f32 %v3412, %v3422
    %v3429 = vmax.f32 %v3413, %v3418
    %v3430 = vmax.f32 %v3414, %v3422
    %v3431 = vsel %vm1043, %v3423, %v3407
    %v3432 = vsel %vm1043, %v3424, %v3408
    %v3433 = vsel %vm1044, %v3425, %v3409
    %v3434 = vsel %vm1044, %v3426, %v3410
    %v3435 = vsel %vm1045, %v3427, %v3411
    %v3436 = vsel %vm1045, %v3428, %v3412
    %v3437 = vsel %vm1046, %v3429, %v3413
    %v3438 = vsel %vm1046, %v3430, %v3414
    %v3439 = vlaneseq
    %v3440 = vshrl.u32 %v3439, 7
    %v3441 = vsub.s32 2, %v3440
    %v3442 = vrot.slane %v3085, %v3441
    %v3443 = vlaneseq
    %v3444 = vshrl.u32 %v3443, 7
    %v3445 = vsub.s32 2, %v3444
    %v3446 = vrot.slane %v3202, %v3445
    %v3447 = vmax.f32 %v3431, %v3442
    %v3448 = vmax.f32 %v3432, %v3446
    %v3449 = vmax.f32 %v3433, %v3442
    %v3450 = vmax.f32 %v3434, %v3446
    %v3451 = vmax.f32 %v3435, %v3442
    %v3452 = vmax.f32 %v3436, %v3446
    %v3453 = vmax.f32 %v3437, %v3442
    %v3454 = vmax.f32 %v3438, %v3446
    %v3455 = vsel %vm1083, %v3447, %v3431
    %v3456 = vsel %vm1083, %v3448, %v3432
    %v3457 = vsel %vm1084, %v3449, %v3433
    %v3458 = vsel %vm1084, %v3450, %v3434
    %v3459 = vsel %vm1085, %v3451, %v3435
    %v3460 = vsel %vm1085, %v3452, %v3436
    %v3461 = vsel %vm1086, %v3453, %v3437
    %v3462 = vsel %vm1086, %v3454, %v3438
    %v3463 = vlaneseq
    %v3464 = vshrl.u32 %v3463, 7
    %v3465 = vsub.s32 3, %v3464
    %v3466 = vrot.slane %v3085, %v3465
    %v3467 = vlaneseq
    %v3468 = vshrl.u32 %v3467, 7
    %v3469 = vsub.s32 3, %v3468
    %v3470 = vrot.slane %v3202, %v3469
    %v3471 = vmax.f32 %v3455, %v3466
    %v3472 = vmax.f32 %v3456, %v3470
    %v3473 = vmax.f32 %v3457, %v3466
    %v3474 = vmax.f32 %v3458, %v3470
    %v3475 = vmax.f32 %v3459, %v3466
    %v3476 = vmax.f32 %v3460, %v3470
    %v3477 = vmax.f32 %v3461, %v3466
    %v3478 = vmax.f32 %v3462, %v3470
    %v3479 = vsel %vm1123, %v3471, %v3455
    %v3480 = vsel %vm1123, %v3472, %v3456
    %v3481 = vsel %vm1124, %v3473, %v3457
    %v3482 = vsel %vm1124, %v3474, %v3458
    %v3483 = vsel %vm1125, %v3475, %v3459
    %v3484 = vsel %vm1125, %v3476, %v3460
    %v3485 = vsel %vm1126, %v3477, %v3461
    %v3486 = vsel %vm1126, %v3478, %v3462
    %v3487 = vlaneseq
    %v3488 = vshrl.u32 %v3487, 7
    %v3489 = vsub.s32 4, %v3488
    %v3490 = vrot.slane %v3085, %v3489
    %v3491 = vlaneseq
    %v3492 = vshrl.u32 %v3491, 7
    %v3493 = vsub.s32 4, %v3492
    %v3494 = vrot.slane %v3202, %v3493
    %v3495 = vmax.f32 %v3479, %v3490
    %v3496 = vmax.f32 %v3480, %v3494
    %v3497 = vmax.f32 %v3481, %v3490
    %v3498 = vmax.f32 %v3482, %v3494
    %v3499 = vmax.f32 %v3483, %v3490
    %v3500 = vmax.f32 %v3484, %v3494
    %v3501 = vmax.f32 %v3485, %v3490
    %v3502 = vmax.f32 %v3486, %v3494
    %v3503 = vsel %vm1163, %v3495, %v3479
    %v3504 = vsel %vm1163, %v3496, %v3480
    %v3505 = vsel %vm1164, %v3497, %v3481
    %v3506 = vsel %vm1164, %v3498, %v3482
    %v3507 = vsel %vm1165, %v3499, %v3483
    %v3508 = vsel %vm1165, %v3500, %v3484
    %v3509 = vsel %vm1166, %v3501, %v3485
    %v3510 = vsel %vm1166, %v3502, %v3486
    %v3511 = vlaneseq
    %v3512 = vshrl.u32 %v3511, 7
    %v3513 = vsub.s32 5, %v3512
    %v3514 = vrot.slane %v3085, %v3513
    %v3515 = vlaneseq
    %v3516 = vshrl.u32 %v3515, 7
    %v3517 = vsub.s32 5, %v3516
    %v3518 = vrot.slane %v3202, %v3517
    %v3519 = vmax.f32 %v3503, %v3514
    %v3520 = vmax.f32 %v3504, %v3518
    %v3521 = vmax.f32 %v3505, %v3514
    %v3522 = vmax.f32 %v3506, %v3518
    %v3523 = vmax.f32 %v3507, %v3514
    %v3524 = vmax.f32 %v3508, %v3518
    %v3525 = vmax.f32 %v3509, %v3514
    %v3526 = vmax.f32 %v3510, %v3518
    %v3527 = vsel %vm1203, %v3519, %v3503
    %v3528 = vsel %vm1203, %v3520, %v3504
    %v3529 = vsel %vm1204, %v3521, %v3505
    %v3530 = vsel %vm1204, %v3522, %v3506
    %v3531 = vsel %vm1205, %v3523, %v3507
    %v3532 = vsel %vm1205, %v3524, %v3508
    %v3533 = vsel %vm1206, %v3525, %v3509
    %v3534 = vsel %vm1206, %v3526, %v3510
    %v3535 = vlaneseq
    %v3536 = vshrl.u32 %v3535, 7
    %v3537 = vsub.s32 6, %v3536
    %v3538 = vrot.slane %v3085, %v3537
    %v3539 = vlaneseq
    %v3540 = vshrl.u32 %v3539, 7
    %v3541 = vsub.s32 6, %v3540
    %v3542 = vrot.slane %v3202, %v3541
    %v3543 = vmax.f32 %v3527, %v3538
    %v3544 = vmax.f32 %v3528, %v3542
    %v3545 = vmax.f32 %v3529, %v3538
    %v3546 = vmax.f32 %v3530, %v3542
    %v3547 = vmax.f32 %v3531, %v3538
    %v3548 = vmax.f32 %v3532, %v3542
    %v3549 = vmax.f32 %v3533, %v3538
    %v3550 = vmax.f32 %v3534, %v3542
    %v3551 = vsel %vm1243, %v3543, %v3527
    %v3552 = vsel %vm1243, %v3544, %v3528
    %v3553 = vsel %vm1244, %v3545, %v3529
    %v3554 = vsel %vm1244, %v3546, %v3530
    %v3555 = vsel %vm1245, %v3547, %v3531
    %v3556 = vsel %vm1245, %v3548, %v3532
    %v3557 = vsel %vm1246, %v3549, %v3533
    %v3558 = vsel %vm1246, %v3550, %v3534
    %v3559 = vlaneseq
    %v3560 = vshrl.u32 %v3559, 7
    %v3561 = vsub.s32 7, %v3560
    %v3562 = vrot.slane %v3085, %v3561
    %v3563 = vlaneseq
    %v3564 = vshrl.u32 %v3563, 7
    %v3565 = vsub.s32 7, %v3564
    %v3566 = vrot.slane %v3202, %v3565
    %v3567 = vmax.f32 %v3551, %v3562
    %v3568 = vmax.f32 %v3552, %v3566
    %v3569 = vmax.f32 %v3553, %v3562
    %v3570 = vmax.f32 %v3554, %v3566
    %v3571 = vmax.f32 %v3555, %v3562
    %v3572 = vmax.f32 %v3556, %v3566
    %v3573 = vmax.f32 %v3557, %v3562
    %v3574 = vmax.f32 %v3558, %v3566
    %v3575 = vsel %vm1283, %v3567, %v3551
    %v3576 = vsel %vm1283, %v3568, %v3552
    %v3577 = vsel %vm1284, %v3569, %v3553
    %v3578 = vsel %vm1284, %v3570, %v3554
    %v3579 = vsel %vm1285, %v3571, %v3555
    %v3580 = vsel %vm1285, %v3572, %v3556
    %v3581 = vsel %vm1286, %v3573, %v3557
    %v3582 = vsel %vm1286, %v3574, %v3558
    %v3583 = vlaneseq
    %v3584 = vshrl.u32 %v3583, 7
    %v3585 = vsub.s32 0, %v3584
    %v3586 = vrot.slane %v3086, %v3585
    %v3587 = vlaneseq
    %v3588 = vshrl.u32 %v3587, 7
    %v3589 = vsub.s32 0, %v3588
    %v3590 = vrot.slane %v3203, %v3589
    %v3591 = vmax.f32 %v3575, %v3586
    %v3592 = vmax.f32 %v3576, %v3590
    %v3593 = vmax.f32 %v3577, %v3586
    %v3594 = vmax.f32 %v3578, %v3590
    %v3595 = vmax.f32 %v3579, %v3586
    %v3596 = vmax.f32 %v3580, %v3590
    %v3597 = vmax.f32 %v3581, %v3586
    %v3598 = vmax.f32 %v3582, %v3590
    %v3599 = vsel %vm1323, %v3591, %v3575
    %v3600 = vsel %vm1323, %v3592, %v3576
    %v3601 = vsel %vm1324, %v3593, %v3577
    %v3602 = vsel %vm1324, %v3594, %v3578
    %v3603 = vsel %vm1325, %v3595, %v3579
    %v3604 = vsel %vm1325, %v3596, %v3580
    %v3605 = vsel %vm1326, %v3597, %v3581
    %v3606 = vsel %vm1326, %v3598, %v3582
    %v3607 = vlaneseq
    %v3608 = vshrl.u32 %v3607, 7
    %v3609 = vsub.s32 1, %v3608
    %v3610 = vrot.slane %v3086, %v3609
    %v3611 = vlaneseq
    %v3612 = vshrl.u32 %v3611, 7
    %v3613 = vsub.s32 1, %v3612
    %v3614 = vrot.slane %v3203, %v3613
    %v3615 = vmax.f32 %v3599, %v3610
    %v3616 = vmax.f32 %v3600, %v3614
    %v3617 = vmax.f32 %v3601, %v3610
    %v3618 = vmax.f32 %v3602, %v3614
    %v3619 = vmax.f32 %v3603, %v3610
    %v3620 = vmax.f32 %v3604, %v3614
    %v3621 = vmax.f32 %v3605, %v3610
    %v3622 = vmax.f32 %v3606, %v3614
    %v3623 = vsel %vm1363, %v3615, %v3599
    %v3624 = vsel %vm1363, %v3616, %v3600
    %v3625 = vsel %vm1364, %v3617, %v3601
    %v3626 = vsel %vm1364, %v3618, %v3602
    %v3627 = vsel %vm1365, %v3619, %v3603
    %v3628 = vsel %vm1365, %v3620, %v3604
    %v3629 = vsel %vm1366, %v3621, %v3605
    %v3630 = vsel %vm1366, %v3622, %v3606
    %v3631 = vlaneseq
    %v3632 = vshrl.u32 %v3631, 7
    %v3633 = vsub.s32 2, %v3632
    %v3634 = vrot.slane %v3086, %v3633
    %v3635 = vlaneseq
    %v3636 = vshrl.u32 %v3635, 7
    %v3637 = vsub.s32 2, %v3636
    %v3638 = vrot.slane %v3203, %v3637
    %v3639 = vmax.f32 %v3623, %v3634
    %v3640 = vmax.f32 %v3624, %v3638
    %v3641 = vmax.f32 %v3625, %v3634
    %v3642 = vmax.f32 %v3626, %v3638
    %v3643 = vmax.f32 %v3627, %v3634
    %v3644 = vmax.f32 %v3628, %v3638
    %v3645 = vmax.f32 %v3629, %v3634
    %v3646 = vmax.f32 %v3630, %v3638
    %v3647 = vsel %vm1403, %v3639, %v3623
    %v3648 = vsel %vm1403, %v3640, %v3624
    %v3649 = vsel %vm1404, %v3641, %v3625
    %v3650 = vsel %vm1404, %v3642, %v3626
    %v3651 = vsel %vm1405, %v3643, %v3627
    %v3652 = vsel %vm1405, %v3644, %v3628
    %v3653 = vsel %vm1406, %v3645, %v3629
    %v3654 = vsel %vm1406, %v3646, %v3630
    %v3655 = vlaneseq
    %v3656 = vshrl.u32 %v3655, 7
    %v3657 = vsub.s32 3, %v3656
    %v3658 = vrot.slane %v3086, %v3657
    %v3659 = vlaneseq
    %v3660 = vshrl.u32 %v3659, 7
    %v3661 = vsub.s32 3, %v3660
    %v3662 = vrot.slane %v3203, %v3661
    %v3663 = vmax.f32 %v3647, %v3658
    %v3664 = vmax.f32 %v3648, %v3662
    %v3665 = vmax.f32 %v3649, %v3658
    %v3666 = vmax.f32 %v3650, %v3662
    %v3667 = vmax.f32 %v3651, %v3658
    %v3668 = vmax.f32 %v3652, %v3662
    %v3669 = vmax.f32 %v3653, %v3658
    %v3670 = vmax.f32 %v3654, %v3662
    %v3671 = vsel %vm1443, %v3663, %v3647
    %v3672 = vsel %vm1443, %v3664, %v3648
    %v3673 = vsel %vm1444, %v3665, %v3649
    %v3674 = vsel %vm1444, %v3666, %v3650
    %v3675 = vsel %vm1445, %v3667, %v3651
    %v3676 = vsel %vm1445, %v3668, %v3652
    %v3677 = vsel %vm1446, %v3669, %v3653
    %v3678 = vsel %vm1446, %v3670, %v3654
    %v3679 = vlaneseq
    %v3680 = vshrl.u32 %v3679, 7
    %v3681 = vsub.s32 4, %v3680
    %v3682 = vrot.slane %v3086, %v3681
    %v3683 = vlaneseq
    %v3684 = vshrl.u32 %v3683, 7
    %v3685 = vsub.s32 4, %v3684
    %v3686 = vrot.slane %v3203, %v3685
    %v3687 = vmax.f32 %v3671, %v3682
    %v3688 = vmax.f32 %v3672, %v3686
    %v3689 = vmax.f32 %v3673, %v3682
    %v3690 = vmax.f32 %v3674, %v3686
    %v3691 = vmax.f32 %v3675, %v3682
    %v3692 = vmax.f32 %v3676, %v3686
    %v3693 = vmax.f32 %v3677, %v3682
    %v3694 = vmax.f32 %v3678, %v3686
    %v3695 = vsel %vm1483, %v3687, %v3671
    %v3696 = vsel %vm1483, %v3688, %v3672
    %v3697 = vsel %vm1484, %v3689, %v3673
    %v3698 = vsel %vm1484, %v3690, %v3674
    %v3699 = vsel %vm1485, %v3691, %v3675
    %v3700 = vsel %vm1485, %v3692, %v3676
    %v3701 = vsel %vm1486, %v3693, %v3677
    %v3702 = vsel %vm1486, %v3694, %v3678
    %v3703 = vlaneseq
    %v3704 = vshrl.u32 %v3703, 7
    %v3705 = vsub.s32 5, %v3704
    %v3706 = vrot.slane %v3086, %v3705
    %v3707 = vlaneseq
    %v3708 = vshrl.u32 %v3707, 7
    %v3709 = vsub.s32 5, %v3708
    %v3710 = vrot.slane %v3203, %v3709
    %v3711 = vmax.f32 %v3695, %v3706
    %v3712 = vmax.f32 %v3696, %v3710
    %v3713 = vmax.f32 %v3697, %v3706
    %v3714 = vmax.f32 %v3698, %v3710
    %v3715 = vmax.f32 %v3699, %v3706
    %v3716 = vmax.f32 %v3700, %v3710
    %v3717 = vmax.f32 %v3701, %v3706
    %v3718 = vmax.f32 %v3702, %v3710
    %v3719 = vsel %vm1523, %v3711, %v3695
    %v3720 = vsel %vm1523, %v3712, %v3696
    %v3721 = vsel %vm1524, %v3713, %v3697
    %v3722 = vsel %vm1524, %v3714, %v3698
    %v3723 = vsel %vm1525, %v3715, %v3699
    %v3724 = vsel %vm1525, %v3716, %v3700
    %v3725 = vsel %vm1526, %v3717, %v3701
    %v3726 = vsel %vm1526, %v3718, %v3702
    %v3727 = vlaneseq
    %v3728 = vshrl.u32 %v3727, 7
    %v3729 = vsub.s32 6, %v3728
    %v3730 = vrot.slane %v3086, %v3729
    %v3731 = vlaneseq
    %v3732 = vshrl.u32 %v3731, 7
    %v3733 = vsub.s32 6, %v3732
    %v3734 = vrot.slane %v3203, %v3733
    %v3735 = vmax.f32 %v3719, %v3730
    %v3736 = vmax.f32 %v3720, %v3734
    %v3737 = vmax.f32 %v3721, %v3730
    %v3738 = vmax.f32 %v3722, %v3734
    %v3739 = vmax.f32 %v3723, %v3730
    %v3740 = vmax.f32 %v3724, %v3734
    %v3741 = vmax.f32 %v3725, %v3730
    %v3742 = vmax.f32 %v3726, %v3734
    %v3743 = vsel %vm1563, %v3735, %v3719
    %v3744 = vsel %vm1563, %v3736, %v3720
    %v3745 = vsel %vm1564, %v3737, %v3721
    %v3746 = vsel %vm1564, %v3738, %v3722
    %v3747 = vsel %vm1565, %v3739, %v3723
    %v3748 = vsel %vm1565, %v3740, %v3724
    %v3749 = vsel %vm1566, %v3741, %v3725
    %v3750 = vsel %vm1566, %v3742, %v3726
    %v3751 = vlaneseq
    %v3752 = vshrl.u32 %v3751, 7
    %v3753 = vsub.s32 7, %v3752
    %v3754 = vrot.slane %v3086, %v3753
    %v3755 = vlaneseq
    %v3756 = vshrl.u32 %v3755, 7
    %v3757 = vsub.s32 7, %v3756
    %v3758 = vrot.slane %v3203, %v3757
    %v3759 = vmax.f32 %v3743, %v3754
    %v3760 = vmax.f32 %v3744, %v3758
    %v3761 = vmax.f32 %v3745, %v3754
    %v3762 = vmax.f32 %v3746, %v3758
    %v3763 = vmax.f32 %v3747, %v3754
    %v3764 = vmax.f32 %v3748, %v3758
    %v3765 = vmax.f32 %v3749, %v3754
    %v3766 = vmax.f32 %v3750, %v3758
    %v3767 = vsel %vm1603, %v3759, %v3743
    %v3768 = vsel %vm1603, %v3760, %v3744
    %v3769 = vsel %vm1604, %v3761, %v3745
    %v3770 = vsel %vm1604, %v3762, %v3746
    %v3771 = vsel %vm1605, %v3763, %v3747
    %v3772 = vsel %vm1605, %v3764, %v3748
    %v3773 = vsel %vm1606, %v3765, %v3749
    %v3774 = vsel %vm1606, %v3766, %v3750
    %v3775 = vlaneseq
    %v3776 = vshrl.u32 %v3775, 7
    %v3777 = vsub.s32 0, %v3776
    %v3778 = vrot.slane %v3087, %v3777
    %v3779 = vlaneseq
    %v3780 = vshrl.u32 %v3779, 7
    %v3781 = vsub.s32 0, %v3780
    %v3782 = vrot.slane %v3204, %v3781
    %v3783 = vmax.f32 %v3767, %v3778
    %v3784 = vmax.f32 %v3768, %v3782
    %v3785 = vmax.f32 %v3769, %v3778
    %v3786 = vmax.f32 %v3770, %v3782
    %v3787 = vmax.f32 %v3771, %v3778
    %v3788 = vmax.f32 %v3772, %v3782
    %v3789 = vmax.f32 %v3773, %v3778
    %v3790 = vmax.f32 %v3774, %v3782
    %v3791 = vsel %vm1643, %v3783, %v3767
    %v3792 = vsel %vm1643, %v3784, %v3768
    %v3793 = vsel %vm1644, %v3785, %v3769
    %v3794 = vsel %vm1644, %v3786, %v3770
    %v3795 = vsel %vm1645, %v3787, %v3771
    %v3796 = vsel %vm1645, %v3788, %v3772
    %v3797 = vsel %vm1646, %v3789, %v3773
    %v3798 = vsel %vm1646, %v3790, %v3774
    %v3799 = vlaneseq
    %v3800 = vshrl.u32 %v3799, 7
    %v3801 = vsub.s32 1, %v3800
    %v3802 = vrot.slane %v3087, %v3801
    %v3803 = vlaneseq
    %v3804 = vshrl.u32 %v3803, 7
    %v3805 = vsub.s32 1, %v3804
    %v3806 = vrot.slane %v3204, %v3805
    %v3807 = vmax.f32 %v3791, %v3802
    %v3808 = vmax.f32 %v3792, %v3806
    %v3809 = vmax.f32 %v3793, %v3802
    %v3810 = vmax.f32 %v3794, %v3806
    %v3811 = vmax.f32 %v3795, %v3802
    %v3812 = vmax.f32 %v3796, %v3806
    %v3813 = vmax.f32 %v3797, %v3802
    %v3814 = vmax.f32 %v3798, %v3806
    %v3815 = vsel %vm1683, %v3807, %v3791
    %v3816 = vsel %vm1683, %v3808, %v3792
    %v3817 = vsel %vm1684, %v3809, %v3793
    %v3818 = vsel %vm1684, %v3810, %v3794
    %v3819 = vsel %vm1685, %v3811, %v3795
    %v3820 = vsel %vm1685, %v3812, %v3796
    %v3821 = vsel %vm1686, %v3813, %v3797
    %v3822 = vsel %vm1686, %v3814, %v3798
    %v3823 = vlaneseq
    %v3824 = vshrl.u32 %v3823, 7
    %v3825 = vsub.s32 2, %v3824
    %v3826 = vrot.slane %v3087, %v3825
    %v3827 = vlaneseq
    %v3828 = vshrl.u32 %v3827, 7
    %v3829 = vsub.s32 2, %v3828
    %v3830 = vrot.slane %v3204, %v3829
    %v3831 = vmax.f32 %v3815, %v3826
    %v3832 = vmax.f32 %v3816, %v3830
    %v3833 = vmax.f32 %v3817, %v3826
    %v3834 = vmax.f32 %v3818, %v3830
    %v3835 = vmax.f32 %v3819, %v3826
    %v3836 = vmax.f32 %v3820, %v3830
    %v3837 = vmax.f32 %v3821, %v3826
    %v3838 = vmax.f32 %v3822, %v3830
    %v3839 = vsel %vm1723, %v3831, %v3815
    %v3840 = vsel %vm1723, %v3832, %v3816
    %v3841 = vsel %vm1724, %v3833, %v3817
    %v3842 = vsel %vm1724, %v3834, %v3818
    %v3843 = vsel %vm1725, %v3835, %v3819
    %v3844 = vsel %vm1725, %v3836, %v3820
    %v3845 = vsel %vm1726, %v3837, %v3821
    %v3846 = vsel %vm1726, %v3838, %v3822
    %v3847 = vlaneseq
    %v3848 = vshrl.u32 %v3847, 7
    %v3849 = vsub.s32 3, %v3848
    %v3850 = vrot.slane %v3087, %v3849
    %v3851 = vlaneseq
    %v3852 = vshrl.u32 %v3851, 7
    %v3853 = vsub.s32 3, %v3852
    %v3854 = vrot.slane %v3204, %v3853
    %v3855 = vmax.f32 %v3839, %v3850
    %v3856 = vmax.f32 %v3840, %v3854
    %v3857 = vmax.f32 %v3841, %v3850
    %v3858 = vmax.f32 %v3842, %v3854
    %v3859 = vmax.f32 %v3843, %v3850
    %v3860 = vmax.f32 %v3844, %v3854
    %v3861 = vmax.f32 %v3845, %v3850
    %v3862 = vmax.f32 %v3846, %v3854
    %v3863 = vsel %vm1763, %v3855, %v3839
    %v3864 = vsel %vm1763, %v3856, %v3840
    %v3865 = vsel %vm1764, %v3857, %v3841
    %v3866 = vsel %vm1764, %v3858, %v3842
    %v3867 = vsel %vm1765, %v3859, %v3843
    %v3868 = vsel %vm1765, %v3860, %v3844
    %v3869 = vsel %vm1766, %v3861, %v3845
    %v3870 = vsel %vm1766, %v3862, %v3846
    %v3871 = vlaneseq
    %v3872 = vshrl.u32 %v3871, 7
    %v3873 = vsub.s32 4, %v3872
    %v3874 = vrot.slane %v3087, %v3873
    %v3875 = vlaneseq
    %v3876 = vshrl.u32 %v3875, 7
    %v3877 = vsub.s32 4, %v3876
    %v3878 = vrot.slane %v3204, %v3877
    %v3879 = vmax.f32 %v3863, %v3874
    %v3880 = vmax.f32 %v3864, %v3878
    %v3881 = vmax.f32 %v3865, %v3874
    %v3882 = vmax.f32 %v3866, %v3878
    %v3883 = vmax.f32 %v3867, %v3874
    %v3884 = vmax.f32 %v3868, %v3878
    %v3885 = vmax.f32 %v3869, %v3874
    %v3886 = vmax.f32 %v3870, %v3878
    %v3887 = vsel %vm1803, %v3879, %v3863
    %v3888 = vsel %vm1803, %v3880, %v3864
    %v3889 = vsel %vm1804, %v3881, %v3865
    %v3890 = vsel %vm1804, %v3882, %v3866
    %v3891 = vsel %vm1805, %v3883, %v3867
    %v3892 = vsel %vm1805, %v3884, %v3868
    %v3893 = vsel %vm1806, %v3885, %v3869
    %v3894 = vsel %vm1806, %v3886, %v3870
    %v3895 = vlaneseq
    %v3896 = vshrl.u32 %v3895, 7
    %v3897 = vsub.s32 5, %v3896
    %v3898 = vrot.slane %v3087, %v3897
    %v3899 = vlaneseq
    %v3900 = vshrl.u32 %v3899, 7
    %v3901 = vsub.s32 5, %v3900
    %v3902 = vrot.slane %v3204, %v3901
    %v3903 = vmax.f32 %v3887, %v3898
    %v3904 = vmax.f32 %v3888, %v3902
    %v3905 = vmax.f32 %v3889, %v3898
    %v3906 = vmax.f32 %v3890, %v3902
    %v3907 = vmax.f32 %v3891, %v3898
    %v3908 = vmax.f32 %v3892, %v3902
    %v3909 = vmax.f32 %v3893, %v3898
    %v3910 = vmax.f32 %v3894, %v3902
    %v3911 = vsel %vm1843, %v3903, %v3887
    %v3912 = vsel %vm1843, %v3904, %v3888
    %v3913 = vsel %vm1844, %v3905, %v3889
    %v3914 = vsel %vm1844, %v3906, %v3890
    %v3915 = vsel %vm1845, %v3907, %v3891
    %v3916 = vsel %vm1845, %v3908, %v3892
    %v3917 = vsel %vm1846, %v3909, %v3893
    %v3918 = vsel %vm1846, %v3910, %v3894
    %v3919 = vlaneseq
    %v3920 = vshrl.u32 %v3919, 7
    %v3921 = vsub.s32 6, %v3920
    %v3922 = vrot.slane %v3087, %v3921
    %v3923 = vlaneseq
    %v3924 = vshrl.u32 %v3923, 7
    %v3925 = vsub.s32 6, %v3924
    %v3926 = vrot.slane %v3204, %v3925
    %v3927 = vmax.f32 %v3911, %v3922
    %v3928 = vmax.f32 %v3912, %v3926
    %v3929 = vmax.f32 %v3913, %v3922
    %v3930 = vmax.f32 %v3914, %v3926
    %v3931 = vmax.f32 %v3915, %v3922
    %v3932 = vmax.f32 %v3916, %v3926
    %v3933 = vmax.f32 %v3917, %v3922
    %v3934 = vmax.f32 %v3918, %v3926
    %v3935 = vsel %vm1883, %v3927, %v3911
    %v3936 = vsel %vm1883, %v3928, %v3912
    %v3937 = vsel %vm1884, %v3929, %v3913
    %v3938 = vsel %vm1884, %v3930, %v3914
    %v3939 = vsel %vm1885, %v3931, %v3915
    %v3940 = vsel %vm1885, %v3932, %v3916
    %v3941 = vsel %vm1886, %v3933, %v3917
    %v3942 = vsel %vm1886, %v3934, %v3918
    %v3943 = vlaneseq
    %v3944 = vshrl.u32 %v3943, 7
    %v3945 = vsub.s32 7, %v3944
    %v3946 = vrot.slane %v3087, %v3945
    %v3947 = vlaneseq
    %v3948 = vshrl.u32 %v3947, 7
    %v3949 = vsub.s32 7, %v3948
    %v3950 = vrot.slane %v3204, %v3949
    %v3951 = vmax.f32 %v3935, %v3946
    %v3952 = vmax.f32 %v3936, %v3950
    %v3953 = vmax.f32 %v3937, %v3946
    %v3954 = vmax.f32 %v3938, %v3950
    %v3955 = vmax.f32 %v3939, %v3946
    %v3956 = vmax.f32 %v3940, %v3950
    %v3957 = vmax.f32 %v3941, %v3946
    %v3958 = vmax.f32 %v3942, %v3950
    %v3959 = vsel %vm1923, %v3951, %v3935
    %v3960 = vsel %vm1923, %v3952, %v3936
    %v3961 = vsel %vm1924, %v3953, %v3937
    %v3962 = vsel %vm1924, %v3954, %v3938
    %v3963 = vsel %vm1925, %v3955, %v3939
    %v3964 = vsel %vm1925, %v3956, %v3940
    %v3965 = vsel %vm1926, %v3957, %v3941
    %v3966 = vsel %vm1926, %v3958, %v3942
    %v3967 = vsel %vm1939, %v3959, 0.0
    %v3968 = vsel %vm1939, %v3960, 0.0
    %v3969 = vsel %vm1940, %v3961, 0.0
    %v3970 = vsel %vm1940, %v3962, 0.0
    %v3971 = vsel %vm1941, %v3963, 0.0
    %v3972 = vsel %vm1941, %v3964, 0.0
    %v3973 = vsel %vm1942, %v3965, 0.0
    %v3974 = vsel %vm1942, %v3966, 0.0
    %v3975 = vsub.f32 0.0, %v3968
    %v3976 = vsub.f32 0.0, %v3970
    %v3977 = vsub.f32 0.0, %v3972
    %v3978 = vsub.f32 0.0, %v3974
    %v3979 = vmul.f32 %v3149, %v516
    %v3980 = vmul.f32 %v3967, %v516
    %v3981 = vmul.f32 %v3975, %v516
    %v3982 = vmul.f32 %v3179, %v516
    %v3983 = vmul.f32 %v3150, %v517
    %v3984 = vmul.f32 %v3969, %v517
    %v3985 = vmul.f32 %v3976, %v517
    %v3986 = vmul.f32 %v3186, %v517
    %v3987 = vmul.f32 %v3151, %v518
    %v3988 = vmul.f32 %v3971, %v518
    %v3989 = vmul.f32 %v3977, %v518
    %v3990 = vmul.f32 %v3193, %v518
    %v3991 = vmul.f32 %v3152, %v519
    %v3992 = vmul.f32 %v3973, %v519
    %v3993 = vmul.f32 %v3978, %v519
    %v3994 = vmul.f32 %v3200, %v519
    %v3995 = vmul.f32 %v3149, %v521
    %v3996 = vmul.f32 %v3967, %v521
    %v3997 = vmul.f32 %v3975, %v521
    %v3998 = vmul.f32 %v3179, %v521
    %v3999 = vmul.f32 %v3150, %v523
    %v4000 = vmul.f32 %v3969, %v523
    %v4001 = vmul.f32 %v3976, %v523
    %v4002 = vmul.f32 %v3186, %v523
    %v4003 = vmul.f32 %v3151, %v525
    %v4004 = vmul.f32 %v3971, %v525
    %v4005 = vmul.f32 %v3977, %v525
    %v4006 = vmul.f32 %v3193, %v525
    %v4007 = vmul.f32 %v3152, %v527
    %v4008 = vmul.f32 %v3973, %v527
    %v4009 = vmul.f32 %v3978, %v527
    %v4010 = vmul.f32 %v3200, %v527
    %v4011 = vpack.c.bf16 %v3150, %v3149
    %v4012 = vpack.c.bf16 %v3969, %v3967
    %v4013 = vpack.c.bf16 %v3976, %v3975
    %v4014 = vpack.c.bf16 %v3186, %v3179
    %v4015 = vpack.c.bf16 %v3983, %v3979
    %v4016 = vpack.c.bf16 %v3984, %v3980
    %v4017 = vpack.c.bf16 %v3985, %v3981
    %v4018 = vpack.c.bf16 %v3986, %v3982
    %v4019 = vpack.c.bf16 %v3999, %v3995
    %v4020 = vpack.c.bf16 %v4000, %v3996
    %v4021 = vpack.c.bf16 %v4001, %v3997
    %v4022 = vpack.c.bf16 %v4002, %v3998
    %v4023 = vpack.c.bf16 %v3152, %v3151
    %v4024 = vpack.c.bf16 %v3973, %v3971
    %v4025 = vpack.c.bf16 %v3978, %v3977
    %v4026 = vpack.c.bf16 %v3200, %v3193
    %v4027 = vpack.c.bf16 %v3991, %v3987
    %v4028 = vpack.c.bf16 %v3992, %v3988
    %v4029 = vpack.c.bf16 %v3993, %v3989
    %v4030 = vpack.c.bf16 %v3994, %v3990
    %v4031 = vpack.c.bf16 %v4007, %v4003
    %v4032 = vpack.c.bf16 %v4008, %v4004
    %v4033 = vpack.c.bf16 %v4009, %v4005
    %v4034 = vpack.c.bf16 %v4010, %v4006
    %v4035 = vld [vmem:[#allocation8] sm:$0xf]
    %v4036 = vld [vmem:[#allocation8 + $0x4] sm:$0xf]
    %v4037 = vld [vmem:[#allocation8 + $0x8] sm:$0xf]
    %v4038 = vld [vmem:[#allocation8 + $0xc] sm:$0xf]
    %v4039 = vld [vmem:[#allocation8 + $0x10] sm:$0xf]
    %v4040 = vld [vmem:[#allocation8 + $0x14] sm:$0xf]
    %v4041 = vld [vmem:[#allocation8 + $0x18] sm:$0xf]
    %v4042 = vld [vmem:[#allocation8 + $0x1c] sm:$0xf]
    %v4043 = vld [vmem:[#allocation8 + $0x20] sm:$0xf]
    %v4044 = vld [vmem:[#allocation8 + $0x24] sm:$0xf]
    %v4045 = vld [vmem:[#allocation8 + $0x28] sm:$0xf]
    %v4046 = vld [vmem:[#allocation8 + $0x2c] sm:$0xf]
    %v4047 = vld [vmem:[#allocation8 + $0x30] sm:$0xf]
    %v4048 = vld [vmem:[#allocation8 + $0x34] sm:$0xf]
    %v4049 = vld [vmem:[#allocation8 + $0x38] sm:$0xf]
    %v4050 = vld [vmem:[#allocation8 + $0x3c] sm:$0xf]
    %v4051 = vld [vmem:[#allocation8 + $0x40] sm:$0xf]
    %v4052 = vld [vmem:[#allocation8 + $0x44] sm:$0xf]
    %v4053 = vld [vmem:[#allocation8 + $0x48] sm:$0xf]
    %v4054 = vld [vmem:[#allocation8 + $0x4c] sm:$0xf]
    %v4055 = vld [vmem:[#allocation8 + $0x50] sm:$0xf]
    %v4056 = vld [vmem:[#allocation8 + $0x54] sm:$0xf]
    %v4057 = vld [vmem:[#allocation8 + $0x58] sm:$0xf]
    %v4058 = vld [vmem:[#allocation8 + $0x5c] sm:$0xf]
    %v4059 = vld [vmem:[#allocation8 + $0x60] sm:$0xf]
    %v4060 = vld [vmem:[#allocation8 + $0x64] sm:$0xf]
    %v4061 = vld [vmem:[#allocation8 + $0x68] sm:$0xf]
    %v4062 = vld [vmem:[#allocation8 + $0x6c] sm:$0xf]
    %v4063 = vld [vmem:[#allocation8 + $0x70] sm:$0xf]
    %v4064 = vld [vmem:[#allocation8 + $0x74] sm:$0xf]
    %v4065 = vld [vmem:[#allocation8 + $0x78] sm:$0xf]
    %v4066 = vld [vmem:[#allocation8 + $0x7c] sm:$0xf]
    %v4067 = vld [vmem:[#allocation8 + $0x80] sm:$0xf]
    %v4068 = vld [vmem:[#allocation8 + $0x84] sm:$0xf]
    %v4069 = vld [vmem:[#allocation8 + $0x88] sm:$0xf]
    %v4070 = vld [vmem:[#allocation8 + $0x8c] sm:$0xf]
    %v4071 = vld [vmem:[#allocation8 + $0x90] sm:$0xf]
    %v4072 = vld [vmem:[#allocation8 + $0x94] sm:$0xf]
    %v4073 = vld [vmem:[#allocation8 + $0x98] sm:$0xf]
    %v4074 = vld [vmem:[#allocation8 + $0x9c] sm:$0xf]
    %v4075 = vld [vmem:[#allocation8 + $0xa0] sm:$0xf]
    %v4076 = vld [vmem:[#allocation8 + $0xa4] sm:$0xf]
    %v4077 = vld [vmem:[#allocation8 + $0xa8] sm:$0xf]
    %v4078 = vld [vmem:[#allocation8 + $0xac] sm:$0xf]
    %v4079 = vld [vmem:[#allocation8 + $0xb0] sm:$0xf]
    %v4080 = vld [vmem:[#allocation8 + $0xb4] sm:$0xf]
    %v4081 = vld [vmem:[#allocation8 + $0xb8] sm:$0xf]
    %v4082 = vld [vmem:[#allocation8 + $0xbc] sm:$0xf]
    %v4083 = vld [vmem:[#allocation8 + $0xc0] sm:$0xf]
    %v4084 = vld [vmem:[#allocation8 + $0xc4] sm:$0xf]
    %v4085 = vld [vmem:[#allocation8 + $0xc8] sm:$0xf]
    %v4086 = vld [vmem:[#allocation8 + $0xcc] sm:$0xf]
    %v4087 = vld [vmem:[#allocation8 + $0xd0] sm:$0xf]
    %v4088 = vld [vmem:[#allocation8 + $0xd4] sm:$0xf]
    %v4089 = vld [vmem:[#allocation8 + $0xd8] sm:$0xf]
    %v4090 = vld [vmem:[#allocation8 + $0xdc] sm:$0xf]
    %v4091 = vld [vmem:[#allocation8 + $0xe0] sm:$0xf]
    %v4092 = vld [vmem:[#allocation8 + $0xe4] sm:$0xf]
    %v4093 = vld [vmem:[#allocation8 + $0xe8] sm:$0xf]
    %v4094 = vld [vmem:[#allocation8 + $0xec] sm:$0xf]
    %v4095 = vld [vmem:[#allocation8 + $0xf0] sm:$0xf]
    %v4096 = vld [vmem:[#allocation8 + $0xf4] sm:$0xf]
    %v4097 = vld [vmem:[#allocation8 + $0xf8] sm:$0xf]
    %v4098 = vld [vmem:[#allocation8 + $0xfc] sm:$0xf]
    %v4099 = vld [vmem:[#allocation8 + $0x100] sm:$0xf]
    %v4100 = vld [vmem:[#allocation8 + $0x104] sm:$0xf]
    %v4101 = vld [vmem:[#allocation8 + $0x108] sm:$0xf]
    %v4102 = vld [vmem:[#allocation8 + $0x10c] sm:$0xf]
    %v4103 = vld [vmem:[#allocation8 + $0x110] sm:$0xf]
    %v4104 = vld [vmem:[#allocation8 + $0x114] sm:$0xf]
    %v4105 = vld [vmem:[#allocation8 + $0x118] sm:$0xf]
    %v4106 = vld [vmem:[#allocation8 + $0x11c] sm:$0xf]
    %v4107 = vld [vmem:[#allocation8 + $0x120] sm:$0xf]
    %v4108 = vld [vmem:[#allocation8 + $0x124] sm:$0xf]
    %v4109 = vld [vmem:[#allocation8 + $0x128] sm:$0xf]
    %v4110 = vld [vmem:[#allocation8 + $0x12c] sm:$0xf]
    %v4111 = vld [vmem:[#allocation8 + $0x130] sm:$0xf]
    %v4112 = vld [vmem:[#allocation8 + $0x134] sm:$0xf]
    %v4113 = vld [vmem:[#allocation8 + $0x138] sm:$0xf]
    %v4114 = vld [vmem:[#allocation8 + $0x13c] sm:$0xf]
    %v4115 = vld [vmem:[#allocation8 + $0x140] sm:$0xf]
    %v4116 = vld [vmem:[#allocation8 + $0x144] sm:$0xf]
    %v4117 = vld [vmem:[#allocation8 + $0x148] sm:$0xf]
    %v4118 = vld [vmem:[#allocation8 + $0x14c] sm:$0xf]
    %v4119 = vld [vmem:[#allocation8 + $0x150] sm:$0xf]
    %v4120 = vld [vmem:[#allocation8 + $0x154] sm:$0xf]
    %v4121 = vld [vmem:[#allocation8 + $0x158] sm:$0xf]
    %v4122 = vld [vmem:[#allocation8 + $0x15c] sm:$0xf]
    %v4123 = vld [vmem:[#allocation8 + $0x160] sm:$0xf]
    %v4124 = vld [vmem:[#allocation8 + $0x164] sm:$0xf]
    %v4125 = vld [vmem:[#allocation8 + $0x168] sm:$0xf]
    %v4126 = vld [vmem:[#allocation8 + $0x16c] sm:$0xf]
    %v4127 = vld [vmem:[#allocation8 + $0x170] sm:$0xf]
    %v4128 = vld [vmem:[#allocation8 + $0x174] sm:$0xf]
    %v4129 = vld [vmem:[#allocation8 + $0x178] sm:$0xf]
    %v4130 = vld [vmem:[#allocation8 + $0x17c] sm:$0xf]
    %v4131 = vld [vmem:[#allocation8 + $0x180] sm:$0xf]
    %v4132 = vld [vmem:[#allocation8 + $0x184] sm:$0xf]
    %v4133 = vld [vmem:[#allocation8 + $0x188] sm:$0xf]
    %v4134 = vld [vmem:[#allocation8 + $0x18c] sm:$0xf]
    %v4135 = vld [vmem:[#allocation8 + $0x190] sm:$0xf]
    %v4136 = vld [vmem:[#allocation8 + $0x194] sm:$0xf]
    %v4137 = vld [vmem:[#allocation8 + $0x198] sm:$0xf]
    %v4138 = vld [vmem:[#allocation8 + $0x19c] sm:$0xf]
    %v4139 = vld [vmem:[#allocation8 + $0x1a0] sm:$0xf]
    %v4140 = vld [vmem:[#allocation8 + $0x1a4] sm:$0xf]
    %v4141 = vld [vmem:[#allocation8 + $0x1a8] sm:$0xf]
    %v4142 = vld [vmem:[#allocation8 + $0x1ac] sm:$0xf]
    %v4143 = vld [vmem:[#allocation8 + $0x1b0] sm:$0xf]
    %v4144 = vld [vmem:[#allocation8 + $0x1b4] sm:$0xf]
    %v4145 = vld [vmem:[#allocation8 + $0x1b8] sm:$0xf]
    %v4146 = vld [vmem:[#allocation8 + $0x1bc] sm:$0xf]
    %v4147 = vld [vmem:[#allocation8 + $0x1c0] sm:$0xf]
    %v4148 = vld [vmem:[#allocation8 + $0x1c4] sm:$0xf]
    %v4149 = vld [vmem:[#allocation8 + $0x1c8] sm:$0xf]
    %v4150 = vld [vmem:[#allocation8 + $0x1cc] sm:$0xf]
    %v4151 = vld [vmem:[#allocation8 + $0x1d0] sm:$0xf]
    %v4152 = vld [vmem:[#allocation8 + $0x1d4] sm:$0xf]
    %v4153 = vld [vmem:[#allocation8 + $0x1d8] sm:$0xf]
    %v4154 = vld [vmem:[#allocation8 + $0x1dc] sm:$0xf]
    %v4155 = vld [vmem:[#allocation8 + $0x1e0] sm:$0xf]
    %v4156 = vld [vmem:[#allocation8 + $0x1e4] sm:$0xf]
    %v4157 = vld [vmem:[#allocation8 + $0x1e8] sm:$0xf]
    %v4158 = vld [vmem:[#allocation8 + $0x1ec] sm:$0xf]
    %v4159 = vld [vmem:[#allocation8 + $0x1f0] sm:$0xf]
    %v4160 = vld [vmem:[#allocation8 + $0x1f4] sm:$0xf]
    %v4161 = vld [vmem:[#allocation8 + $0x1f8] sm:$0xf]
    %v4162 = vld [vmem:[#allocation8 + $0x1fc] sm:$0xf]
    %v4163 = vld [vmem:[#allocation8 + $0x200] sm:$0xf]
    %v4164 = vld [vmem:[#allocation8 + $0x204] sm:$0xf]
    %v4165 = vld [vmem:[#allocation8 + $0x208] sm:$0xf]
    %v4166 = vld [vmem:[#allocation8 + $0x20c] sm:$0xf]
    %v4167 = vld [vmem:[#allocation8 + $0x210] sm:$0xf]
    %v4168 = vld [vmem:[#allocation8 + $0x214] sm:$0xf]
    %v4169 = vld [vmem:[#allocation8 + $0x218] sm:$0xf]
    %v4170 = vld [vmem:[#allocation8 + $0x21c] sm:$0xf]
    %v4171 = vld [vmem:[#allocation8 + $0x220] sm:$0xf]
    %v4172 = vld [vmem:[#allocation8 + $0x224] sm:$0xf]
    %v4173 = vld [vmem:[#allocation8 + $0x228] sm:$0xf]
    %v4174 = vld [vmem:[#allocation8 + $0x22c] sm:$0xf]
    %v4175 = vld [vmem:[#allocation8 + $0x230] sm:$0xf]
    %v4176 = vld [vmem:[#allocation8 + $0x234] sm:$0xf]
    %v4177 = vld [vmem:[#allocation8 + $0x238] sm:$0xf]
    %v4178 = vld [vmem:[#allocation8 + $0x23c] sm:$0xf]
    %v4179 = vld [vmem:[#allocation8 + $0x240] sm:$0xf]
    %v4180 = vld [vmem:[#allocation8 + $0x244] sm:$0xf]
    %v4181 = vld [vmem:[#allocation8 + $0x248] sm:$0xf]
    %v4182 = vld [vmem:[#allocation8 + $0x24c] sm:$0xf]
    %v4183 = vld [vmem:[#allocation8 + $0x250] sm:$0xf]
    %v4184 = vld [vmem:[#allocation8 + $0x254] sm:$0xf]
    %v4185 = vld [vmem:[#allocation8 + $0x258] sm:$0xf]
    %v4186 = vld [vmem:[#allocation8 + $0x25c] sm:$0xf]
    %v4187 = vld [vmem:[#allocation8 + $0x260] sm:$0xf]
    %v4188 = vld [vmem:[#allocation8 + $0x264] sm:$0xf]
    %v4189 = vld [vmem:[#allocation8 + $0x268] sm:$0xf]
    %v4190 = vld [vmem:[#allocation8 + $0x26c] sm:$0xf]
    %v4191 = vld [vmem:[#allocation8 + $0x270] sm:$0xf]
    %v4192 = vld [vmem:[#allocation8 + $0x274] sm:$0xf]
    %v4193 = vld [vmem:[#allocation8 + $0x278] sm:$0xf]
    %v4194 = vld [vmem:[#allocation8 + $0x27c] sm:$0xf]
    %v4195 = vld [vmem:[#allocation8 + $0x280] sm:$0xf]
    %v4196 = vld [vmem:[#allocation8 + $0x284] sm:$0xf]
    %v4197 = vld [vmem:[#allocation8 + $0x288] sm:$0xf]
    %v4198 = vld [vmem:[#allocation8 + $0x28c] sm:$0xf]
    %v4199 = vld [vmem:[#allocation8 + $0x290] sm:$0xf]
    %v4200 = vld [vmem:[#allocation8 + $0x294] sm:$0xf]
    %v4201 = vld [vmem:[#allocation8 + $0x298] sm:$0xf]
    %v4202 = vld [vmem:[#allocation8 + $0x29c] sm:$0xf]
    %v4203 = vld [vmem:[#allocation8 + $0x2a0] sm:$0xf]
    %v4204 = vld [vmem:[#allocation8 + $0x2a4] sm:$0xf]
    %v4205 = vld [vmem:[#allocation8 + $0x2a8] sm:$0xf]
    %v4206 = vld [vmem:[#allocation8 + $0x2ac] sm:$0xf]
    %v4207 = vld [vmem:[#allocation8 + $0x2b0] sm:$0xf]
    %v4208 = vld [vmem:[#allocation8 + $0x2b4] sm:$0xf]
    %v4209 = vld [vmem:[#allocation8 + $0x2b8] sm:$0xf]
    %v4210 = vld [vmem:[#allocation8 + $0x2bc] sm:$0xf]
    %v4211 = vld [vmem:[#allocation8 + $0x2c0] sm:$0xf]
    %v4212 = vld [vmem:[#allocation8 + $0x2c4] sm:$0xf]
    %v4213 = vld [vmem:[#allocation8 + $0x2c8] sm:$0xf]
    %v4214 = vld [vmem:[#allocation8 + $0x2cc] sm:$0xf]
    %v4215 = vld [vmem:[#allocation8 + $0x2d0] sm:$0xf]
    %v4216 = vld [vmem:[#allocation8 + $0x2d4] sm:$0xf]
    %v4217 = vld [vmem:[#allocation8 + $0x2d8] sm:$0xf]
    %v4218 = vld [vmem:[#allocation8 + $0x2dc] sm:$0xf]
    %v4219 = vld [vmem:[#allocation8 + $0x2e0] sm:$0xf]
    %v4220 = vld [vmem:[#allocation8 + $0x2e4] sm:$0xf]
    %v4221 = vld [vmem:[#allocation8 + $0x2e8] sm:$0xf]
    %v4222 = vld [vmem:[#allocation8 + $0x2ec] sm:$0xf]
    %v4223 = vld [vmem:[#allocation8 + $0x2f0] sm:$0xf]
    %v4224 = vld [vmem:[#allocation8 + $0x2f4] sm:$0xf]
    %v4225 = vld [vmem:[#allocation8 + $0x2f8] sm:$0xf]
    %v4226 = vld [vmem:[#allocation8 + $0x2fc] sm:$0xf]
    %v4227 = vld [vmem:[%s6] sm:$0x1]
    %v4229 = vlaneseq
    %v4230 = vshrl.u32 %v4229, 7
    %v4231 = vsub.s32 0, %v4230
    %v4232 = vrot.slane %v4227, %v4231
    %v4426 = vunpack.c.l.b16 %v4035
    %v4427 = vunpack.c.l.b16 %v4036
    %v4428 = vunpack.c.l.b16 %v4037
    %v4429 = vunpack.c.l.b16 %v4038
    %v4430 = vunpack.c.l.b16 %v4039
    %v4431 = vunpack.c.l.b16 %v4040
    %v4432 = vunpack.c.l.b16 %v4041
    %v4433 = vunpack.c.l.b16 %v4042
    %v4434 = vunpack.c.l.b16 %v4043
    %v4435 = vunpack.c.l.b16 %v4044
    %v4436 = vunpack.c.l.b16 %v4045
    %v4437 = vunpack.c.l.b16 %v4046
    %v4438 = vunpack.c.l.b16 %v4047
    %v4439 = vunpack.c.l.b16 %v4048
    %v4440 = vunpack.c.l.b16 %v4049
    %v4441 = vunpack.c.l.b16 %v4050
    %v4442 = vunpack.c.l.b16 %v4051
    %v4443 = vunpack.c.l.b16 %v4052
    %v4444 = vunpack.c.l.b16 %v4053
    %v4445 = vunpack.c.l.b16 %v4054
    %v4446 = vunpack.c.l.b16 %v4055
    %v4447 = vunpack.c.l.b16 %v4056
    %v4448 = vunpack.c.l.b16 %v4057
    %v4449 = vunpack.c.l.b16 %v4058
    %v4450 = vunpack.c.l.b16 %v4059
    %v4451 = vunpack.c.l.b16 %v4060
    %v4452 = vunpack.c.l.b16 %v4061
    %v4453 = vunpack.c.l.b16 %v4062
    %v4454 = vunpack.c.l.b16 %v4063
    %v4455 = vunpack.c.l.b16 %v4064
    %v4456 = vunpack.c.l.b16 %v4065
    %v4457 = vunpack.c.l.b16 %v4066
    %v4458 = vunpack.c.l.b16 %v4067
    %v4459 = vunpack.c.l.b16 %v4068
    %v4460 = vunpack.c.l.b16 %v4069
    %v4461 = vunpack.c.l.b16 %v4070
    %v4462 = vunpack.c.l.b16 %v4071
    %v4463 = vunpack.c.l.b16 %v4072
    %v4464 = vunpack.c.l.b16 %v4073
    %v4465 = vunpack.c.l.b16 %v4074
    %v4466 = vunpack.c.l.b16 %v4075
    %v4467 = vunpack.c.l.b16 %v4076
    %v4468 = vunpack.c.l.b16 %v4077
    %v4469 = vunpack.c.l.b16 %v4078
    %v4470 = vunpack.c.l.b16 %v4079
    %v4471 = vunpack.c.l.b16 %v4080
    %v4472 = vunpack.c.l.b16 %v4081
    %v4473 = vunpack.c.l.b16 %v4082
    %v4474 = vunpack.c.l.b16 %v4083
    %v4475 = vunpack.c.l.b16 %v4084
    %v4476 = vunpack.c.l.b16 %v4085
    %v4477 = vunpack.c.l.b16 %v4086
    %v4478 = vunpack.c.l.b16 %v4087
    %v4479 = vunpack.c.l.b16 %v4088
    %v4480 = vunpack.c.l.b16 %v4089
    %v4481 = vunpack.c.l.b16 %v4090
    %v4482 = vunpack.c.l.b16 %v4091
    %v4483 = vunpack.c.l.b16 %v4092
    %v4484 = vunpack.c.l.b16 %v4093
    %v4485 = vunpack.c.l.b16 %v4094
    %v4486 = vunpack.c.l.b16 %v4095
    %v4487 = vunpack.c.l.b16 %v4096
    %v4488 = vunpack.c.l.b16 %v4097
    %v4489 = vunpack.c.l.b16 %v4098
    %v4490 = vunpack.c.l.b16 %v4099
    %v4491 = vunpack.c.l.b16 %v4100
    %v4492 = vunpack.c.l.b16 %v4101
    %v4493 = vunpack.c.l.b16 %v4102
    %v4494 = vunpack.c.l.b16 %v4103
    %v4495 = vunpack.c.l.b16 %v4104
    %v4496 = vunpack.c.l.b16 %v4105
    %v4497 = vunpack.c.l.b16 %v4106
    %v4498 = vunpack.c.l.b16 %v4107
    %v4499 = vunpack.c.l.b16 %v4108
    %v4500 = vunpack.c.l.b16 %v4109
    %v4501 = vunpack.c.l.b16 %v4110
    %v4502 = vunpack.c.l.b16 %v4111
    %v4503 = vunpack.c.l.b16 %v4112
    %v4504 = vunpack.c.l.b16 %v4113
    %v4505 = vunpack.c.l.b16 %v4114
    %v4506 = vunpack.c.l.b16 %v4115
    %v4507 = vunpack.c.l.b16 %v4116
    %v4508 = vunpack.c.l.b16 %v4117
    %v4509 = vunpack.c.l.b16 %v4118
    %v4510 = vunpack.c.l.b16 %v4119
    %v4511 = vunpack.c.l.b16 %v4120
    %v4512 = vunpack.c.l.b16 %v4121
    %v4513 = vunpack.c.l.b16 %v4122
    %v4514 = vunpack.c.l.b16 %v4123
    %v4515 = vunpack.c.l.b16 %v4124
    %v4516 = vunpack.c.l.b16 %v4125
    %v4517 = vunpack.c.l.b16 %v4126
    %v4518 = vunpack.c.l.b16 %v4127
    %v4519 = vunpack.c.l.b16 %v4128
    %v4520 = vunpack.c.l.b16 %v4129
    %v4521 = vunpack.c.l.b16 %v4130
    %v4522 = vunpack.c.l.b16 %v4131
    %v4523 = vunpack.c.l.b16 %v4132
    %v4524 = vunpack.c.l.b16 %v4133
    %v4525 = vunpack.c.l.b16 %v4134
    %v4526 = vunpack.c.l.b16 %v4135
    %v4527 = vunpack.c.l.b16 %v4136
    %v4528 = vunpack.c.l.b16 %v4137
    %v4529 = vunpack.c.l.b16 %v4138
    %v4530 = vunpack.c.l.b16 %v4139
    %v4531 = vunpack.c.l.b16 %v4140
    %v4532 = vunpack.c.l.b16 %v4141
    %v4533 = vunpack.c.l.b16 %v4142
    %v4534 = vunpack.c.l.b16 %v4143
    %v4535 = vunpack.c.l.b16 %v4144
    %v4536 = vunpack.c.l.b16 %v4145
    %v4537 = vunpack.c.l.b16 %v4146
    %v4538 = vunpack.c.l.b16 %v4147
    %v4539 = vunpack.c.l.b16 %v4148
    %v4540 = vunpack.c.l.b16 %v4149
    %v4541 = vunpack.c.l.b16 %v4150
    %v4542 = vunpack.c.l.b16 %v4151
    %v4543 = vunpack.c.l.b16 %v4152
    %v4544 = vunpack.c.l.b16 %v4153
    %v4545 = vunpack.c.l.b16 %v4154
    %v4546 = vunpack.c.l.b16 %v4155
    %v4547 = vunpack.c.l.b16 %v4156
    %v4548 = vunpack.c.l.b16 %v4157
    %v4549 = vunpack.c.l.b16 %v4158
    %v4550 = vunpack.c.l.b16 %v4159
    %v4551 = vunpack.c.l.b16 %v4160
    %v4552 = vunpack.c.l.b16 %v4161
    %v4553 = vunpack.c.l.b16 %v4162
    %v4554 = vunpack.c.l.b16 %v4163
    %v4555 = vunpack.c.l.b16 %v4164
    %v4556 = vunpack.c.l.b16 %v4165
    %v4557 = vunpack.c.l.b16 %v4166
    %v4558 = vunpack.c.l.b16 %v4167
    %v4559 = vunpack.c.l.b16 %v4168
    %v4560 = vunpack.c.l.b16 %v4169
    %v4561 = vunpack.c.l.b16 %v4170
    %v4562 = vunpack.c.l.b16 %v4171
    %v4563 = vunpack.c.l.b16 %v4172
    %v4564 = vunpack.c.l.b16 %v4173
    %v4565 = vunpack.c.l.b16 %v4174
    %v4566 = vunpack.c.l.b16 %v4175
    %v4567 = vunpack.c.l.b16 %v4176
    %v4568 = vunpack.c.l.b16 %v4177
    %v4569 = vunpack.c.l.b16 %v4178
    %v4570 = vunpack.c.l.b16 %v4179
    %v4571 = vunpack.c.l.b16 %v4180
    %v4572 = vunpack.c.l.b16 %v4181
    %v4573 = vunpack.c.l.b16 %v4182
    %v4574 = vunpack.c.l.b16 %v4183
    %v4575 = vunpack.c.l.b16 %v4184
    %v4576 = vunpack.c.l.b16 %v4185
    %v4577 = vunpack.c.l.b16 %v4186
    %v4578 = vunpack.c.l.b16 %v4187
    %v4579 = vunpack.c.l.b16 %v4188
    %v4580 = vunpack.c.l.b16 %v4189
    %v4581 = vunpack.c.l.b16 %v4190
    %v4582 = vunpack.c.l.b16 %v4191
    %v4583 = vunpack.c.l.b16 %v4192
    %v4584 = vunpack.c.l.b16 %v4193
    %v4585 = vunpack.c.l.b16 %v4194
    %v4586 = vunpack.c.l.b16 %v4195
    %v4587 = vunpack.c.l.b16 %v4196
    %v4588 = vunpack.c.l.b16 %v4197
    %v4589 = vunpack.c.l.b16 %v4198
    %v4590 = vunpack.c.l.b16 %v4199
    %v4591 = vunpack.c.l.b16 %v4200
    %v4592 = vunpack.c.l.b16 %v4201
    %v4593 = vunpack.c.l.b16 %v4202
    %v4594 = vunpack.c.l.b16 %v4203
    %v4595 = vunpack.c.l.b16 %v4204
    %v4596 = vunpack.c.l.b16 %v4205
    %v4597 = vunpack.c.l.b16 %v4206
    %v4598 = vunpack.c.l.b16 %v4207
    %v4599 = vunpack.c.l.b16 %v4208
    %v4600 = vunpack.c.l.b16 %v4209
    %v4601 = vunpack.c.l.b16 %v4210
    %v4602 = vunpack.c.l.b16 %v4211
    %v4603 = vunpack.c.l.b16 %v4212
    %v4604 = vunpack.c.l.b16 %v4213
    %v4605 = vunpack.c.l.b16 %v4214
    %v4606 = vunpack.c.l.b16 %v4215
    %v4607 = vunpack.c.l.b16 %v4216
    %v4608 = vunpack.c.l.b16 %v4217
    %v4609 = vunpack.c.l.b16 %v4218
    %v4610 = vunpack.c.l.b16 %v4219
    %v4611 = vunpack.c.l.b16 %v4220
    %v4612 = vunpack.c.l.b16 %v4221
    %v4613 = vunpack.c.l.b16 %v4222
    %v4614 = vunpack.c.l.b16 %v4223
    %v4615 = vunpack.c.l.b16 %v4224
    %v4616 = vunpack.c.l.b16 %v4225
    %v4617 = vunpack.c.l.b16 %v4226
    %v4618 = vpack.c.b16 %v4427, %v4426
    %v4619 = vpack.c.b16 %v4429, %v4428
    %v4620 = vpack.c.b16 %v4431, %v4430
    %v4621 = vpack.c.b16 %v4433, %v4432
    %v4622 = vpack.c.b16 %v4435, %v4434
    %v4623 = vpack.c.b16 %v4437, %v4436
    %v4624 = vpack.c.b16 %v4439, %v4438
    %v4625 = vpack.c.b16 %v4441, %v4440
    %v4626 = vpack.c.b16 %v4443, %v4442
    %v4627 = vpack.c.b16 %v4445, %v4444
    %v4628 = vpack.c.b16 %v4447, %v4446
    %v4629 = vpack.c.b16 %v4449, %v4448
    %v4630 = vpack.c.b16 %v4451, %v4450
    %v4631 = vpack.c.b16 %v4453, %v4452
    %v4632 = vpack.c.b16 %v4455, %v4454
    %v4633 = vpack.c.b16 %v4457, %v4456
    %v4634 = vpack.c.b16 %v4459, %v4458
    %v4635 = vpack.c.b16 %v4461, %v4460
    %v4636 = vpack.c.b16 %v4463, %v4462
    %v4637 = vpack.c.b16 %v4465, %v4464
    %v4638 = vpack.c.b16 %v4467, %v4466
    %v4639 = vpack.c.b16 %v4469, %v4468
    %v4640 = vpack.c.b16 %v4471, %v4470
    %v4641 = vpack.c.b16 %v4473, %v4472
    %v4642 = vpack.c.b16 %v4475, %v4474
    %v4643 = vpack.c.b16 %v4477, %v4476
    %v4644 = vpack.c.b16 %v4479, %v4478
    %v4645 = vpack.c.b16 %v4481, %v4480
    %v4646 = vpack.c.b16 %v4483, %v4482
    %v4647 = vpack.c.b16 %v4485, %v4484
    %v4648 = vpack.c.b16 %v4487, %v4486
    %v4649 = vpack.c.b16 %v4489, %v4488
    %v4650 = vpack.c.b16 %v4491, %v4490
    %v4651 = vpack.c.b16 %v4493, %v4492
    %v4652 = vpack.c.b16 %v4495, %v4494
    %v4653 = vpack.c.b16 %v4497, %v4496
    %v4654 = vpack.c.b16 %v4499, %v4498
    %v4655 = vpack.c.b16 %v4501, %v4500
    %v4656 = vpack.c.b16 %v4503, %v4502
    %v4657 = vpack.c.b16 %v4505, %v4504
    %v4658 = vpack.c.b16 %v4507, %v4506
    %v4659 = vpack.c.b16 %v4509, %v4508
    %v4660 = vpack.c.b16 %v4511, %v4510
    %v4661 = vpack.c.b16 %v4513, %v4512
    %v4662 = vpack.c.b16 %v4515, %v4514
    %v4663 = vpack.c.b16 %v4517, %v4516
    %v4664 = vpack.c.b16 %v4519, %v4518
    %v4665 = vpack.c.b16 %v4521, %v4520
    %v4666 = vpack.c.b16 %v4523, %v4522
    %v4667 = vpack.c.b16 %v4525, %v4524
    %v4668 = vpack.c.b16 %v4527, %v4526
    %v4669 = vpack.c.b16 %v4529, %v4528
    %v4670 = vpack.c.b16 %v4531, %v4530
    %v4671 = vpack.c.b16 %v4533, %v4532
    %v4672 = vpack.c.b16 %v4535, %v4534
    %v4673 = vpack.c.b16 %v4537, %v4536
    %v4674 = vpack.c.b16 %v4539, %v4538
    %v4675 = vpack.c.b16 %v4541, %v4540
    %v4676 = vpack.c.b16 %v4543, %v4542
    %v4677 = vpack.c.b16 %v4545, %v4544
    %v4678 = vpack.c.b16 %v4547, %v4546
    %v4679 = vpack.c.b16 %v4549, %v4548
    %v4680 = vpack.c.b16 %v4551, %v4550
    %v4681 = vpack.c.b16 %v4553, %v4552
    %v4682 = vpack.c.b16 %v4555, %v4554
    %v4683 = vpack.c.b16 %v4557, %v4556
    %v4684 = vpack.c.b16 %v4559, %v4558
    %v4685 = vpack.c.b16 %v4561, %v4560
    %v4686 = vpack.c.b16 %v4563, %v4562
    %v4687 = vpack.c.b16 %v4565, %v4564
    %v4688 = vpack.c.b16 %v4567, %v4566
    %v4689 = vpack.c.b16 %v4569, %v4568
    %v4690 = vpack.c.b16 %v4571, %v4570
    %v4691 = vpack.c.b16 %v4573, %v4572
    %v4692 = vpack.c.b16 %v4575, %v4574
    %v4693 = vpack.c.b16 %v4577, %v4576
    %v4694 = vpack.c.b16 %v4579, %v4578
    %v4695 = vpack.c.b16 %v4581, %v4580
    %v4696 = vpack.c.b16 %v4583, %v4582
    %v4697 = vpack.c.b16 %v4585, %v4584
    %v4698 = vpack.c.b16 %v4587, %v4586
    %v4699 = vpack.c.b16 %v4589, %v4588
    %v4700 = vpack.c.b16 %v4591, %v4590
    %v4701 = vpack.c.b16 %v4593, %v4592
    %v4702 = vpack.c.b16 %v4595, %v4594
    %v4703 = vpack.c.b16 %v4597, %v4596
    %v4704 = vpack.c.b16 %v4599, %v4598
    %v4705 = vpack.c.b16 %v4601, %v4600
    %v4706 = vpack.c.b16 %v4603, %v4602
    %v4707 = vpack.c.b16 %v4605, %v4604
    %v4708 = vpack.c.b16 %v4607, %v4606
    %v4709 = vpack.c.b16 %v4609, %v4608
    %v4710 = vpack.c.b16 %v4611, %v4610
    %v4711 = vpack.c.b16 %v4613, %v4612
    %v4712 = vpack.c.b16 %v4615, %v4614
    %v4713 = vpack.c.b16 %v4617, %v4616
    %4810 = vmatprep.subr.bf16.mxu0 0
    %4811 = vmatpush1.bf16.msra.mxu0 %v4618
    %4812 = vmatprep.subr.bf16.mxu0 0
    %4813 = vmatpush1.bf16.msra.mxu0 %v4619
    %4814 = vmatprep.subr.bf16.mxu0 0
    %4815 = vmatpush1.bf16.msra.mxu0 %v4620
    %4816 = vmatprep.subr.bf16.mxu0 0
    %4817 = vmatpush1.bf16.msra.mxu0 %v4621
    %4818 = vmatprep.subr.bf16.mxu0 0
    %4819 = vmatpush1.bf16.msra.mxu0 %v4622
    %4820 = vmatprep.subr.bf16.mxu0 0
    %4821 = vmatpush1.bf16.msra.mxu0 %v4623
    %4822 = vmatprep.subr.bf16.mxu0 0
    %4823 = vmatpush1.bf16.msra.mxu0 %v4624
    %4824 = vmatprep.subr.bf16.mxu0 0
    %4825 = vmatpush1.bf16.msra.mxu0 %v4625
    %4826 = vmatprep.subr.bf16.mxu0 0
    %4827 = vmatpush1.bf16.msra.mxu0 %v4626
    %4828 = vmatprep.subr.bf16.mxu0 0
    %4829 = vmatpush1.bf16.msra.mxu0 %v4627
    %4830 = vmatprep.subr.bf16.mxu0 0
    %4831 = vmatpush1.bf16.msra.mxu0 %v4628
    %4832 = vmatprep.subr.bf16.mxu0 0
    %4833 = vmatpush1.bf16.msra.mxu0 %v4629
    %4834 = vmatprep.subr.bf16.mxu0 0
    %4835 = vmatpush1.bf16.msra.mxu0 %v4630
    %4836 = vmatprep.subr.bf16.mxu0 0
    %4837 = vmatpush1.bf16.msra.mxu0 %v4631
    %4838 = vmatprep.subr.bf16.mxu0 0
    %4839 = vmatpush1.bf16.msra.mxu0 %v4632
    %4840 = vmatprep.subr.bf16.mxu0 0
    %4841 = vmatpush1.bf16.msra.mxu0 %v4633
    %4842 = vmatprep.mubr.bf16.mxu0 %v4012
    %4843 = vmatmul.mubr.bf16.gmra.mrb[0].mxu0 %v4011
    %v4844 = vpop.f32.mrb[0].mxu0
    %v4845 = vadd.f32 %v4232, %v4844
    %v4846 = vpop.f32.mrb[0].mxu0
    %v4847 = vpop.f32.mrb[0].mxu0
    %v4848 = vadd.f32 %v4232, %v4847
    %v4849 = vpop.f32.mrb[0].mxu0
    %4850 = vmatprep.mubr.bf16.mxu0 %v4024
    %4851 = vmatmul.mubr.bf16.gmra.mrb[0].mxu0 %v4023
    %v4852 = vpop.f32.mrb[0].mxu0
    %v4853 = vadd.f32 %v4232, %v4852
    %v4854 = vpop.f32.mrb[0].mxu0
    %v4855 = vpop.f32.mrb[0].mxu0
    %v4856 = vadd.f32 %v4232, %v4855
    %v4857 = vpop.f32.mrb[0].mxu0
    %4858 = vdwg.mxu0
    %4859 = vmatprep.subr.bf16.mxu0 0
    %4860 = vmatpush1.bf16.msra.mxu0 %v4634
    %4861 = vmatprep.subr.bf16.mxu0 0
    %4862 = vmatpush1.bf16.msra.mxu0 %v4635
    %4863 = vmatprep.subr.bf16.mxu0 0
    %4864 = vmatpush1.bf16.msra.mxu0 %v4636
    %4865 = vmatprep.subr.bf16.mxu0 0
    %4866 = vmatpush1.bf16.msra.mxu0 %v4637
    %4867 = vmatprep.subr.bf16.mxu0 0
    %4868 = vmatpush1.bf16.msra.mxu0 %v4638
    %4869 = vmatprep.subr.bf16.mxu0 0
    %4870 = vmatpush1.bf16.msra.mxu0 %v4639
    %4871 = vmatprep.subr.bf16.mxu0 0
    %4872 = vmatpush1.bf16.msra.mxu0 %v4640
    %4873 = vmatprep.subr.bf16.mxu0 0
    %4874 = vmatpush1.bf16.msra.mxu0 %v4641
    %4875 = vmatprep.subr.bf16.mxu0 0
    %4876 = vmatpush1.bf16.msra.mxu0 %v4642
    %4877 = vmatprep.subr.bf16.mxu0 0
    %4878 = vmatpush1.bf16.msra.mxu0 %v4643
    %4879 = vmatprep.subr.bf16.mxu0 0
    %4880 = vmatpush1.bf16.msra.mxu0 %v4644
    %4881 = vmatprep.subr.bf16.mxu0 0
    %4882 = vmatpush1.bf16.msra.mxu0 %v4645
    %4883 = vmatprep.subr.bf16.mxu0 0
    %4884 = vmatpush1.bf16.msra.mxu0 %v4646
    %4885 = vmatprep.subr.bf16.mxu0 0
    %4886 = vmatpush1.bf16.msra.mxu0 %v4647
    %4887 = vmatprep.subr.bf16.mxu0 0
    %4888 = vmatpush1.bf16.msra.mxu0 %v4648
    %4889 = vmatprep.subr.bf16.mxu0 0
    %4890 = vmatpush1.bf16.msra.mxu0 %v4649
    %4891 = vmatprep.mubr.bf16.mxu0 %v4014
    %4892 = vmatmul.mubr.bf16.gmra.mrb[0].mxu0 %v4013
    %v4893 = vpop.f32.mrb[0].mxu0
    %v4894 = vadd.f32 %v4845, %v4893
    %v4895 = vpop.f32.mrb[0].mxu0
    %v4896 = vpop.f32.mrb[0].mxu0
    %v4897 = vadd.f32 %v4848, %v4896
    %v4898 = vpop.f32.mrb[0].mxu0
    %4899 = vmatprep.mubr.bf16.mxu0 %v4026
    %4900 = vmatmul.mubr.bf16.gmra.mrb[0].mxu0 %v4025
    %v4901 = vpop.f32.mrb[0].mxu0
    %v4902 = vadd.f32 %v4853, %v4901
    %v4903 = vpop.f32.mrb[0].mxu0
    %v4904 = vpop.f32.mrb[0].mxu0
    %v4905 = vadd.f32 %v4856, %v4904
    %v4906 = vpop.f32.mrb[0].mxu0
    %4907 = vdwg.mxu0
    %4908 = vmatprep.subr.bf16.mxu0 0
    %4909 = vmatpush1.bf16.msra.mxu0 %v4650
    %4910 = vmatprep.subr.bf16.mxu0 0
    %4911 = vmatpush1.bf16.msra.mxu0 %v4651
    %4912 = vmatprep.subr.bf16.mxu0 0
    %4913 = vmatpush1.bf16.msra.mxu0 %v4652
    %4914 = vmatprep.subr.bf16.mxu0 0
    %4915 = vmatpush1.bf16.msra.mxu0 %v4653
    %4916 = vmatprep.subr.bf16.mxu0 0
    %4917 = vmatpush1.bf16.msra.mxu0 %v4654
    %4918 = vmatprep.subr.bf16.mxu0 0
    %4919 = vmatpush1.bf16.msra.mxu0 %v4655
    %4920 = vmatprep.subr.bf16.mxu0 0
    %4921 = vmatpush1.bf16.msra.mxu0 %v4656
    %4922 = vmatprep.subr.bf16.mxu0 0
    %4923 = vmatpush1.bf16.msra.mxu0 %v4657
    %4924 = vmatprep.subr.bf16.mxu0 0
    %4925 = vmatpush1.bf16.msra.mxu0 %v4658
    %4926 = vmatprep.subr.bf16.mxu0 0
    %4927 = vmatpush1.bf16.msra.mxu0 %v4659
    %4928 = vmatprep.subr.bf16.mxu0 0
    %4929 = vmatpush1.bf16.msra.mxu0 %v4660
    %4930 = vmatprep.subr.bf16.mxu0 0
    %4931 = vmatpush1.bf16.msra.mxu0 %v4661
    %4932 = vmatprep.subr.bf16.mxu0 0
    %4933 = vmatpush1.bf16.msra.mxu0 %v4662
    %4934 = vmatprep.subr.bf16.mxu0 0
    %4935 = vmatpush1.bf16.msra.mxu0 %v4663
    %4936 = vmatprep.subr.bf16.mxu0 0
    %4937 = vmatpush1.bf16.msra.mxu0 %v4664
    %4938 = vmatprep.subr.bf16.mxu0 0
    %4939 = vmatpush1.bf16.msra.mxu0 %v4665
    %4940 = vmatprep.mubr.bf16.mxu0 %v4016
    %4941 = vmatmul.mubr.bf16.gmra.mrb[0].mxu0 %v4015
    %v4942 = vpop.f32.mrb[0].mxu0
    %v4943 = vadd.f32 %v4894, %v4942
    %v4944 = vpop.f32.mrb[0].mxu0
    %v4945 = vpop.f32.mrb[0].mxu0
    %v4946 = vadd.f32 %v4897, %v4945
    %v4947 = vpop.f32.mrb[0].mxu0
    %4948 = vmatprep.mubr.bf16.mxu0 %v4028
    %4949 = vmatmul.mubr.bf16.gmra.mrb[0].mxu0 %v4027
    %v4950 = vpop.f32.mrb[0].mxu0
    %v4951 = vadd.f32 %v4902, %v4950
    %v4952 = vpop.f32.mrb[0].mxu0
    %v4953 = vpop.f32.mrb[0].mxu0
    %v4954 = vadd.f32 %v4905, %v4953
    %v4955 = vpop.f32.mrb[0].mxu0
    %4956 = vdwg.mxu0
    %4957 = vmatprep.subr.bf16.mxu0 0
    %4958 = vmatpush1.bf16.msra.mxu0 %v4666
    %4959 = vmatprep.subr.bf16.mxu0 0
    %4960 = vmatpush1.bf16.msra.mxu0 %v4667
    %4961 = vmatprep.subr.bf16.mxu0 0
    %4962 = vmatpush1.bf16.msra.mxu0 %v4668
    %4963 = vmatprep.subr.bf16.mxu0 0
    %4964 = vmatpush1.bf16.msra.mxu0 %v4669
    %4965 = vmatprep.subr.bf16.mxu0 0
    %4966 = vmatpush1.bf16.msra.mxu0 %v4670
    %4967 = vmatprep.subr.bf16.mxu0 0
    %4968 = vmatpush1.bf16.msra.mxu0 %v4671
    %4969 = vmatprep.subr.bf16.mxu0 0
    %4970 = vmatpush1.bf16.msra.mxu0 %v4672
    %4971 = vmatprep.subr.bf16.mxu0 0
    %4972 = vmatpush1.bf16.msra.mxu0 %v4673
    %4973 = vmatprep.subr.bf16.mxu0 0
    %4974 = vmatpush1.bf16.msra.mxu0 %v4674
    %4975 = vmatprep.subr.bf16.mxu0 0
    %4976 = vmatpush1.bf16.msra.mxu0 %v4675
    %4977 = vmatprep.subr.bf16.mxu0 0
    %4978 = vmatpush1.bf16.msra.mxu0 %v4676
    %4979 = vmatprep.subr.bf16.mxu0 0
    %4980 = vmatpush1.bf16.msra.mxu0 %v4677
    %4981 = vmatprep.subr.bf16.mxu0 0
    %4982 = vmatpush1.bf16.msra.mxu0 %v4678
    %4983 = vmatprep.subr.bf16.mxu0 0
    %4984 = vmatpush1.bf16.msra.mxu0 %v4679
    %4985 = vmatprep.subr.bf16.mxu0 0
    %4986 = vmatpush1.bf16.msra.mxu0 %v4680
    %4987 = vmatprep.subr.bf16.mxu0 0
    %4988 = vmatpush1.bf16.msra.mxu0 %v4681
    %4989 = vmatprep.mubr.bf16.mxu0 %v4018
    %4990 = vmatmul.mubr.bf16.gmra.mrb[0].mxu0 %v4017
    %v4991 = vpop.f32.mrb[0].mxu0
    %v4992 = vadd.f32 %v4943, %v4991
    %v4993 = vpop.f32.mrb[0].mxu0
    %v4994 = vpop.f32.mrb[0].mxu0
    %v4995 = vadd.f32 %v4946, %v4994
    %v4996 = vpop.f32.mrb[0].mxu0
    %4997 = vmatprep.mubr.bf16.mxu0 %v4030
    %4998 = vmatmul.mubr.bf16.gmra.mrb[0].mxu0 %v4029
    %v4999 = vpop.f32.mrb[0].mxu0
    %v5000 = vadd.f32 %v4951, %v4999
    %v5001 = vpop.f32.mrb[0].mxu0
    %v5002 = vpop.f32.mrb[0].mxu0
    %v5003 = vadd.f32 %v4954, %v5002
    %v5004 = vpop.f32.mrb[0].mxu0
    %5005 = vdwg.mxu0
    %5006 = vmatprep.subr.bf16.mxu0 0
    %5007 = vmatpush1.bf16.msra.mxu0 %v4682
    %5008 = vmatprep.subr.bf16.mxu0 0
    %5009 = vmatpush1.bf16.msra.mxu0 %v4683
    %5010 = vmatprep.subr.bf16.mxu0 0
    %5011 = vmatpush1.bf16.msra.mxu0 %v4684
    %5012 = vmatprep.subr.bf16.mxu0 0
    %5013 = vmatpush1.bf16.msra.mxu0 %v4685
    %5014 = vmatprep.subr.bf16.mxu0 0
    %5015 = vmatpush1.bf16.msra.mxu0 %v4686
    %5016 = vmatprep.subr.bf16.mxu0 0
    %5017 = vmatpush1.bf16.msra.mxu0 %v4687
    %5018 = vmatprep.subr.bf16.mxu0 0
    %5019 = vmatpush1.bf16.msra.mxu0 %v4688
    %5020 = vmatprep.subr.bf16.mxu0 0
    %5021 = vmatpush1.bf16.msra.mxu0 %v4689
    %5022 = vmatprep.subr.bf16.mxu0 0
    %5023 = vmatpush1.bf16.msra.mxu0 %v4690
    %5024 = vmatprep.subr.bf16.mxu0 0
    %5025 = vmatpush1.bf16.msra.mxu0 %v4691
    %5026 = vmatprep.subr.bf16.mxu0 0
    %5027 = vmatpush1.bf16.msra.mxu0 %v4692
    %5028 = vmatprep.subr.bf16.mxu0 0
    %5029 = vmatpush1.bf16.msra.mxu0 %v4693
    %5030 = vmatprep.subr.bf16.mxu0 0
    %5031 = vmatpush1.bf16.msra.mxu0 %v4694
    %5032 = vmatprep.subr.bf16.mxu0 0
    %5033 = vmatpush1.bf16.msra.mxu0 %v4695
    %5034 = vmatprep.subr.bf16.mxu0 0
    %5035 = vmatpush1.bf16.msra.mxu0 %v4696
    %5036 = vmatprep.subr.bf16.mxu0 0
    %5037 = vmatpush1.bf16.msra.mxu0 %v4697
    %5038 = vmatprep.mubr.bf16.mxu0 %v4020
    %5039 = vmatmul.mubr.bf16.gmra.mrb[0].mxu0 %v4019
    %v5040 = vpop.f32.mrb[0].mxu0
    %v5041 = vadd.f32 %v4992, %v5040
    %v5042 = vpop.f32.mrb[0].mxu0
    %v5043 = vpop.f32.mrb[0].mxu0
    %v5044 = vadd.f32 %v4995, %v5043
    %v5045 = vpop.f32.mrb[0].mxu0
    %5046 = vmatprep.mubr.bf16.mxu0 %v4032
    %5047 = vmatmul.mubr.bf16.gmra.mrb[0].mxu0 %v4031
    %v5048 = vpop.f32.mrb[0].mxu0
    %v5049 = vadd.f32 %v5000, %v5048
    %v5050 = vpop.f32.mrb[0].mxu0
    %v5051 = vpop.f32.mrb[0].mxu0
    %v5052 = vadd.f32 %v5003, %v5051
    %v5053 = vpop.f32.mrb[0].mxu0
    %5054 = vdwg.mxu0
    %5055 = vmatprep.subr.bf16.mxu0 0
    %5056 = vmatpush1.bf16.msra.mxu0 %v4698
    %5057 = vmatprep.subr.bf16.mxu0 0
    %5058 = vmatpush1.bf16.msra.mxu0 %v4699
    %5059 = vmatprep.subr.bf16.mxu0 0
    %5060 = vmatpush1.bf16.msra.mxu0 %v4700
    %5061 = vmatprep.subr.bf16.mxu0 0
    %5062 = vmatpush1.bf16.msra.mxu0 %v4701
    %5063 = vmatprep.subr.bf16.mxu0 0
    %5064 = vmatpush1.bf16.msra.mxu0 %v4702
    %5065 = vmatprep.subr.bf16.mxu0 0
    %5066 = vmatpush1.bf16.msra.mxu0 %v4703
    %5067 = vmatprep.subr.bf16.mxu0 0
    %5068 = vmatpush1.bf16.msra.mxu0 %v4704
    %5069 = vmatprep.subr.bf16.mxu0 0
    %5070 = vmatpush1.bf16.msra.mxu0 %v4705
    %5071 = vmatprep.subr.bf16.mxu0 0
    %5072 = vmatpush1.bf16.msra.mxu0 %v4706
    %5073 = vmatprep.subr.bf16.mxu0 0
    %5074 = vmatpush1.bf16.msra.mxu0 %v4707
    %5075 = vmatprep.subr.bf16.mxu0 0
    %5076 = vmatpush1.bf16.msra.mxu0 %v4708
    %5077 = vmatprep.subr.bf16.mxu0 0
    %5078 = vmatpush1.bf16.msra.mxu0 %v4709
    %5079 = vmatprep.subr.bf16.mxu0 0
    %5080 = vmatpush1.bf16.msra.mxu0 %v4710
    %5081 = vmatprep.subr.bf16.mxu0 0
    %5082 = vmatpush1.bf16.msra.mxu0 %v4711
    %5083 = vmatprep.subr.bf16.mxu0 0
    %5084 = vmatpush1.bf16.msra.mxu0 %v4712
    %5085 = vmatprep.subr.bf16.mxu0 0
    %5086 = vmatpush1.bf16.msra.mxu0 %v4713
    %5087 = vmatprep.mubr.bf16.mxu0 %v4022
    %5088 = vmatmul.mubr.bf16.gmra.mrb[0].mxu0 %v4021
    %v5089 = vpop.f32.mrb[0].mxu0
    %v5090 = vadd.f32 %v5041, %v5089
    %v5091 = vpop.f32.mrb[0].mxu0
    %v5092 = vpop.f32.mrb[0].mxu0
    %v5093 = vadd.f32 %v5044, %v5092
    %v5094 = vpop.f32.mrb[0].mxu0
    %5095 = vmatprep.mubr.bf16.mxu0 %v4034
    %5096 = vmatmul.mubr.bf16.gmra.mrb[0].mxu0 %v4033
    %v5097 = vpop.f32.mrb[0].mxu0
    %v5098 = vadd.f32 %v5049, %v5097
    %v5099 = vpop.f32.mrb[0].mxu0
    %v5100 = vpop.f32.mrb[0].mxu0
    %v5101 = vadd.f32 %v5052, %v5100
    %v5102 = vpop.f32.mrb[0].mxu0
    %5103 = vdwg.mxu0
    %v5104 = vmax.f32 %v5090, 0.0
    %v5105 = vmax.f32 %v5093, 0.0
    %v5106 = vmax.f32 %v5098, 0.0
    %v5107 = vmax.f32 %v5101, 0.0
    %v5108 = vadd.f32 %v3084, %v5104
    %v5109 = vadd.f32 %v3085, %v5105
    %v5110 = vadd.f32 %v3086, %v5106
    %v5111 = vadd.f32 %v3087, %v5107
    %v5112 = vadd.f32 %v5108, %v5109
    %v5113 = vadd.f32 %v5112, %v5110
    %v5114 = vadd.f32 %v5113, %v5111
    %v5115 = vrot.slane %v5114, 4
    %v5116 = vadd.f32 %v5114, %v5115
    %v5117 = vrot.slane %v5116, 2
    %v5118 = vadd.f32 %v5116, %v5117
    %v5119 = vrot.slane %v5118, 1
    %v5120 = vadd.f32 %v5118, %v5119
    %v5121 = vrcp.pop 32.0
    %v5122 = vmul.f32 %v5120, %v5121
    %v5123 = vld [vmem:[%s7] sm:$0xff]
    %v5124 = vld [vmem:[%s7 + $0x8] sm:$0xff]
    %v5125 = vld [vmem:[%s7 + $0x10] sm:$0xff]
    %v5126 = vld [vmem:[%s7 + $0x18] sm:$0xff]
    %v5127 = vld [vmem:[%s7 + $0x20] sm:$0xff]
    %v5128 = vld [vmem:[%s7 + $0x28] sm:$0xff]
    %v5129 = vld [vmem:[%s7 + $0x30] sm:$0xff]
    %v5130 = vld [vmem:[%s7 + $0x38] sm:$0xff]
    %v5131 = vld [vmem:[%s7 + $0x40] sm:$0xff]
    %v5132 = vld [vmem:[%s7 + $0x48] sm:$0xff]
    %v5133 = vld [vmem:[%s7 + $0x50] sm:$0xff]
    %v5134 = vld [vmem:[%s7 + $0x58] sm:$0xff]
    %v5135 = vld [vmem:[%s7 + $0x60] sm:$0xff]
    %v5136 = vld [vmem:[%s7 + $0x68] sm:$0xff]
    %v5137 = vld [vmem:[%s7 + $0x70] sm:$0xff]
    %v5138 = vld [vmem:[%s7 + $0x78] sm:$0xff]
    %v5139 = vld [vmem:[%s8] sm:$0x1]
    %5140 = vmatprep.subr.mxu0 0.0
    %5141 = vmatpush1.msra.mxu0 %v5123
    %5142 = vmatprep.subr.mxu0 0.0
    %5143 = vmatpush1.msra.mxu0 %v5124
    %5144 = vmatprep.subr.mxu0 0.0
    %5145 = vmatpush1.msra.mxu0 %v5125
    %5146 = vmatprep.subr.mxu0 0.0
    %5147 = vmatpush1.msra.mxu0 %v5126
    %5148 = vmatprep.subr.mxu0 0.0
    %5149 = vmatpush1.msra.mxu0 %v5127
    %5150 = vmatprep.subr.mxu0 0.0
    %5151 = vmatpush1.msra.mxu0 %v5128
    %5152 = vmatprep.subr.mxu0 0.0
    %5153 = vmatpush1.msra.mxu0 %v5129
    %5154 = vmatprep.subr.mxu0 0.0
    %5155 = vmatpush1.msra.mxu0 %v5130
    %5156 = vmatprep.subr.mxu0 0.0
    %5157 = vmatpush1.msra.mxu0 %v5131
    %5158 = vmatprep.subr.mxu0 0.0
    %5159 = vmatpush1.msra.mxu0 %v5132
    %5160 = vmatprep.subr.mxu0 0.0
    %5161 = vmatpush1.msra.mxu0 %v5133
    %5162 = vmatprep.subr.mxu0 0.0
    %5163 = vmatpush1.msra.mxu0 %v5134
    %5164 = vmatprep.subr.mxu0 0.0
    %5165 = vmatpush1.msra.mxu0 %v5135
    %5166 = vmatprep.subr.mxu0 0.0
    %5167 = vmatpush1.msra.mxu0 %v5136
    %5168 = vmatprep.subr.mxu0 0.0
    %5169 = vmatpush1.msra.mxu0 %v5137
    %5170 = vmatprep.subr.mxu0 0.0
    %5171 = vmatpush1.msra.mxu0 %v5138
    %5172 = vmatprep.subr.mxu0 0.0
    %5173 = vmatpush1.msra.mxu0 0.0
    %5174 = vmatprep.subr.mxu0 0.0
    %5175 = vmatpush1.msra.mxu0 0.0
    %5176 = vmatprep.subr.mxu0 0.0
    %5177 = vmatpush1.msra.mxu0 0.0
    %5178 = vmatprep.subr.mxu0 0.0
    %5179 = vmatpush1.msra.mxu0 0.0
    %5180 = vmatprep.subr.mxu0 0.0
    %5181 = vmatpush1.msra.mxu0 0.0
    %5182 = vmatprep.subr.mxu0 0.0
    %5183 = vmatpush1.msra.mxu0 0.0
    %5184 = vmatprep.subr.mxu0 0.0
    %5185 = vmatpush1.msra.mxu0 0.0
    %5186 = vmatprep.subr.mxu0 0.0
    %5187 = vmatpush1.msra.mxu0 0.0
    %5188 = vmatprep.subr.mxu0 0.0
    %5189 = vmatpush1.msra.mxu0 0.0
    %5190 = vmatprep.subr.mxu0 0.0
    %5191 = vmatpush1.msra.mxu0 0.0
    %5192 = vmatprep.subr.mxu0 0.0
    %5193 = vmatpush1.msra.mxu0 0.0
    %5194 = vmatprep.subr.mxu0 0.0
    %5195 = vmatpush1.msra.mxu0 0.0
    %5196 = vmatprep.subr.mxu0 0.0
    %5197 = vmatpush1.msra.mxu0 0.0
    %5198 = vmatprep.subr.mxu0 0.0
    %5199 = vmatpush1.msra.mxu0 0.0
    %5200 = vmatprep.subr.mxu0 0.0
    %5201 = vmatpush1.msra.mxu0 0.0
    %5202 = vmatprep.subr.mxu0 0.0
    %5203 = vmatpush1.msra.mxu0 0.0
    %5204 = vmatprep.mubr.f32.mxu0 0.0
    %5205 = vmatmul.mubr.f32.gmra.mrb[0].mxu0 %v5122
    %v5206 = vpop.f32.mrb[0].mxu0
    %v5207 = vadd.f32 %v5139, %v5206
    %v5208 = vpop.f32.mrb[0].mxu0
    %5209 = vdwg.mxu0
    %v5210 = vmax.f32 %v5207, 0.0
    %v5211 = vld [vmem:[%s9] sm:$0xff]
    %v5212 = vld [vmem:[%s9 + $0x8] sm:$0xff]
    %v5213 = vld [vmem:[%s9 + $0x10] sm:$0xff]
    %v5214 = vld [vmem:[%s9 + $0x18] sm:$0xff]
    %v5215 = vld [vmem:[%s9 + $0x20] sm:$0xff]
    %v5216 = vld [vmem:[%s9 + $0x28] sm:$0xff]
    %v5217 = vld [vmem:[%s9 + $0x30] sm:$0xff]
    %v5218 = vld [vmem:[%s9 + $0x38] sm:$0xff]
    %v5219 = vld [vmem:[%s10] sm:$0x1]
    %vm5220 = vcmask 523264
    %v5222 = vsel %vm5220, %v5210, 0
    %5224 = vmatprep.subr.mxu0 0.0
    %5225 = vmatpush1.msra.mxu0 %v5211
    %5226 = vmatprep.subr.mxu0 0.0
    %5227 = vmatpush1.msra.mxu0 %v5212
    %5228 = vmatprep.subr.mxu0 0.0
    %5229 = vmatpush1.msra.mxu0 %v5213
    %5230 = vmatprep.subr.mxu0 0.0
    %5231 = vmatpush1.msra.mxu0 %v5214
    %5232 = vmatprep.subr.mxu0 0.0
    %5233 = vmatpush1.msra.mxu0 %v5215
    %5234 = vmatprep.subr.mxu0 0.0
    %5235 = vmatpush1.msra.mxu0 %v5216
    %5236 = vmatprep.subr.mxu0 0.0
    %5237 = vmatpush1.msra.mxu0 %v5217
    %5238 = vmatprep.subr.mxu0 0.0
    %5239 = vmatpush1.msra.mxu0 %v5218
    %5240 = vmatprep.subr.mxu0 0.0
    %5241 = vmatpush1.msra.mxu0 0.0
    %5242 = vmatprep.subr.mxu0 0.0
    %5243 = vmatpush1.msra.mxu0 0.0
    %5244 = vmatprep.subr.mxu0 0.0
    %5245 = vmatpush1.msra.mxu0 0.0
    %5246 = vmatprep.subr.mxu0 0.0
    %5247 = vmatpush1.msra.mxu0 0.0
    %5248 = vmatprep.subr.mxu0 0.0
    %5249 = vmatpush1.msra.mxu0 0.0
    %5250 = vmatprep.subr.mxu0 0.0
    %5251 = vmatpush1.msra.mxu0 0.0
    %5252 = vmatprep.subr.mxu0 0.0
    %5253 = vmatpush1.msra.mxu0 0.0
    %5254 = vmatprep.subr.mxu0 0.0
    %5255 = vmatpush1.msra.mxu0 0.0
    %5256 = vmatprep.subr.mxu0 0.0
    %5257 = vmatpush1.msra.mxu0 0.0
    %5258 = vmatprep.subr.mxu0 0.0
    %5259 = vmatpush1.msra.mxu0 0.0
    %5260 = vmatprep.subr.mxu0 0.0
    %5261 = vmatpush1.msra.mxu0 0.0
    %5262 = vmatprep.subr.mxu0 0.0
    %5263 = vmatpush1.msra.mxu0 0.0
    %5264 = vmatprep.subr.mxu0 0.0
    %5265 = vmatpush1.msra.mxu0 0.0
    %5266 = vmatprep.subr.mxu0 0.0
    %5267 = vmatpush1.msra.mxu0 0.0
    %5268 = vmatprep.subr.mxu0 0.0
    %5269 = vmatpush1.msra.mxu0 0.0
    %5270 = vmatprep.subr.mxu0 0.0
    %5271 = vmatpush1.msra.mxu0 0.0
    %5272 = vmatprep.subr.mxu0 0.0
    %5273 = vmatpush1.msra.mxu0 0.0
    %5274 = vmatprep.subr.mxu0 0.0
    %5275 = vmatpush1.msra.mxu0 0.0
    %5276 = vmatprep.subr.mxu0 0.0
    %5277 = vmatpush1.msra.mxu0 0.0
    %5278 = vmatprep.subr.mxu0 0.0
    %5279 = vmatpush1.msra.mxu0 0.0
    %5280 = vmatprep.subr.mxu0 0.0
    %5281 = vmatpush1.msra.mxu0 0.0
    %5282 = vmatprep.subr.mxu0 0.0
    %5283 = vmatpush1.msra.mxu0 0.0
    %5284 = vmatprep.subr.mxu0 0.0
    %5285 = vmatpush1.msra.mxu0 0.0
    %5286 = vmatprep.subr.mxu0 0.0
    %5287 = vmatpush1.msra.mxu0 0.0
    %5288 = vmatprep.mubr.f32.mxu0 0.0
    %5289 = vmatmul.mubr.f32.gmra.mrb[0].mxu0 %v5222
    %v5290 = vpop.f32.mrb[0].mxu0
    %v5291 = vadd.f32 %v5219, %v5290
    %v5292 = vpop.f32.mrb[0].mxu0
    %5293 = vdwg.mxu0
    %v5294 = vmax.f32 %v5291, 0.0
    %v5295 = vld [vmem:[%s11] sm:$0xff]
    %v5296 = vld [vmem:[%s11 + $0x8] sm:$0xff]
    %v5297 = vld [vmem:[%s11 + $0x10] sm:$0xff]
    %v5298 = vld [vmem:[%s11 + $0x18] sm:$0xff]
    %v5299 = vld [vmem:[#allocation2] sm:$0x1]
    %v5301 = vsel %vm475, %v5294, 0
    %5303 = vmatprep.subr.mxu0 0.0
    %5304 = vmatpush1.msra.mxu0 %v5295
    %5305 = vmatprep.subr.mxu0 0.0
    %5306 = vmatpush1.msra.mxu0 %v5296
    %5307 = vmatprep.subr.mxu0 0.0
    %5308 = vmatpush1.msra.mxu0 %v5297
    %5309 = vmatprep.subr.mxu0 0.0
    %5310 = vmatpush1.msra.mxu0 %v5298
    %5311 = vmatprep.subr.mxu0 0.0
    %5312 = vmatpush1.msra.mxu0 0.0
    %5313 = vmatprep.subr.mxu0 0.0
    %5314 = vmatpush1.msra.mxu0 0.0
    %5315 = vmatprep.subr.mxu0 0.0
    %5316 = vmatpush1.msra.mxu0 0.0
    %5317 = vmatprep.subr.mxu0 0.0
    %5318 = vmatpush1.msra.mxu0 0.0
    %5319 = vmatprep.subr.mxu0 0.0
    %5320 = vmatpush1.msra.mxu0 0.0
    %5321 = vmatprep.subr.mxu0 0.0
    %5322 = vmatpush1.msra.mxu0 0.0
    %5323 = vmatprep.subr.mxu0 0.0
    %5324 = vmatpush1.msra.mxu0 0.0
    %5325 = vmatprep.subr.mxu0 0.0
    %5326 = vmatpush1.msra.mxu0 0.0
    %5327 = vmatprep.subr.mxu0 0.0
    %5328 = vmatpush1.msra.mxu0 0.0
    %5329 = vmatprep.subr.mxu0 0.0
    %5330 = vmatpush1.msra.mxu0 0.0
    %5331 = vmatprep.subr.mxu0 0.0
    %5332 = vmatpush1.msra.mxu0 0.0
    %5333 = vmatprep.subr.mxu0 0.0
    %5334 = vmatpush1.msra.mxu0 0.0
    %5335 = vmatprep.subr.mxu0 0.0
    %5336 = vmatpush1.msra.mxu0 0.0
    %5337 = vmatprep.subr.mxu0 0.0
    %5338 = vmatpush1.msra.mxu0 0.0
    %5339 = vmatprep.subr.mxu0 0.0
    %5340 = vmatpush1.msra.mxu0 0.0
    %5341 = vmatprep.subr.mxu0 0.0
    %5342 = vmatpush1.msra.mxu0 0.0
    %5343 = vmatprep.subr.mxu0 0.0
    %5344 = vmatpush1.msra.mxu0 0.0
    %5345 = vmatprep.subr.mxu0 0.0
    %5346 = vmatpush1.msra.mxu0 0.0
    %5347 = vmatprep.subr.mxu0 0.0
    %5348 = vmatpush1.msra.mxu0 0.0
    %5349 = vmatprep.subr.mxu0 0.0
    %5350 = vmatpush1.msra.mxu0 0.0
    %5351 = vmatprep.subr.mxu0 0.0
    %5352 = vmatpush1.msra.mxu0 0.0
    %5353 = vmatprep.subr.mxu0 0.0
    %5354 = vmatpush1.msra.mxu0 0.0
    %5355 = vmatprep.subr.mxu0 0.0
    %5356 = vmatpush1.msra.mxu0 0.0
    %5357 = vmatprep.subr.mxu0 0.0
    %5358 = vmatpush1.msra.mxu0 0.0
    %5359 = vmatprep.subr.mxu0 0.0
    %5360 = vmatpush1.msra.mxu0 0.0
    %5361 = vmatprep.subr.mxu0 0.0
    %5362 = vmatpush1.msra.mxu0 0.0
    %5363 = vmatprep.subr.mxu0 0.0
    %5364 = vmatpush1.msra.mxu0 0.0
    %5365 = vmatprep.subr.mxu0 0.0
    %5366 = vmatpush1.msra.mxu0 0.0
    %5367 = vmatprep.mubr.f32.mxu0 0.0
    %5368 = vmatmul.mubr.f32.gmra.mrb[0].mxu0 %v5301
    %v5369 = vpop.f32.mrb[0].mxu0
    %v5370 = vadd.f32 %v5299, %v5369
    %v5371 = vpop.f32.mrb[0].mxu0
    %5372 = vdwg.mxu0
    %vm5373 = vcmask 0
    %5374 = vst.msk [vmem:[#allocation9] sm:$0x1] %vm5373, %v5370
    // Predicated region
    $region66: #{tpu_custom_call.1} parent=1 // pred_check
      _
    $region67: #{tpu_custom_call.1} parent=1 // pred_check_branch
      %5376 = sbr.rel (0) target = $region69
    $region68: #{tpu_custom_call.1} parent=1 // pred_region
      %s5378 = ssub.s32 16, 16
      %5379 = vsyncadd [#allocation5], %s5378
      %s5381 = sshll.u32 [#allocation9], 4
      %s5382 = int_to_ptr.vmem [resolvable:$true] %s5381
      %5384 = dma.vmem_to_hbm [thread:$0]  %s5382, 16, %s13, [#allocation5]
    $region69: #{tpu_custom_call.1} parent=1 // pred_fallthru
      _
    // Predicated region
    $region70: #{tpu_custom_call.1} parent=1 // pred_check
      _
    $region71: #{tpu_custom_call.1} parent=1 // pred_check_branch
      %5386 = sbr.rel (0) target = $region73
    $region72: #{tpu_custom_call.1} parent=1 // pred_region
      %5387 = dma.done [#allocation5], 16
    $region73: #{tpu_custom_call.1} parent=1 // pred_fallthru
      _
    %5388 = vsyncpa [#allocation4], 1
    %5389 = vsyncpa [#allocation7], 1
    %5390 = vsyncpa [#allocation5], 1

</llo_original>
